<compile_context>
chip_gen: v7x
topology: tpu7x:2x2x1
jax: 0.10.0
libtpu: 0.0.40
codegen_flags: <defaults>
</compile_context>

<pallas_src>
import functools

import jax
import jax.numpy as jnp
import numpy as np
from jax import lax
from jax.experimental import pallas as pl
from jax.experimental.pallas import tpu as pltpu


def _part_triplet_kernel(margin, hard_mining,
                         lab_col_ref, lab_row_ref, feat_ref,
                         loss_sum_ref, nz_ref, total_ref):
    x = feat_ref[...]                                   # (bp, m, d) f32
    bp, m, d = x.shape

    # same-label mask built in-kernel from int32 labels (VPU compare).
    hp_b = lab_col_ref[...] == lab_row_ref[...]         # (bp, m, m) bool
    hp = hp_b.astype(jnp.float32)                       # 1.0 where labels match
    hn = 1.0 - hp                                       # 1.0 where labels differ

    # Pairwise distances: sqrt(relu(|x_i|^2 + |x_j|^2 - 2 <x_i, x_j>)).
    # gram is one batched MXU matmul over all parts in the block.
    gram = lax.dot_general(x, x, (((2,), (2,)), ((0,), (0,))),
                           preferred_element_type=jnp.float32)        # (bp, m, m)
    sq = x * x                                                         # (bp, m, d)
    x2_col = jnp.sum(sq, axis=2, keepdims=True)                        # (bp, m, 1)
    # Lane-oriented copy of the squared norms via a tiny ones-matmul (MXU);
    # this avoids a minor-dims transpose/relayout of (m, 1) -> (1, m).
    ones_row = jnp.ones((bp, 1, d), jnp.float32)
    x2_row = lax.dot_general(ones_row, sq, (((2,), (2,)), ((0,), (0,))),
                             preferred_element_type=jnp.float32)       # (bp, 1, m)
    dist = jnp.sqrt(jnp.maximum(x2_col + x2_row - 2.0 * gram, 0.0))    # (bp, m, m)

    if hard_mining:
        big = jnp.float32(1e30)
        hard_hp = jnp.max(jnp.where(hp_b, dist, -big), axis=2, keepdims=True)  # (bp,m,1)
        hard_hn = jnp.min(jnp.where(hp_b, big, dist), axis=2, keepdims=True)   # (bp,m,1)
        diff = hard_hp - hard_hn
        if margin > 0:
            metric = jnp.maximum(margin + diff, 0.0)
        else:
            metric = jax.nn.softplus(diff)
        loss_sum_ref[...] = jnp.sum(metric, axis=1, keepdims=True)              # (bp,1,1)
        nz_ref[...] = jnp.sum((metric != 0.0).astype(jnp.float32),
                              axis=1, keepdims=True)
        total_ref[...] = jnp.full((bp, 1, 1), m, jnp.float32)
    else:
        # total valid (anchor, positive, negative) triplets -- loop invariant.
        num_pos = jnp.sum(hp, axis=2, keepdims=True)                   # (bp, m, 1)
        num_neg = jnp.sum(hn, axis=2, keepdims=True)                   # (bp, m, 1)
        total_ref[...] = jnp.sum(num_pos * num_neg, axis=1, keepdims=True)

        # Hoisted lane index, used to select column j without dynamic slicing.
        lane_id = lax.broadcasted_iota(jnp.int32, (bp, m, m), 2)

        def body(j, carry):
            ls, nz = carry
            ej = (lane_id == j).astype(jnp.float32)                    # one-hot column j
            pos = jnp.sum(dist * ej, axis=2, keepdims=True)            # (bp,m,1) d(i,j)
            hp_j = jnp.sum(hp * ej, axis=2, keepdims=True)             # (bp,m,1)
            valid = hp_j * hn                                          # (i,j) pos AND (i,k) neg
            if margin > 0:
                term = jnp.maximum(margin + pos - dist, 0.0) * valid
            else:
                term = jax.nn.softplus(pos - dist) * valid
            ls = ls + jnp.sum(jnp.sum(term, axis=2, keepdims=True),
                              axis=1, keepdims=True)
            nz = nz + jnp.sum(jnp.sum((term != 0.0).astype(jnp.float32),
                                      axis=2, keepdims=True),
                              axis=1, keepdims=True)
            return ls, nz

        zero = jnp.zeros((bp, 1, 1), jnp.float32)
        ls, nz = lax.fori_loop(0, m, body, (zero, zero), unroll=min(8, m))
        loss_sum_ref[...] = ls
        nz_ref[...] = nz


def _pick_part_block(n, max_bp=16):
    """Largest divisor of n that is <= max_bp (keeps all blocks full)."""
    bp = min(n, max_bp)
    while n % bp != 0:
        bp -= 1
    return bp


class PartTripletLoss:
    """JAX/Pallas port of the PyTorch PartTripletLoss forward pass."""

    def __init__(self, margin, hard_mining=False, nonzero=True,
                 max_parts_per_block=16):
        self.margin = float(margin)
        self.hard_mining = bool(hard_mining)
        self.nonzero = bool(nonzero)
        self.max_parts_per_block = int(max_parts_per_block)

    def __call__(self, feature, label):
        n, m, d = feature.shape
        feature = feature.astype(jnp.float32)
        lab = label.astype(jnp.int32)
        lab_col = lab[:, :, None]            # (n, m, 1) -- broadcast over negatives
        lab_row = lab[:, None, :]            # (n, 1, m) -- broadcast over anchors

        bp = _pick_part_block(n, self.max_parts_per_block)
        nb = n // bp

        kernel = functools.partial(_part_triplet_kernel, self.margin,
                                   self.hard_mining)
        part_out = jax.ShapeDtypeStruct((n, 1, 1), jnp.float32)
        loss_sum, nz, total = pl.pallas_call(
            kernel,
            out_shape=(part_out, part_out, part_out),
            grid=(nb,),
            in_specs=[
                pl.BlockSpec((bp, m, 1), lambda b: (b, 0, 0)),
                pl.BlockSpec((bp, 1, m), lambda b: (b, 0, 0)),
                pl.BlockSpec((bp, m, d), lambda b: (b, 0, 0)),
            ],
            out_specs=(
                pl.BlockSpec((bp, 1, 1), lambda b: (b, 0, 0)),
                pl.BlockSpec((bp, 1, 1), lambda b: (b, 0, 0)),
                pl.BlockSpec((bp, 1, 1), lambda b: (b, 0, 0)),
            ),
            compiler_params=pltpu.CompilerParams(
                dimension_semantics=("parallel",)),
        )(lab_col, lab_row, feature)

        loss_sum = loss_sum.reshape(n)
        nz = nz.reshape(n)
        total = total.reshape(n)

        if self.nonzero:
            mean = jnp.where(nz == 0, 0.0,
                             loss_sum / jnp.where(nz == 0, 1.0, nz))
        else:
            mean = loss_sum / total
        return mean.mean(), nz.mean()


def _reference(feature, label, margin, hard_mining, nonzero):
    """Pure-JAX reference mirroring the PyTorch forward semantics."""
    n, m, d = feature.shape
    x2 = jnp.sum(feature ** 2, axis=2)
    dist = (x2[:, :, None] + x2[:, None, :]
            - 2.0 * jnp.einsum("nid,njd->nij", feature, feature))
    dist = jnp.sqrt(jax.nn.relu(dist))
    hp = (label[:, :, None] == label[:, None, :])
    hn = ~hp
    if hard_mining:
        hard_hp = jnp.max(jnp.where(hp, dist, -jnp.inf), axis=2)
        hard_hn = jnp.min(jnp.where(hn, dist, jnp.inf), axis=2)
        diff = hard_hp - hard_hn
        metric = jax.nn.relu(margin + diff) if margin > 0 else jax.nn.softplus(diff)
        valid = jnp.ones_like(metric)
    else:
        diff = dist[:, :, :, None] - dist[:, :, None, :]
        valid = (hp[:, :, :, None] & hn[:, :, None, :]).astype(jnp.float32)
        base = jax.nn.relu(margin + diff) if margin > 0 else jax.nn.softplus(diff)
        metric = base * valid
    metric = metric.reshape(n, -1)
    valid = valid.reshape(n, -1)
    nz = jnp.sum(metric != 0, axis=1).astype(jnp.float32)
    if nonzero:
        mean = jnp.where(nz == 0, 0.0,
                         jnp.sum(metric, 1) / jnp.where(nz == 0, 1.0, nz))
    else:
        mean = jnp.sum(metric, 1) / jnp.sum(valid, 1)
    return mean.mean(), nz.mean()


if __name__ == "__main__":
    key = jax.random.PRNGKey(0)
    n, m, d = 8, 8, 32                     # num_parts, batch, feat_dim
    feature = jax.random.normal(key, (n, m, d), dtype=jnp.float32)
    label_row = jnp.array([0, 0, 0, 0, 1, 1, 1, 1], dtype=jnp.int32)
    label = jnp.tile(label_row[None, :], (n, 1))   # (n, m)

    margin = 0.2

    # default path: hard_mining=False, nonzero=True
    loss_fn = PartTripletLoss(margin)
    loss, nz_mean = loss_fn(feature, label)
    jax.block_until_ready((loss, nz_mean))
    ref_loss, ref_nz = _reference(feature, label, margin, False, True)
    assert np.allclose(np.asarray(loss), np.asarray(ref_loss), rtol=1e-3, atol=1e-3)
    assert np.allclose(np.asarray(nz_mean), np.asarray(ref_nz), rtol=1e-3, atol=1e-3)

    # hard-mining path
    loss_fn_hard = PartTripletLoss(margin, hard_mining=True)
    loss_h, nz_h = loss_fn_hard(feature, label)
    jax.block_until_ready((loss_h, nz_h))
    ref_loss_h, ref_nz_h = _reference(feature, label, margin, True, True)
    assert np.allclose(np.asarray(loss_h), np.asarray(ref_loss_h), rtol=1e-3, atol=1e-3)
    assert np.allclose(np.asarray(nz_h), np.asarray(ref_nz_h), rtol=1e-3, atol=1e-3)

    print("KERNEL_OK")
</pallas_src>

<mosaic_0001>
module attributes {stable_mosaic.version = 11 : i64} {
  func.func @_part_triplet_kernel(%arg0: i32, %arg1: memref<8x8x1xi32, #tpu.memory_space<vmem>>, %arg2: memref<8x1x8xi32, #tpu.memory_space<vmem>>, %arg3: memref<8x8x32xf32, #tpu.memory_space<vmem>>, %arg4: memref<8x1x1xf32, #tpu.memory_space<vmem>>, %arg5: memref<8x1x1xf32, #tpu.memory_space<vmem>>, %arg6: memref<8x1x1xf32, #tpu.memory_space<vmem>>) attributes {dimension_semantics = [#tpu.dimension_semantics<parallel>], iteration_bounds = array<i64: 1>, scalar_prefetch = 0 : i64, scratch_operands = 0 : i64, tpu.core_type = #tpu.core_type<tc>, window_params = [{transform_indices = @transform_0, window_bounds = array<i64: 8, 8, 1>}, {transform_indices = @transform_1, window_bounds = array<i64: 8, 1, 8>}, {transform_indices = @transform_2, window_bounds = array<i64: 8, 8, 32>}, {transform_indices = @transform_3, window_bounds = array<i64: 8, 1, 1>}, {transform_indices = @transform_4, window_bounds = array<i64: 8, 1, 1>}, {transform_indices = @transform_5, window_bounds = array<i64: 8, 1, 1>}]} {
    %c0 = arith.constant 0 : index
    %c0_0 = arith.constant 0 : index
    %c0_1 = arith.constant 0 : index
    %0 = vector.load %arg3[%c0, %c0_0, %c0_1] : memref<8x8x32xf32, #tpu.memory_space<vmem>>, vector<8x8x32xf32>
    %c0_2 = arith.constant 0 : index
    %c0_3 = arith.constant 0 : index
    %c0_4 = arith.constant 0 : index
    %1 = vector.load %arg1[%c0_2, %c0_3, %c0_4] : memref<8x8x1xi32, #tpu.memory_space<vmem>>, vector<8x8x1xi32>
    %c0_5 = arith.constant 0 : index
    %c0_6 = arith.constant 0 : index
    %c0_7 = arith.constant 0 : index
    %2 = vector.load %arg2[%c0_5, %c0_6, %c0_7] : memref<8x1x8xi32, #tpu.memory_space<vmem>>, vector<8x1x8xi32>
    %3 = vector.broadcast %1 : vector<8x8x1xi32> to vector<8x8x8xi32>
    %4 = vector.broadcast %2 : vector<8x1x8xi32> to vector<8x8x8xi32>
    %5 = arith.cmpi eq, %3, %4 : vector<8x8x8xi32>
    %6 = arith.extui %5 : vector<8x8x8xi1> to vector<8x8x8xi32>
    %7 = arith.sitofp %6 : vector<8x8x8xi32> to vector<8x8x8xf32>
    %cst = arith.constant 1.000000e+00 : f32
    %8 = vector.broadcast %cst : f32 to vector<8x8x8xf32>
    %9 = arith.subf %8, %7 : vector<8x8x8xf32>
    %cst_8 = arith.constant dense<0.000000e+00> : vector<8x8x8xf32>
    %10 = tpu.matmul %0, %0, %cst_8 {dimension_numbers = #tpu.dot_dimension_numbers<[2], [2], [1], [1], [0, 0, 0, 1, 1, 1], [0], [0]>} : vector<8x8x32xf32>, vector<8x8x32xf32>, vector<8x8x8xf32> -> vector<8x8x8xf32>
    %11 = arith.mulf %0, %0 : vector<8x8x32xf32>
    %cst_9 = arith.constant dense<0.000000e+00> : vector<8x8xf32>
    %12 = vector.multi_reduction <add>, %11, %cst_9 [2] : vector<8x8x32xf32> to vector<8x8xf32>
    %13 = vector.shape_cast %12 : vector<8x8xf32> to vector<8x8x1xf32>
    %cst_10 = arith.constant 1.000000e+00 : f32
    %14 = vector.broadcast %cst_10 : f32 to vector<8x1x32xf32>
    %cst_11 = arith.constant dense<0.000000e+00> : vector<8x1x8xf32>
    %15 = tpu.matmul %14, %11, %cst_11 {dimension_numbers = #tpu.dot_dimension_numbers<[2], [2], [1], [1], [0, 0, 0, 1, 1, 1], [0], [0]>} : vector<8x1x32xf32>, vector<8x8x32xf32>, vector<8x1x8xf32> -> vector<8x1x8xf32>
    %16 = vector.broadcast %13 : vector<8x8x1xf32> to vector<8x8x8xf32>
    %17 = vector.broadcast %15 : vector<8x1x8xf32> to vector<8x8x8xf32>
    %18 = arith.addf %16, %17 : vector<8x8x8xf32>
    %cst_12 = arith.constant 2.000000e+00 : f32
    %19 = vector.broadcast %cst_12 : f32 to vector<8x8x8xf32>
    %20 = arith.mulf %19, %10 : vector<8x8x8xf32>
    %21 = arith.subf %18, %20 : vector<8x8x8xf32>
    %cst_13 = arith.constant 0.000000e+00 : f32
    %22 = vector.broadcast %cst_13 : f32 to vector<8x8x8xf32>
    %23 = arith.maximumf %21, %22 : vector<8x8x8xf32>
    %24 = math.sqrt %23 : vector<8x8x8xf32>
    %cst_14 = arith.constant dense<0.000000e+00> : vector<8x8xf32>
    %25 = vector.multi_reduction <add>, %7, %cst_14 [2] : vector<8x8x8xf32> to vector<8x8xf32>
    %26 = vector.shape_cast %25 : vector<8x8xf32> to vector<8x8x1xf32>
    %cst_15 = arith.constant dense<0.000000e+00> : vector<8x8xf32>
    %27 = vector.multi_reduction <add>, %9, %cst_15 [2] : vector<8x8x8xf32> to vector<8x8xf32>
    %28 = vector.shape_cast %27 : vector<8x8xf32> to vector<8x8x1xf32>
    %29 = arith.mulf %26, %28 : vector<8x8x1xf32>
    %cst_16 = arith.constant dense<0.000000e+00> : vector<8x1xf32>
    %30 = vector.multi_reduction <add>, %29, %cst_16 [1] : vector<8x8x1xf32> to vector<8x1xf32>
    %31 = vector.shape_cast %30 : vector<8x1xf32> to vector<8x1x1xf32>
    %c0_17 = arith.constant 0 : index
    %c0_18 = arith.constant 0 : index
    %c0_19 = arith.constant 0 : index
    %32 = vector.load %arg6[%c0_17, %c0_18, %c0_19] : memref<8x1x1xf32, #tpu.memory_space<vmem>>, vector<8x1x1xf32>
    tpu.vector_store %arg6[%c0_17, %c0_18, %c0_19], %31 {strides = array<i32>} : memref<8x1x1xf32, #tpu.memory_space<vmem>>, vector<8x1x1xf32>,
    %33 = tpu.iota {dimensions = array<i32: 2>} : vector<8x8x8xi32>
    %cst_20 = arith.constant 0.000000e+00 : f32
    %34 = vector.broadcast %cst_20 : f32 to vector<8x1x1xf32>
    %c0_i32 = arith.constant 0 : i32
    %35 = vector.broadcast %c0_i32 : i32 to vector<8x8x8xi32>
    %36 = arith.cmpi eq, %33, %35 : vector<8x8x8xi32>
    %37 = arith.extui %36 : vector<8x8x8xi1> to vector<8x8x8xi32>
    %38 = arith.sitofp %37 : vector<8x8x8xi32> to vector<8x8x8xf32>
    %39 = arith.mulf %24, %38 : vector<8x8x8xf32>
    %cst_21 = arith.constant dense<0.000000e+00> : vector<8x8xf32>
    %40 = vector.multi_reduction <add>, %39, %cst_21 [2] : vector<8x8x8xf32> to vector<8x8xf32>
    %41 = vector.shape_cast %40 : vector<8x8xf32> to vector<8x8x1xf32>
    %42 = arith.mulf %7, %38 : vector<8x8x8xf32>
    %cst_22 = arith.constant dense<0.000000e+00> : vector<8x8xf32>
    %43 = vector.multi_reduction <add>, %42, %cst_22 [2] : vector<8x8x8xf32> to vector<8x8xf32>
    %44 = vector.shape_cast %43 : vector<8x8xf32> to vector<8x8x1xf32>
    %45 = vector.broadcast %44 : vector<8x8x1xf32> to vector<8x8x8xf32>
    %46 = arith.mulf %45, %9 : vector<8x8x8xf32>
    %cst_23 = arith.constant 2.000000e-01 : f32
    %47 = vector.broadcast %cst_23 : f32 to vector<8x8x1xf32>
    %48 = arith.addf %47, %41 : vector<8x8x1xf32>
    %49 = vector.broadcast %48 : vector<8x8x1xf32> to vector<8x8x8xf32>
    %50 = arith.subf %49, %24 : vector<8x8x8xf32>
    %cst_24 = arith.constant 0.000000e+00 : f32
    %51 = vector.broadcast %cst_24 : f32 to vector<8x8x8xf32>
    %52 = arith.maximumf %50, %51 : vector<8x8x8xf32>
    %53 = arith.mulf %52, %46 : vector<8x8x8xf32>
    %cst_25 = arith.constant dense<0.000000e+00> : vector<8x8xf32>
    %54 = vector.multi_reduction <add>, %53, %cst_25 [2] : vector<8x8x8xf32> to vector<8x8xf32>
    %55 = vector.shape_cast %54 : vector<8x8xf32> to vector<8x8x1xf32>
    %cst_26 = arith.constant dense<0.000000e+00> : vector<8x1xf32>
    %56 = vector.multi_reduction <add>, %55, %cst_26 [1] : vector<8x8x1xf32> to vector<8x1xf32>
    %57 = vector.shape_cast %56 : vector<8x1xf32> to vector<8x1x1xf32>
    %58 = arith.addf %34, %57 : vector<8x1x1xf32>
    %cst_27 = arith.constant 0.000000e+00 : f32
    %59 = vector.broadcast %cst_27 : f32 to vector<8x8x8xf32>
    %60 = arith.cmpf one, %53, %59 : vector<8x8x8xf32>
    %61 = arith.extui %60 : vector<8x8x8xi1> to vector<8x8x8xi32>
    %62 = arith.sitofp %61 : vector<8x8x8xi32> to vector<8x8x8xf32>
    %cst_28 = arith.constant dense<0.000000e+00> : vector<8x8xf32>
    %63 = vector.multi_reduction <add>, %62, %cst_28 [2] : vector<8x8x8xf32> to vector<8x8xf32>
    %64 = vector.shape_cast %63 : vector<8x8xf32> to vector<8x8x1xf32>
    %cst_29 = arith.constant dense<0.000000e+00> : vector<8x1xf32>
    %65 = vector.multi_reduction <add>, %64, %cst_29 [1] : vector<8x8x1xf32> to vector<8x1xf32>
    %66 = vector.shape_cast %65 : vector<8x1xf32> to vector<8x1x1xf32>
    %67 = arith.addf %34, %66 : vector<8x1x1xf32>
    %c1_i32 = arith.constant 1 : i32
    %68 = vector.broadcast %c1_i32 : i32 to vector<8x8x8xi32>
    %69 = arith.cmpi eq, %33, %68 : vector<8x8x8xi32>
    %70 = arith.extui %69 : vector<8x8x8xi1> to vector<8x8x8xi32>
    %71 = arith.sitofp %70 : vector<8x8x8xi32> to vector<8x8x8xf32>
    %72 = arith.mulf %24, %71 : vector<8x8x8xf32>
    %cst_30 = arith.constant dense<0.000000e+00> : vector<8x8xf32>
    %73 = vector.multi_reduction <add>, %72, %cst_30 [2] : vector<8x8x8xf32> to vector<8x8xf32>
    %74 = vector.shape_cast %73 : vector<8x8xf32> to vector<8x8x1xf32>
    %75 = arith.mulf %7, %71 : vector<8x8x8xf32>
    %cst_31 = arith.constant dense<0.000000e+00> : vector<8x8xf32>
    %76 = vector.multi_reduction <add>, %75, %cst_31 [2] : vector<8x8x8xf32> to vector<8x8xf32>
    %77 = vector.shape_cast %76 : vector<8x8xf32> to vector<8x8x1xf32>
    %78 = vector.broadcast %77 : vector<8x8x1xf32> to vector<8x8x8xf32>
    %79 = arith.mulf %78, %9 : vector<8x8x8xf32>
    %cst_32 = arith.constant 2.000000e-01 : f32
    %80 = vector.broadcast %cst_32 : f32 to vector<8x8x1xf32>
    %81 = arith.addf %80, %74 : vector<8x8x1xf32>
    %82 = vector.broadcast %81 : vector<8x8x1xf32> to vector<8x8x8xf32>
    %83 = arith.subf %82, %24 : vector<8x8x8xf32>
    %cst_33 = arith.constant 0.000000e+00 : f32
    %84 = vector.broadcast %cst_33 : f32 to vector<8x8x8xf32>
    %85 = arith.maximumf %83, %84 : vector<8x8x8xf32>
    %86 = arith.mulf %85, %79 : vector<8x8x8xf32>
    %cst_34 = arith.constant dense<0.000000e+00> : vector<8x8xf32>
    %87 = vector.multi_reduction <add>, %86, %cst_34 [2] : vector<8x8x8xf32> to vector<8x8xf32>
    %88 = vector.shape_cast %87 : vector<8x8xf32> to vector<8x8x1xf32>
    %cst_35 = arith.constant dense<0.000000e+00> : vector<8x1xf32>
    %89 = vector.multi_reduction <add>, %88, %cst_35 [1] : vector<8x8x1xf32> to vector<8x1xf32>
    %90 = vector.shape_cast %89 : vector<8x1xf32> to vector<8x1x1xf32>
    %91 = arith.addf %58, %90 : vector<8x1x1xf32>
    %cst_36 = arith.constant 0.000000e+00 : f32
    %92 = vector.broadcast %cst_36 : f32 to vector<8x8x8xf32>
    %93 = arith.cmpf one, %86, %92 : vector<8x8x8xf32>
    %94 = arith.extui %93 : vector<8x8x8xi1> to vector<8x8x8xi32>
    %95 = arith.sitofp %94 : vector<8x8x8xi32> to vector<8x8x8xf32>
    %cst_37 = arith.constant dense<0.000000e+00> : vector<8x8xf32>
    %96 = vector.multi_reduction <add>, %95, %cst_37 [2] : vector<8x8x8xf32> to vector<8x8xf32>
    %97 = vector.shape_cast %96 : vector<8x8xf32> to vector<8x8x1xf32>
    %cst_38 = arith.constant dense<0.000000e+00> : vector<8x1xf32>
    %98 = vector.multi_reduction <add>, %97, %cst_38 [1] : vector<8x8x1xf32> to vector<8x1xf32>
    %99 = vector.shape_cast %98 : vector<8x1xf32> to vector<8x1x1xf32>
    %100 = arith.addf %67, %99 : vector<8x1x1xf32>
    %c2_i32 = arith.constant 2 : i32
    %101 = vector.broadcast %c2_i32 : i32 to vector<8x8x8xi32>
    %102 = arith.cmpi eq, %33, %101 : vector<8x8x8xi32>
    %103 = arith.extui %102 : vector<8x8x8xi1> to vector<8x8x8xi32>
    %104 = arith.sitofp %103 : vector<8x8x8xi32> to vector<8x8x8xf32>
    %105 = arith.mulf %24, %104 : vector<8x8x8xf32>
    %cst_39 = arith.constant dense<0.000000e+00> : vector<8x8xf32>
    %106 = vector.multi_reduction <add>, %105, %cst_39 [2] : vector<8x8x8xf32> to vector<8x8xf32>
    %107 = vector.shape_cast %106 : vector<8x8xf32> to vector<8x8x1xf32>
    %108 = arith.mulf %7, %104 : vector<8x8x8xf32>
    %cst_40 = arith.constant dense<0.000000e+00> : vector<8x8xf32>
    %109 = vector.multi_reduction <add>, %108, %cst_40 [2] : vector<8x8x8xf32> to vector<8x8xf32>
    %110 = vector.shape_cast %109 : vector<8x8xf32> to vector<8x8x1xf32>
    %111 = vector.broadcast %110 : vector<8x8x1xf32> to vector<8x8x8xf32>
    %112 = arith.mulf %111, %9 : vector<8x8x8xf32>
    %cst_41 = arith.constant 2.000000e-01 : f32
    %113 = vector.broadcast %cst_41 : f32 to vector<8x8x1xf32>
    %114 = arith.addf %113, %107 : vector<8x8x1xf32>
    %115 = vector.broadcast %114 : vector<8x8x1xf32> to vector<8x8x8xf32>
    %116 = arith.subf %115, %24 : vector<8x8x8xf32>
    %cst_42 = arith.constant 0.000000e+00 : f32
    %117 = vector.broadcast %cst_42 : f32 to vector<8x8x8xf32>
    %118 = arith.maximumf %116, %117 : vector<8x8x8xf32>
    %119 = arith.mulf %118, %112 : vector<8x8x8xf32>
    %cst_43 = arith.constant dense<0.000000e+00> : vector<8x8xf32>
    %120 = vector.multi_reduction <add>, %119, %cst_43 [2] : vector<8x8x8xf32> to vector<8x8xf32>
    %121 = vector.shape_cast %120 : vector<8x8xf32> to vector<8x8x1xf32>
    %cst_44 = arith.constant dense<0.000000e+00> : vector<8x1xf32>
    %122 = vector.multi_reduction <add>, %121, %cst_44 [1] : vector<8x8x1xf32> to vector<8x1xf32>
    %123 = vector.shape_cast %122 : vector<8x1xf32> to vector<8x1x1xf32>
    %124 = arith.addf %91, %123 : vector<8x1x1xf32>
    %cst_45 = arith.constant 0.000000e+00 : f32
    %125 = vector.broadcast %cst_45 : f32 to vector<8x8x8xf32>
    %126 = arith.cmpf one, %119, %125 : vector<8x8x8xf32>
    %127 = arith.extui %126 : vector<8x8x8xi1> to vector<8x8x8xi32>
    %128 = arith.sitofp %127 : vector<8x8x8xi32> to vector<8x8x8xf32>
    %cst_46 = arith.constant dense<0.000000e+00> : vector<8x8xf32>
    %129 = vector.multi_reduction <add>, %128, %cst_46 [2] : vector<8x8x8xf32> to vector<8x8xf32>
    %130 = vector.shape_cast %129 : vector<8x8xf32> to vector<8x8x1xf32>
    %cst_47 = arith.constant dense<0.000000e+00> : vector<8x1xf32>
    %131 = vector.multi_reduction <add>, %130, %cst_47 [1] : vector<8x8x1xf32> to vector<8x1xf32>
    %132 = vector.shape_cast %131 : vector<8x1xf32> to vector<8x1x1xf32>
    %133 = arith.addf %100, %132 : vector<8x1x1xf32>
    %c3_i32 = arith.constant 3 : i32
    %134 = vector.broadcast %c3_i32 : i32 to vector<8x8x8xi32>
    %135 = arith.cmpi eq, %33, %134 : vector<8x8x8xi32>
    %136 = arith.extui %135 : vector<8x8x8xi1> to vector<8x8x8xi32>
    %137 = arith.sitofp %136 : vector<8x8x8xi32> to vector<8x8x8xf32>
    %138 = arith.mulf %24, %137 : vector<8x8x8xf32>
    %cst_48 = arith.constant dense<0.000000e+00> : vector<8x8xf32>
    %139 = vector.multi_reduction <add>, %138, %cst_48 [2] : vector<8x8x8xf32> to vector<8x8xf32>
    %140 = vector.shape_cast %139 : vector<8x8xf32> to vector<8x8x1xf32>
    %141 = arith.mulf %7, %137 : vector<8x8x8xf32>
    %cst_49 = arith.constant dense<0.000000e+00> : vector<8x8xf32>
    %142 = vector.multi_reduction <add>, %141, %cst_49 [2] : vector<8x8x8xf32> to vector<8x8xf32>
    %143 = vector.shape_cast %142 : vector<8x8xf32> to vector<8x8x1xf32>
    %144 = vector.broadcast %143 : vector<8x8x1xf32> to vector<8x8x8xf32>
    %145 = arith.mulf %144, %9 : vector<8x8x8xf32>
    %cst_50 = arith.constant 2.000000e-01 : f32
    %146 = vector.broadcast %cst_50 : f32 to vector<8x8x1xf32>
    %147 = arith.addf %146, %140 : vector<8x8x1xf32>
    %148 = vector.broadcast %147 : vector<8x8x1xf32> to vector<8x8x8xf32>
    %149 = arith.subf %148, %24 : vector<8x8x8xf32>
    %cst_51 = arith.constant 0.000000e+00 : f32
    %150 = vector.broadcast %cst_51 : f32 to vector<8x8x8xf32>
    %151 = arith.maximumf %149, %150 : vector<8x8x8xf32>
    %152 = arith.mulf %151, %145 : vector<8x8x8xf32>
    %cst_52 = arith.constant dense<0.000000e+00> : vector<8x8xf32>
    %153 = vector.multi_reduction <add>, %152, %cst_52 [2] : vector<8x8x8xf32> to vector<8x8xf32>
    %154 = vector.shape_cast %153 : vector<8x8xf32> to vector<8x8x1xf32>
    %cst_53 = arith.constant dense<0.000000e+00> : vector<8x1xf32>
    %155 = vector.multi_reduction <add>, %154, %cst_53 [1] : vector<8x8x1xf32> to vector<8x1xf32>
    %156 = vector.shape_cast %155 : vector<8x1xf32> to vector<8x1x1xf32>
    %157 = arith.addf %124, %156 : vector<8x1x1xf32>
    %cst_54 = arith.constant 0.000000e+00 : f32
    %158 = vector.broadcast %cst_54 : f32 to vector<8x8x8xf32>
    %159 = arith.cmpf one, %152, %158 : vector<8x8x8xf32>
    %160 = arith.extui %159 : vector<8x8x8xi1> to vector<8x8x8xi32>
    %161 = arith.sitofp %160 : vector<8x8x8xi32> to vector<8x8x8xf32>
    %cst_55 = arith.constant dense<0.000000e+00> : vector<8x8xf32>
    %162 = vector.multi_reduction <add>, %161, %cst_55 [2] : vector<8x8x8xf32> to vector<8x8xf32>
    %163 = vector.shape_cast %162 : vector<8x8xf32> to vector<8x8x1xf32>
    %cst_56 = arith.constant dense<0.000000e+00> : vector<8x1xf32>
    %164 = vector.multi_reduction <add>, %163, %cst_56 [1] : vector<8x8x1xf32> to vector<8x1xf32>
    %165 = vector.shape_cast %164 : vector<8x1xf32> to vector<8x1x1xf32>
    %166 = arith.addf %133, %165 : vector<8x1x1xf32>
    %c4_i32 = arith.constant 4 : i32
    %167 = vector.broadcast %c4_i32 : i32 to vector<8x8x8xi32>
    %168 = arith.cmpi eq, %33, %167 : vector<8x8x8xi32>
    %169 = arith.extui %168 : vector<8x8x8xi1> to vector<8x8x8xi32>
    %170 = arith.sitofp %169 : vector<8x8x8xi32> to vector<8x8x8xf32>
    %171 = arith.mulf %24, %170 : vector<8x8x8xf32>
    %cst_57 = arith.constant dense<0.000000e+00> : vector<8x8xf32>
    %172 = vector.multi_reduction <add>, %171, %cst_57 [2] : vector<8x8x8xf32> to vector<8x8xf32>
    %173 = vector.shape_cast %172 : vector<8x8xf32> to vector<8x8x1xf32>
    %174 = arith.mulf %7, %170 : vector<8x8x8xf32>
    %cst_58 = arith.constant dense<0.000000e+00> : vector<8x8xf32>
    %175 = vector.multi_reduction <add>, %174, %cst_58 [2] : vector<8x8x8xf32> to vector<8x8xf32>
    %176 = vector.shape_cast %175 : vector<8x8xf32> to vector<8x8x1xf32>
    %177 = vector.broadcast %176 : vector<8x8x1xf32> to vector<8x8x8xf32>
    %178 = arith.mulf %177, %9 : vector<8x8x8xf32>
    %cst_59 = arith.constant 2.000000e-01 : f32
    %179 = vector.broadcast %cst_59 : f32 to vector<8x8x1xf32>
    %180 = arith.addf %179, %173 : vector<8x8x1xf32>
    %181 = vector.broadcast %180 : vector<8x8x1xf32> to vector<8x8x8xf32>
    %182 = arith.subf %181, %24 : vector<8x8x8xf32>
    %cst_60 = arith.constant 0.000000e+00 : f32
    %183 = vector.broadcast %cst_60 : f32 to vector<8x8x8xf32>
    %184 = arith.maximumf %182, %183 : vector<8x8x8xf32>
    %185 = arith.mulf %184, %178 : vector<8x8x8xf32>
    %cst_61 = arith.constant dense<0.000000e+00> : vector<8x8xf32>
    %186 = vector.multi_reduction <add>, %185, %cst_61 [2] : vector<8x8x8xf32> to vector<8x8xf32>
    %187 = vector.shape_cast %186 : vector<8x8xf32> to vector<8x8x1xf32>
    %cst_62 = arith.constant dense<0.000000e+00> : vector<8x1xf32>
    %188 = vector.multi_reduction <add>, %187, %cst_62 [1] : vector<8x8x1xf32> to vector<8x1xf32>
    %189 = vector.shape_cast %188 : vector<8x1xf32> to vector<8x1x1xf32>
    %190 = arith.addf %157, %189 : vector<8x1x1xf32>
    %cst_63 = arith.constant 0.000000e+00 : f32
    %191 = vector.broadcast %cst_63 : f32 to vector<8x8x8xf32>
    %192 = arith.cmpf one, %185, %191 : vector<8x8x8xf32>
    %193 = arith.extui %192 : vector<8x8x8xi1> to vector<8x8x8xi32>
    %194 = arith.sitofp %193 : vector<8x8x8xi32> to vector<8x8x8xf32>
    %cst_64 = arith.constant dense<0.000000e+00> : vector<8x8xf32>
    %195 = vector.multi_reduction <add>, %194, %cst_64 [2] : vector<8x8x8xf32> to vector<8x8xf32>
    %196 = vector.shape_cast %195 : vector<8x8xf32> to vector<8x8x1xf32>
    %cst_65 = arith.constant dense<0.000000e+00> : vector<8x1xf32>
    %197 = vector.multi_reduction <add>, %196, %cst_65 [1] : vector<8x8x1xf32> to vector<8x1xf32>
    %198 = vector.shape_cast %197 : vector<8x1xf32> to vector<8x1x1xf32>
    %199 = arith.addf %166, %198 : vector<8x1x1xf32>
    %c5_i32 = arith.constant 5 : i32
    %200 = vector.broadcast %c5_i32 : i32 to vector<8x8x8xi32>
    %201 = arith.cmpi eq, %33, %200 : vector<8x8x8xi32>
    %202 = arith.extui %201 : vector<8x8x8xi1> to vector<8x8x8xi32>
    %203 = arith.sitofp %202 : vector<8x8x8xi32> to vector<8x8x8xf32>
    %204 = arith.mulf %24, %203 : vector<8x8x8xf32>
    %cst_66 = arith.constant dense<0.000000e+00> : vector<8x8xf32>
    %205 = vector.multi_reduction <add>, %204, %cst_66 [2] : vector<8x8x8xf32> to vector<8x8xf32>
    %206 = vector.shape_cast %205 : vector<8x8xf32> to vector<8x8x1xf32>
    %207 = arith.mulf %7, %203 : vector<8x8x8xf32>
    %cst_67 = arith.constant dense<0.000000e+00> : vector<8x8xf32>
    %208 = vector.multi_reduction <add>, %207, %cst_67 [2] : vector<8x8x8xf32> to vector<8x8xf32>
    %209 = vector.shape_cast %208 : vector<8x8xf32> to vector<8x8x1xf32>
    %210 = vector.broadcast %209 : vector<8x8x1xf32> to vector<8x8x8xf32>
    %211 = arith.mulf %210, %9 : vector<8x8x8xf32>
    %cst_68 = arith.constant 2.000000e-01 : f32
    %212 = vector.broadcast %cst_68 : f32 to vector<8x8x1xf32>
    %213 = arith.addf %212, %206 : vector<8x8x1xf32>
    %214 = vector.broadcast %213 : vector<8x8x1xf32> to vector<8x8x8xf32>
    %215 = arith.subf %214, %24 : vector<8x8x8xf32>
    %cst_69 = arith.constant 0.000000e+00 : f32
    %216 = vector.broadcast %cst_69 : f32 to vector<8x8x8xf32>
    %217 = arith.maximumf %215, %216 : vector<8x8x8xf32>
    %218 = arith.mulf %217, %211 : vector<8x8x8xf32>
    %cst_70 = arith.constant dense<0.000000e+00> : vector<8x8xf32>
    %219 = vector.multi_reduction <add>, %218, %cst_70 [2] : vector<8x8x8xf32> to vector<8x8xf32>
    %220 = vector.shape_cast %219 : vector<8x8xf32> to vector<8x8x1xf32>
    %cst_71 = arith.constant dense<0.000000e+00> : vector<8x1xf32>
    %221 = vector.multi_reduction <add>, %220, %cst_71 [1] : vector<8x8x1xf32> to vector<8x1xf32>
    %222 = vector.shape_cast %221 : vector<8x1xf32> to vector<8x1x1xf32>
    %223 = arith.addf %190, %222 : vector<8x1x1xf32>
    %cst_72 = arith.constant 0.000000e+00 : f32
    %224 = vector.broadcast %cst_72 : f32 to vector<8x8x8xf32>
    %225 = arith.cmpf one, %218, %224 : vector<8x8x8xf32>
    %226 = arith.extui %225 : vector<8x8x8xi1> to vector<8x8x8xi32>
    %227 = arith.sitofp %226 : vector<8x8x8xi32> to vector<8x8x8xf32>
    %cst_73 = arith.constant dense<0.000000e+00> : vector<8x8xf32>
    %228 = vector.multi_reduction <add>, %227, %cst_73 [2] : vector<8x8x8xf32> to vector<8x8xf32>
    %229 = vector.shape_cast %228 : vector<8x8xf32> to vector<8x8x1xf32>
    %cst_74 = arith.constant dense<0.000000e+00> : vector<8x1xf32>
    %230 = vector.multi_reduction <add>, %229, %cst_74 [1] : vector<8x8x1xf32> to vector<8x1xf32>
    %231 = vector.shape_cast %230 : vector<8x1xf32> to vector<8x1x1xf32>
    %232 = arith.addf %199, %231 : vector<8x1x1xf32>
    %c6_i32 = arith.constant 6 : i32
    %233 = vector.broadcast %c6_i32 : i32 to vector<8x8x8xi32>
    %234 = arith.cmpi eq, %33, %233 : vector<8x8x8xi32>
    %235 = arith.extui %234 : vector<8x8x8xi1> to vector<8x8x8xi32>
    %236 = arith.sitofp %235 : vector<8x8x8xi32> to vector<8x8x8xf32>
    %237 = arith.mulf %24, %236 : vector<8x8x8xf32>
    %cst_75 = arith.constant dense<0.000000e+00> : vector<8x8xf32>
    %238 = vector.multi_reduction <add>, %237, %cst_75 [2] : vector<8x8x8xf32> to vector<8x8xf32>
    %239 = vector.shape_cast %238 : vector<8x8xf32> to vector<8x8x1xf32>
    %240 = arith.mulf %7, %236 : vector<8x8x8xf32>
    %cst_76 = arith.constant dense<0.000000e+00> : vector<8x8xf32>
    %241 = vector.multi_reduction <add>, %240, %cst_76 [2] : vector<8x8x8xf32> to vector<8x8xf32>
    %242 = vector.shape_cast %241 : vector<8x8xf32> to vector<8x8x1xf32>
    %243 = vector.broadcast %242 : vector<8x8x1xf32> to vector<8x8x8xf32>
    %244 = arith.mulf %243, %9 : vector<8x8x8xf32>
    %cst_77 = arith.constant 2.000000e-01 : f32
    %245 = vector.broadcast %cst_77 : f32 to vector<8x8x1xf32>
    %246 = arith.addf %245, %239 : vector<8x8x1xf32>
    %247 = vector.broadcast %246 : vector<8x8x1xf32> to vector<8x8x8xf32>
    %248 = arith.subf %247, %24 : vector<8x8x8xf32>
    %cst_78 = arith.constant 0.000000e+00 : f32
    %249 = vector.broadcast %cst_78 : f32 to vector<8x8x8xf32>
    %250 = arith.maximumf %248, %249 : vector<8x8x8xf32>
    %251 = arith.mulf %250, %244 : vector<8x8x8xf32>
    %cst_79 = arith.constant dense<0.000000e+00> : vector<8x8xf32>
    %252 = vector.multi_reduction <add>, %251, %cst_79 [2] : vector<8x8x8xf32> to vector<8x8xf32>
    %253 = vector.shape_cast %252 : vector<8x8xf32> to vector<8x8x1xf32>
    %cst_80 = arith.constant dense<0.000000e+00> : vector<8x1xf32>
    %254 = vector.multi_reduction <add>, %253, %cst_80 [1] : vector<8x8x1xf32> to vector<8x1xf32>
    %255 = vector.shape_cast %254 : vector<8x1xf32> to vector<8x1x1xf32>
    %256 = arith.addf %223, %255 : vector<8x1x1xf32>
    %cst_81 = arith.constant 0.000000e+00 : f32
    %257 = vector.broadcast %cst_81 : f32 to vector<8x8x8xf32>
    %258 = arith.cmpf one, %251, %257 : vector<8x8x8xf32>
    %259 = arith.extui %258 : vector<8x8x8xi1> to vector<8x8x8xi32>
    %260 = arith.sitofp %259 : vector<8x8x8xi32> to vector<8x8x8xf32>
    %cst_82 = arith.constant dense<0.000000e+00> : vector<8x8xf32>
    %261 = vector.multi_reduction <add>, %260, %cst_82 [2] : vector<8x8x8xf32> to vector<8x8xf32>
    %262 = vector.shape_cast %261 : vector<8x8xf32> to vector<8x8x1xf32>
    %cst_83 = arith.constant dense<0.000000e+00> : vector<8x1xf32>
    %263 = vector.multi_reduction <add>, %262, %cst_83 [1] : vector<8x8x1xf32> to vector<8x1xf32>
    %264 = vector.shape_cast %263 : vector<8x1xf32> to vector<8x1x1xf32>
    %265 = arith.addf %232, %264 : vector<8x1x1xf32>
    %c7_i32 = arith.constant 7 : i32
    %266 = vector.broadcast %c7_i32 : i32 to vector<8x8x8xi32>
    %267 = arith.cmpi eq, %33, %266 : vector<8x8x8xi32>
    %268 = arith.extui %267 : vector<8x8x8xi1> to vector<8x8x8xi32>
    %269 = arith.sitofp %268 : vector<8x8x8xi32> to vector<8x8x8xf32>
    %270 = arith.mulf %24, %269 : vector<8x8x8xf32>
    %cst_84 = arith.constant dense<0.000000e+00> : vector<8x8xf32>
    %271 = vector.multi_reduction <add>, %270, %cst_84 [2] : vector<8x8x8xf32> to vector<8x8xf32>
    %272 = vector.shape_cast %271 : vector<8x8xf32> to vector<8x8x1xf32>
    %273 = arith.mulf %7, %269 : vector<8x8x8xf32>
    %cst_85 = arith.constant dense<0.000000e+00> : vector<8x8xf32>
    %274 = vector.multi_reduction <add>, %273, %cst_85 [2] : vector<8x8x8xf32> to vector<8x8xf32>
    %275 = vector.shape_cast %274 : vector<8x8xf32> to vector<8x8x1xf32>
    %276 = vector.broadcast %275 : vector<8x8x1xf32> to vector<8x8x8xf32>
    %277 = arith.mulf %276, %9 : vector<8x8x8xf32>
    %cst_86 = arith.constant 2.000000e-01 : f32
    %278 = vector.broadcast %cst_86 : f32 to vector<8x8x1xf32>
    %279 = arith.addf %278, %272 : vector<8x8x1xf32>
    %280 = vector.broadcast %279 : vector<8x8x1xf32> to vector<8x8x8xf32>
    %281 = arith.subf %280, %24 : vector<8x8x8xf32>
    %cst_87 = arith.constant 0.000000e+00 : f32
    %282 = vector.broadcast %cst_87 : f32 to vector<8x8x8xf32>
    %283 = arith.maximumf %281, %282 : vector<8x8x8xf32>
    %284 = arith.mulf %283, %277 : vector<8x8x8xf32>
    %cst_88 = arith.constant dense<0.000000e+00> : vector<8x8xf32>
    %285 = vector.multi_reduction <add>, %284, %cst_88 [2] : vector<8x8x8xf32> to vector<8x8xf32>
    %286 = vector.shape_cast %285 : vector<8x8xf32> to vector<8x8x1xf32>
    %cst_89 = arith.constant dense<0.000000e+00> : vector<8x1xf32>
    %287 = vector.multi_reduction <add>, %286, %cst_89 [1] : vector<8x8x1xf32> to vector<8x1xf32>
    %288 = vector.shape_cast %287 : vector<8x1xf32> to vector<8x1x1xf32>
    %289 = arith.addf %256, %288 : vector<8x1x1xf32>
    %cst_90 = arith.constant 0.000000e+00 : f32
    %290 = vector.broadcast %cst_90 : f32 to vector<8x8x8xf32>
    %291 = arith.cmpf one, %284, %290 : vector<8x8x8xf32>
    %292 = arith.extui %291 : vector<8x8x8xi1> to vector<8x8x8xi32>
    %293 = arith.sitofp %292 : vector<8x8x8xi32> to vector<8x8x8xf32>
    %cst_91 = arith.constant dense<0.000000e+00> : vector<8x8xf32>
    %294 = vector.multi_reduction <add>, %293, %cst_91 [2] : vector<8x8x8xf32> to vector<8x8xf32>
    %295 = vector.shape_cast %294 : vector<8x8xf32> to vector<8x8x1xf32>
    %cst_92 = arith.constant dense<0.000000e+00> : vector<8x1xf32>
    %296 = vector.multi_reduction <add>, %295, %cst_92 [1] : vector<8x8x1xf32> to vector<8x1xf32>
    %297 = vector.shape_cast %296 : vector<8x1xf32> to vector<8x1x1xf32>
    %298 = arith.addf %265, %297 : vector<8x1x1xf32>
    %c8_i32 = arith.constant 8 : i32
    %c0_93 = arith.constant 0 : index
    %c0_94 = arith.constant 0 : index
    %c0_95 = arith.constant 0 : index
    %299 = vector.load %arg4[%c0_93, %c0_94, %c0_95] : memref<8x1x1xf32, #tpu.memory_space<vmem>>, vector<8x1x1xf32>
    tpu.vector_store %arg4[%c0_93, %c0_94, %c0_95], %289 {strides = array<i32>} : memref<8x1x1xf32, #tpu.memory_space<vmem>>, vector<8x1x1xf32>,
    %c0_96 = arith.constant 0 : index
    %c0_97 = arith.constant 0 : index
    %c0_98 = arith.constant 0 : index
    %300 = vector.load %arg5[%c0_96, %c0_97, %c0_98] : memref<8x1x1xf32, #tpu.memory_space<vmem>>, vector<8x1x1xf32>
    tpu.vector_store %arg5[%c0_96, %c0_97, %c0_98], %298 {strides = array<i32>} : memref<8x1x1xf32, #tpu.memory_space<vmem>>, vector<8x1x1xf32>,
    return
  }
  func.func @transform_0(%arg0: i32) -> (i32, i32, i32) {
    %c0_i32 = arith.constant 0 : i32
    %c0_i32_0 = arith.constant 0 : i32
    %c0_i32_1 = arith.constant 0 : i32
    return %arg0, %c0_i32, %c0_i32_0 : i32, i32, i32
  }
  func.func @transform_1(%arg0: i32) -> (i32, i32, i32) {
    %c0_i32 = arith.constant 0 : i32
    %c0_i32_0 = arith.constant 0 : i32
    %c0_i32_1 = arith.constant 0 : i32
    return %arg0, %c0_i32, %c0_i32_0 : i32, i32, i32
  }
  func.func @transform_2(%arg0: i32) -> (i32, i32, i32) {
    %c0_i32 = arith.constant 0 : i32
    %c0_i32_0 = arith.constant 0 : i32
    %c0_i32_1 = arith.constant 0 : i32
    return %arg0, %c0_i32, %c0_i32_0 : i32, i32, i32
  }
  func.func @transform_3(%arg0: i32) -> (i32, i32, i32) {
    %c0_i32 = arith.constant 0 : i32
    %c0_i32_0 = arith.constant 0 : i32
    %c0_i32_1 = arith.constant 0 : i32
    return %arg0, %c0_i32, %c0_i32_0 : i32, i32, i32
  }
  func.func @transform_4(%arg0: i32) -> (i32, i32, i32) {
    %c0_i32 = arith.constant 0 : i32
    %c0_i32_0 = arith.constant 0 : i32
    %c0_i32_1 = arith.constant 0 : i32
    return %arg0, %c0_i32, %c0_i32_0 : i32, i32, i32
  }
  func.func @transform_5(%arg0: i32) -> (i32, i32, i32) {
    %c0_i32 = arith.constant 0 : i32
    %c0_i32_0 = arith.constant 0 : i32
    %c0_i32_1 = arith.constant 0 : i32
    return %arg0, %c0_i32, %c0_i32_0 : i32, i32, i32
  }
}

</mosaic_0001>

<llo_original>
// kernel: tpu_custom_call.1
$region0: #{tpu_custom_call.1}
  #allocation0 [shape = 'u32[]', space=smem, size = 0x4, offset = 0x4, fixed_abs, tag = 'smem constant byte address 0x4 - core index']
  #allocation1 [shape = 'u32[144,128]{1,0:T(1,128)}', space=vmem, size = 0x12000, scoped, tag = 'internal scratch']
  %s0 = inlined_call_operand.vmem [shape: s32[8,8,1], index: 0, kind: input, shape index: {}]
  %s1 = inlined_call_operand.vmem [shape: s32[8,1,8], index: 1, kind: input, shape index: {}]
  %s2 = inlined_call_operand.vmem [shape: f32[8,8,32], index: 2, kind: input, shape index: {}]
  %s3 = inlined_call_operand.vmem [shape: f32[8,1,1], index: 3, kind: output, shape index: {0}]
  %s4 = inlined_call_operand.vmem [shape: f32[8,1,1], index: 4, kind: output, shape index: {1}]
  %s5 = inlined_call_operand.vmem [shape: f32[8,1,1], index: 5, kind: output, shape index: {2}]
  %6 = xla_tuple %s3, %s4, %s5
  %s7 = sld [smem:[#allocation0]]
  $region38: #{tpu_custom_call.1} parent=0
    _
  %s9 = ssub.s32 1, %s7
  %s10 = scalar_select 0, %s9, %s7
  // Predicated region
  $region2: #{tpu_custom_call.1} parent=0 // pred_check
    _
  $region3: #{tpu_custom_call.1} parent=0 // pred_check_branch
    %12 = sbr.rel (0) target = $region5
  $region4: #{tpu_custom_call.1} parent=0 // pred_region
    _
  $region5: #{tpu_custom_call.1} parent=0 // pred_fallthru
    _
  // Predicated region
  $region6: #{tpu_custom_call.1} parent=0 // pred_check
    _
  $region7: #{tpu_custom_call.1} parent=0 // pred_check_branch
    %14 = sbr.rel (0) target = $region9
  $region8: #{tpu_custom_call.1} parent=0 // pred_region
    _
  $region9: #{tpu_custom_call.1} parent=0 // pred_fallthru
    _
  // Predicated region
  $region10: #{tpu_custom_call.1} parent=0 // pred_check
    _
  $region11: #{tpu_custom_call.1} parent=0 // pred_check_branch
    %16 = sbr.rel (0) target = $region13
  $region12: #{tpu_custom_call.1} parent=0 // pred_region
    _
  $region13: #{tpu_custom_call.1} parent=0 // pred_fallthru
    _
  %v17 = vld [vmem:[%s2] sm:$0xff]
  %v18 = vld [vmem:[%s2 + $0x8] sm:$0xff]
  %v19 = vld [vmem:[%s2 + $0x10] sm:$0xff]
  %v20 = vld [vmem:[%s2 + $0x18] sm:$0xff]
  %v21 = vld [vmem:[%s2 + $0x20] sm:$0xff]
  %v22 = vld [vmem:[%s2 + $0x28] sm:$0xff]
  %v23 = vld [vmem:[%s2 + $0x30] sm:$0xff]
  %v24 = vld [vmem:[%s2 + $0x38] sm:$0xff]
  %v25 = vld [vmem:[%s0] sm:$0xff]
  %v26 = vld [vmem:[%s0 + $0x8] sm:$0xff]
  %v27 = vld [vmem:[%s0 + $0x10] sm:$0xff]
  %v28 = vld [vmem:[%s0 + $0x18] sm:$0xff]
  %v29 = vld [vmem:[%s0 + $0x20] sm:$0xff]
  %v30 = vld [vmem:[%s0 + $0x28] sm:$0xff]
  %v31 = vld [vmem:[%s0 + $0x30] sm:$0xff]
  %v32 = vld [vmem:[%s0 + $0x38] sm:$0xff]
  %v33 = vld [vmem:[%s1] sm:$0x1]
  %v34 = vld [vmem:[%s1 + $0x1] sm:$0x1]
  %v35 = vld [vmem:[%s1 + $0x2] sm:$0x1]
  %v36 = vld [vmem:[%s1 + $0x3] sm:$0x1]
  %v37 = vld [vmem:[%s1 + $0x4] sm:$0x1]
  %v38 = vld [vmem:[%s1 + $0x5] sm:$0x1]
  %v39 = vld [vmem:[%s1 + $0x6] sm:$0x1]
  %v40 = vld [vmem:[%s1 + $0x7] sm:$0x1]
  %41 = vset.pattern.permute.xlu0 0
  %42 = vperm.xlu0 %41, %v25
  %v43 = vpop.permute.xlu0 %42
  %44 = vset.pattern.permute.xlu0 0
  %45 = vperm.xlu0 %44, %v26
  %v46 = vpop.permute.xlu0 %45
  %47 = vset.pattern.permute.xlu0 0
  %48 = vperm.xlu0 %47, %v27
  %v49 = vpop.permute.xlu0 %48
  %50 = vset.pattern.permute.xlu0 0
  %51 = vperm.xlu0 %50, %v28
  %v52 = vpop.permute.xlu0 %51
  %53 = vset.pattern.permute.xlu0 0
  %54 = vperm.xlu0 %53, %v29
  %v55 = vpop.permute.xlu0 %54
  %56 = vset.pattern.permute.xlu0 0
  %57 = vperm.xlu0 %56, %v30
  %v58 = vpop.permute.xlu0 %57
  %59 = vset.pattern.permute.xlu0 0
  %60 = vperm.xlu0 %59, %v31
  %v61 = vpop.permute.xlu0 %60
  %62 = vset.pattern.permute.xlu0 0
  %63 = vperm.xlu0 %62, %v32
  %v64 = vpop.permute.xlu0 %63
  %v65 = vlaneseq
  %v66 = vshrl.u32 %v65, 7
  %v67 = vsub.s32 0, %v66
  %v68 = vrot.slane %v33, %v67
  %v69 = vlaneseq
  %v70 = vshrl.u32 %v69, 7
  %v71 = vsub.s32 0, %v70
  %v72 = vrot.slane %v34, %v71
  %v73 = vlaneseq
  %v74 = vshrl.u32 %v73, 7
  %v75 = vsub.s32 0, %v74
  %v76 = vrot.slane %v35, %v75
  %v77 = vlaneseq
  %v78 = vshrl.u32 %v77, 7
  %v79 = vsub.s32 0, %v78
  %v80 = vrot.slane %v36, %v79
  %v81 = vlaneseq
  %v82 = vshrl.u32 %v81, 7
  %v83 = vsub.s32 0, %v82
  %v84 = vrot.slane %v37, %v83
  %v85 = vlaneseq
  %v86 = vshrl.u32 %v85, 7
  %v87 = vsub.s32 0, %v86
  %v88 = vrot.slane %v38, %v87
  %v89 = vlaneseq
  %v90 = vshrl.u32 %v89, 7
  %v91 = vsub.s32 0, %v90
  %v92 = vrot.slane %v39, %v91
  %v93 = vlaneseq
  %v94 = vshrl.u32 %v93, 7
  %v95 = vsub.s32 0, %v94
  %v96 = vrot.slane %v40, %v95
  %vm97 = vcmp.eq.s32.totalorder %v43, %v68
  %vm98 = vcmp.eq.s32.totalorder %v46, %v72
  %vm99 = vcmp.eq.s32.totalorder %v49, %v76
  %vm100 = vcmp.eq.s32.totalorder %v52, %v80
  %vm101 = vcmp.eq.s32.totalorder %v55, %v84
  %vm102 = vcmp.eq.s32.totalorder %v58, %v88
  %vm103 = vcmp.eq.s32.totalorder %v61, %v92
  %vm104 = vcmp.eq.s32.totalorder %v64, %v96
  %v105 = vsel %vm97, 1, 0
  %v106 = vsel %vm98, 1, 0
  %v107 = vsel %vm99, 1, 0
  %v108 = vsel %vm100, 1, 0
  %v109 = vsel %vm101, 1, 0
  %v110 = vsel %vm102, 1, 0
  %v111 = vsel %vm103, 1, 0
  %v112 = vsel %vm104, 1, 0
  %v113 = vcvt.s32.f32 %v105
  %v114 = vcvt.s32.f32 %v106
  %v115 = vcvt.s32.f32 %v107
  %v116 = vcvt.s32.f32 %v108
  %v117 = vcvt.s32.f32 %v109
  %v118 = vcvt.s32.f32 %v110
  %v119 = vcvt.s32.f32 %v111
  %v120 = vcvt.s32.f32 %v112
  %v121 = vsub.f32 1.0, %v113
  %v122 = vsub.f32 1.0, %v114
  %v123 = vsub.f32 1.0, %v115
  %v124 = vsub.f32 1.0, %v116
  %v125 = vsub.f32 1.0, %v117
  %v126 = vsub.f32 1.0, %v118
  %v127 = vsub.f32 1.0, %v119
  %v128 = vsub.f32 1.0, %v120
  %vm129 = vcmask 261120
  %v131 = vsel %vm129, %v17, 0
  %133 = vmatprep.subr.mxu0 0.0
  %134 = vmatpush1.xpose.msra.mxu0 %v131
  %135 = vmatprep.subr.mxu0 0.0
  %136 = vmatpush1.xpose.msra.mxu0 0.0
  %137 = vmatprep.subr.mxu0 0.0
  %138 = vmatpush1.xpose.msra.mxu0 0.0
  %139 = vmatprep.subr.mxu0 0.0
  %140 = vmatpush1.xpose.msra.mxu0 0.0
  %141 = vmatprep.subr.mxu0 0.0
  %142 = vmatpush1.xpose.msra.mxu0 0.0
  %143 = vmatprep.subr.mxu0 0.0
  %144 = vmatpush1.xpose.msra.mxu0 0.0
  %145 = vmatprep.subr.mxu0 0.0
  %146 = vmatpush1.xpose.msra.mxu0 0.0
  %147 = vmatprep.subr.mxu0 0.0
  %148 = vmatpush1.xpose.msra.mxu0 0.0
  %149 = vmatprep.subr.mxu0 0.0
  %150 = vmatpush1.xpose.msra.mxu0 0.0
  %151 = vmatprep.subr.mxu0 0.0
  %152 = vmatpush1.xpose.msra.mxu0 0.0
  %153 = vmatprep.subr.mxu0 0.0
  %154 = vmatpush1.xpose.msra.mxu0 0.0
  %155 = vmatprep.subr.mxu0 0.0
  %156 = vmatpush1.xpose.msra.mxu0 0.0
  %157 = vmatprep.subr.mxu0 0.0
  %158 = vmatpush1.xpose.msra.mxu0 0.0
  %159 = vmatprep.subr.mxu0 0.0
  %160 = vmatpush1.xpose.msra.mxu0 0.0
  %161 = vmatprep.subr.mxu0 0.0
  %162 = vmatpush1.xpose.msra.mxu0 0.0
  %163 = vmatprep.subr.mxu0 0.0
  %164 = vmatpush1.xpose.msra.mxu0 0.0
  %165 = vmatprep.subr.mxu0 0.0
  %166 = vmatpush1.xpose.msra.mxu0 0.0
  %167 = vmatprep.subr.mxu0 0.0
  %168 = vmatpush1.xpose.msra.mxu0 0.0
  %169 = vmatprep.subr.mxu0 0.0
  %170 = vmatpush1.xpose.msra.mxu0 0.0
  %171 = vmatprep.subr.mxu0 0.0
  %172 = vmatpush1.xpose.msra.mxu0 0.0
  %173 = vmatprep.subr.mxu0 0.0
  %174 = vmatpush1.xpose.msra.mxu0 0.0
  %175 = vmatprep.subr.mxu0 0.0
  %176 = vmatpush1.xpose.msra.mxu0 0.0
  %177 = vmatprep.subr.mxu0 0.0
  %178 = vmatpush1.xpose.msra.mxu0 0.0
  %179 = vmatprep.subr.mxu0 0.0
  %180 = vmatpush1.xpose.msra.mxu0 0.0
  %181 = vmatprep.subr.mxu0 0.0
  %182 = vmatpush1.xpose.msra.mxu0 0.0
  %183 = vmatprep.subr.mxu0 0.0
  %184 = vmatpush1.xpose.msra.mxu0 0.0
  %185 = vmatprep.subr.mxu0 0.0
  %186 = vmatpush1.xpose.msra.mxu0 0.0
  %187 = vmatprep.subr.mxu0 0.0
  %188 = vmatpush1.xpose.msra.mxu0 0.0
  %189 = vmatprep.subr.mxu0 0.0
  %190 = vmatpush1.xpose.msra.mxu0 0.0
  %191 = vmatprep.subr.mxu0 0.0
  %192 = vmatpush1.xpose.msra.mxu0 0.0
  %193 = vmatprep.subr.mxu0 0.0
  %194 = vmatpush1.xpose.msra.mxu0 0.0
  %195 = vmatprep.subr.mxu0 0.0
  %196 = vmatpush1.xpose.msra.mxu0 0.0
  %197 = vmatprep.mubr.f32.mxu0 0.0
  %198 = vmatmul.mubr.f32.gmra.mrb[0].mxu0 %v131
  %v199 = vpop.f32.mrb[0].mxu0
  %v200 = vadd.f32 0.0, %v199
  %v201 = vpop.f32.mrb[0].mxu0
  %202 = vdwg.mxu0
  %v204 = vsel %vm129, %v18, 0
  %206 = vmatprep.subr.mxu0 0.0
  %207 = vmatpush1.xpose.msra.mxu0 %v204
  %208 = vmatprep.subr.mxu0 0.0
  %209 = vmatpush1.xpose.msra.mxu0 0.0
  %210 = vmatprep.subr.mxu0 0.0
  %211 = vmatpush1.xpose.msra.mxu0 0.0
  %212 = vmatprep.subr.mxu0 0.0
  %213 = vmatpush1.xpose.msra.mxu0 0.0
  %214 = vmatprep.subr.mxu0 0.0
  %215 = vmatpush1.xpose.msra.mxu0 0.0
  %216 = vmatprep.subr.mxu0 0.0
  %217 = vmatpush1.xpose.msra.mxu0 0.0
  %218 = vmatprep.subr.mxu0 0.0
  %219 = vmatpush1.xpose.msra.mxu0 0.0
  %220 = vmatprep.subr.mxu0 0.0
  %221 = vmatpush1.xpose.msra.mxu0 0.0
  %222 = vmatprep.subr.mxu0 0.0
  %223 = vmatpush1.xpose.msra.mxu0 0.0
  %224 = vmatprep.subr.mxu0 0.0
  %225 = vmatpush1.xpose.msra.mxu0 0.0
  %226 = vmatprep.subr.mxu0 0.0
  %227 = vmatpush1.xpose.msra.mxu0 0.0
  %228 = vmatprep.subr.mxu0 0.0
  %229 = vmatpush1.xpose.msra.mxu0 0.0
  %230 = vmatprep.subr.mxu0 0.0
  %231 = vmatpush1.xpose.msra.mxu0 0.0
  %232 = vmatprep.subr.mxu0 0.0
  %233 = vmatpush1.xpose.msra.mxu0 0.0
  %234 = vmatprep.subr.mxu0 0.0
  %235 = vmatpush1.xpose.msra.mxu0 0.0
  %236 = vmatprep.subr.mxu0 0.0
  %237 = vmatpush1.xpose.msra.mxu0 0.0
  %238 = vmatprep.subr.mxu0 0.0
  %239 = vmatpush1.xpose.msra.mxu0 0.0
  %240 = vmatprep.subr.mxu0 0.0
  %241 = vmatpush1.xpose.msra.mxu0 0.0
  %242 = vmatprep.subr.mxu0 0.0
  %243 = vmatpush1.xpose.msra.mxu0 0.0
  %244 = vmatprep.subr.mxu0 0.0
  %245 = vmatpush1.xpose.msra.mxu0 0.0
  %246 = vmatprep.subr.mxu0 0.0
  %247 = vmatpush1.xpose.msra.mxu0 0.0
  %248 = vmatprep.subr.mxu0 0.0
  %249 = vmatpush1.xpose.msra.mxu0 0.0
  %250 = vmatprep.subr.mxu0 0.0
  %251 = vmatpush1.xpose.msra.mxu0 0.0
  %252 = vmatprep.subr.mxu0 0.0
  %253 = vmatpush1.xpose.msra.mxu0 0.0
  %254 = vmatprep.subr.mxu0 0.0
  %255 = vmatpush1.xpose.msra.mxu0 0.0
  %256 = vmatprep.subr.mxu0 0.0
  %257 = vmatpush1.xpose.msra.mxu0 0.0
  %258 = vmatprep.subr.mxu0 0.0
  %259 = vmatpush1.xpose.msra.mxu0 0.0
  %260 = vmatprep.subr.mxu0 0.0
  %261 = vmatpush1.xpose.msra.mxu0 0.0
  %262 = vmatprep.subr.mxu0 0.0
  %263 = vmatpush1.xpose.msra.mxu0 0.0
  %264 = vmatprep.subr.mxu0 0.0
  %265 = vmatpush1.xpose.msra.mxu0 0.0
  %266 = vmatprep.subr.mxu0 0.0
  %267 = vmatpush1.xpose.msra.mxu0 0.0
  %268 = vmatprep.subr.mxu0 0.0
  %269 = vmatpush1.xpose.msra.mxu0 0.0
  %270 = vmatprep.mubr.f32.mxu0 0.0
  %271 = vmatmul.mubr.f32.gmra.mrb[0].mxu0 %v204
  %v272 = vpop.f32.mrb[0].mxu0
  %v273 = vadd.f32 0.0, %v272
  %v274 = vpop.f32.mrb[0].mxu0
  %275 = vdwg.mxu0
  %v277 = vsel %vm129, %v19, 0
  %279 = vmatprep.subr.mxu0 0.0
  %280 = vmatpush1.xpose.msra.mxu0 %v277
  %281 = vmatprep.subr.mxu0 0.0
  %282 = vmatpush1.xpose.msra.mxu0 0.0
  %283 = vmatprep.subr.mxu0 0.0
  %284 = vmatpush1.xpose.msra.mxu0 0.0
  %285 = vmatprep.subr.mxu0 0.0
  %286 = vmatpush1.xpose.msra.mxu0 0.0
  %287 = vmatprep.subr.mxu0 0.0
  %288 = vmatpush1.xpose.msra.mxu0 0.0
  %289 = vmatprep.subr.mxu0 0.0
  %290 = vmatpush1.xpose.msra.mxu0 0.0
  %291 = vmatprep.subr.mxu0 0.0
  %292 = vmatpush1.xpose.msra.mxu0 0.0
  %293 = vmatprep.subr.mxu0 0.0
  %294 = vmatpush1.xpose.msra.mxu0 0.0
  %295 = vmatprep.subr.mxu0 0.0
  %296 = vmatpush1.xpose.msra.mxu0 0.0
  %297 = vmatprep.subr.mxu0 0.0
  %298 = vmatpush1.xpose.msra.mxu0 0.0
  %299 = vmatprep.subr.mxu0 0.0
  %300 = vmatpush1.xpose.msra.mxu0 0.0
  %301 = vmatprep.subr.mxu0 0.0
  %302 = vmatpush1.xpose.msra.mxu0 0.0
  %303 = vmatprep.subr.mxu0 0.0
  %304 = vmatpush1.xpose.msra.mxu0 0.0
  %305 = vmatprep.subr.mxu0 0.0
  %306 = vmatpush1.xpose.msra.mxu0 0.0
  %307 = vmatprep.subr.mxu0 0.0
  %308 = vmatpush1.xpose.msra.mxu0 0.0
  %309 = vmatprep.subr.mxu0 0.0
  %310 = vmatpush1.xpose.msra.mxu0 0.0
  %311 = vmatprep.subr.mxu0 0.0
  %312 = vmatpush1.xpose.msra.mxu0 0.0
  %313 = vmatprep.subr.mxu0 0.0
  %314 = vmatpush1.xpose.msra.mxu0 0.0
  %315 = vmatprep.subr.mxu0 0.0
  %316 = vmatpush1.xpose.msra.mxu0 0.0
  %317 = vmatprep.subr.mxu0 0.0
  %318 = vmatpush1.xpose.msra.mxu0 0.0
  %319 = vmatprep.subr.mxu0 0.0
  %320 = vmatpush1.xpose.msra.mxu0 0.0
  %321 = vmatprep.subr.mxu0 0.0
  %322 = vmatpush1.xpose.msra.mxu0 0.0
  %323 = vmatprep.subr.mxu0 0.0
  %324 = vmatpush1.xpose.msra.mxu0 0.0
  %325 = vmatprep.subr.mxu0 0.0
  %326 = vmatpush1.xpose.msra.mxu0 0.0
  %327 = vmatprep.subr.mxu0 0.0
  %328 = vmatpush1.xpose.msra.mxu0 0.0
  %329 = vmatprep.subr.mxu0 0.0
  %330 = vmatpush1.xpose.msra.mxu0 0.0
  %331 = vmatprep.subr.mxu0 0.0
  %332 = vmatpush1.xpose.msra.mxu0 0.0
  %333 = vmatprep.subr.mxu0 0.0
  %334 = vmatpush1.xpose.msra.mxu0 0.0
  %335 = vmatprep.subr.mxu0 0.0
  %336 = vmatpush1.xpose.msra.mxu0 0.0
  %337 = vmatprep.subr.mxu0 0.0
  %338 = vmatpush1.xpose.msra.mxu0 0.0
  %339 = vmatprep.subr.mxu0 0.0
  %340 = vmatpush1.xpose.msra.mxu0 0.0
  %341 = vmatprep.subr.mxu0 0.0
  %342 = vmatpush1.xpose.msra.mxu0 0.0
  %343 = vmatprep.mubr.f32.mxu0 0.0
  %344 = vmatmul.mubr.f32.gmra.mrb[0].mxu0 %v277
  %v345 = vpop.f32.mrb[0].mxu0
  %v346 = vadd.f32 0.0, %v345
  %v347 = vpop.f32.mrb[0].mxu0
  %348 = vdwg.mxu0
  %v350 = vsel %vm129, %v20, 0
  %352 = vmatprep.subr.mxu0 0.0
  %353 = vmatpush1.xpose.msra.mxu0 %v350
  %354 = vmatprep.subr.mxu0 0.0
  %355 = vmatpush1.xpose.msra.mxu0 0.0
  %356 = vmatprep.subr.mxu0 0.0
  %357 = vmatpush1.xpose.msra.mxu0 0.0
  %358 = vmatprep.subr.mxu0 0.0
  %359 = vmatpush1.xpose.msra.mxu0 0.0
  %360 = vmatprep.subr.mxu0 0.0
  %361 = vmatpush1.xpose.msra.mxu0 0.0
  %362 = vmatprep.subr.mxu0 0.0
  %363 = vmatpush1.xpose.msra.mxu0 0.0
  %364 = vmatprep.subr.mxu0 0.0
  %365 = vmatpush1.xpose.msra.mxu0 0.0
  %366 = vmatprep.subr.mxu0 0.0
  %367 = vmatpush1.xpose.msra.mxu0 0.0
  %368 = vmatprep.subr.mxu0 0.0
  %369 = vmatpush1.xpose.msra.mxu0 0.0
  %370 = vmatprep.subr.mxu0 0.0
  %371 = vmatpush1.xpose.msra.mxu0 0.0
  %372 = vmatprep.subr.mxu0 0.0
  %373 = vmatpush1.xpose.msra.mxu0 0.0
  %374 = vmatprep.subr.mxu0 0.0
  %375 = vmatpush1.xpose.msra.mxu0 0.0
  %376 = vmatprep.subr.mxu0 0.0
  %377 = vmatpush1.xpose.msra.mxu0 0.0
  %378 = vmatprep.subr.mxu0 0.0
  %379 = vmatpush1.xpose.msra.mxu0 0.0
  %380 = vmatprep.subr.mxu0 0.0
  %381 = vmatpush1.xpose.msra.mxu0 0.0
  %382 = vmatprep.subr.mxu0 0.0
  %383 = vmatpush1.xpose.msra.mxu0 0.0
  %384 = vmatprep.subr.mxu0 0.0
  %385 = vmatpush1.xpose.msra.mxu0 0.0
  %386 = vmatprep.subr.mxu0 0.0
  %387 = vmatpush1.xpose.msra.mxu0 0.0
  %388 = vmatprep.subr.mxu0 0.0
  %389 = vmatpush1.xpose.msra.mxu0 0.0
  %390 = vmatprep.subr.mxu0 0.0
  %391 = vmatpush1.xpose.msra.mxu0 0.0
  %392 = vmatprep.subr.mxu0 0.0
  %393 = vmatpush1.xpose.msra.mxu0 0.0
  %394 = vmatprep.subr.mxu0 0.0
  %395 = vmatpush1.xpose.msra.mxu0 0.0
  %396 = vmatprep.subr.mxu0 0.0
  %397 = vmatpush1.xpose.msra.mxu0 0.0
  %398 = vmatprep.subr.mxu0 0.0
  %399 = vmatpush1.xpose.msra.mxu0 0.0
  %400 = vmatprep.subr.mxu0 0.0
  %401 = vmatpush1.xpose.msra.mxu0 0.0
  %402 = vmatprep.subr.mxu0 0.0
  %403 = vmatpush1.xpose.msra.mxu0 0.0
  %404 = vmatprep.subr.mxu0 0.0
  %405 = vmatpush1.xpose.msra.mxu0 0.0
  %406 = vmatprep.subr.mxu0 0.0
  %407 = vmatpush1.xpose.msra.mxu0 0.0
  %408 = vmatprep.subr.mxu0 0.0
  %409 = vmatpush1.xpose.msra.mxu0 0.0
  %410 = vmatprep.subr.mxu0 0.0
  %411 = vmatpush1.xpose.msra.mxu0 0.0
  %412 = vmatprep.subr.mxu0 0.0
  %413 = vmatpush1.xpose.msra.mxu0 0.0
  %414 = vmatprep.subr.mxu0 0.0
  %415 = vmatpush1.xpose.msra.mxu0 0.0
  %416 = vmatprep.mubr.f32.mxu0 0.0
  %417 = vmatmul.mubr.f32.gmra.mrb[0].mxu0 %v350
  %v418 = vpop.f32.mrb[0].mxu0
  %v419 = vadd.f32 0.0, %v418
  %v420 = vpop.f32.mrb[0].mxu0
  %421 = vdwg.mxu0
  %v423 = vsel %vm129, %v21, 0
  %425 = vmatprep.subr.mxu0 0.0
  %426 = vmatpush1.xpose.msra.mxu0 %v423
  %427 = vmatprep.subr.mxu0 0.0
  %428 = vmatpush1.xpose.msra.mxu0 0.0
  %429 = vmatprep.subr.mxu0 0.0
  %430 = vmatpush1.xpose.msra.mxu0 0.0
  %431 = vmatprep.subr.mxu0 0.0
  %432 = vmatpush1.xpose.msra.mxu0 0.0
  %433 = vmatprep.subr.mxu0 0.0
  %434 = vmatpush1.xpose.msra.mxu0 0.0
  %435 = vmatprep.subr.mxu0 0.0
  %436 = vmatpush1.xpose.msra.mxu0 0.0
  %437 = vmatprep.subr.mxu0 0.0
  %438 = vmatpush1.xpose.msra.mxu0 0.0
  %439 = vmatprep.subr.mxu0 0.0
  %440 = vmatpush1.xpose.msra.mxu0 0.0
  %441 = vmatprep.subr.mxu0 0.0
  %442 = vmatpush1.xpose.msra.mxu0 0.0
  %443 = vmatprep.subr.mxu0 0.0
  %444 = vmatpush1.xpose.msra.mxu0 0.0
  %445 = vmatprep.subr.mxu0 0.0
  %446 = vmatpush1.xpose.msra.mxu0 0.0
  %447 = vmatprep.subr.mxu0 0.0
  %448 = vmatpush1.xpose.msra.mxu0 0.0
  %449 = vmatprep.subr.mxu0 0.0
  %450 = vmatpush1.xpose.msra.mxu0 0.0
  %451 = vmatprep.subr.mxu0 0.0
  %452 = vmatpush1.xpose.msra.mxu0 0.0
  %453 = vmatprep.subr.mxu0 0.0
  %454 = vmatpush1.xpose.msra.mxu0 0.0
  %455 = vmatprep.subr.mxu0 0.0
  %456 = vmatpush1.xpose.msra.mxu0 0.0
  %457 = vmatprep.subr.mxu0 0.0
  %458 = vmatpush1.xpose.msra.mxu0 0.0
  %459 = vmatprep.subr.mxu0 0.0
  %460 = vmatpush1.xpose.msra.mxu0 0.0
  %461 = vmatprep.subr.mxu0 0.0
  %462 = vmatpush1.xpose.msra.mxu0 0.0
  %463 = vmatprep.subr.mxu0 0.0
  %464 = vmatpush1.xpose.msra.mxu0 0.0
  %465 = vmatprep.subr.mxu0 0.0
  %466 = vmatpush1.xpose.msra.mxu0 0.0
  %467 = vmatprep.subr.mxu0 0.0
  %468 = vmatpush1.xpose.msra.mxu0 0.0
  %469 = vmatprep.subr.mxu0 0.0
  %470 = vmatpush1.xpose.msra.mxu0 0.0
  %471 = vmatprep.subr.mxu0 0.0
  %472 = vmatpush1.xpose.msra.mxu0 0.0
  %473 = vmatprep.subr.mxu0 0.0
  %474 = vmatpush1.xpose.msra.mxu0 0.0
  %475 = vmatprep.subr.mxu0 0.0
  %476 = vmatpush1.xpose.msra.mxu0 0.0
  %477 = vmatprep.subr.mxu0 0.0
  %478 = vmatpush1.xpose.msra.mxu0 0.0
  %479 = vmatprep.subr.mxu0 0.0
  %480 = vmatpush1.xpose.msra.mxu0 0.0
  %481 = vmatprep.subr.mxu0 0.0
  %482 = vmatpush1.xpose.msra.mxu0 0.0
  %483 = vmatprep.subr.mxu0 0.0
  %484 = vmatpush1.xpose.msra.mxu0 0.0
  %485 = vmatprep.subr.mxu0 0.0
  %486 = vmatpush1.xpose.msra.mxu0 0.0
  %487 = vmatprep.subr.mxu0 0.0
  %488 = vmatpush1.xpose.msra.mxu0 0.0
  %489 = vmatprep.mubr.f32.mxu0 0.0
  %490 = vmatmul.mubr.f32.gmra.mrb[0].mxu0 %v423
  %v491 = vpop.f32.mrb[0].mxu0
  %v492 = vadd.f32 0.0, %v491
  %v493 = vpop.f32.mrb[0].mxu0
  %494 = vdwg.mxu0
  %v496 = vsel %vm129, %v22, 0
  %498 = vmatprep.subr.mxu0 0.0
  %499 = vmatpush1.xpose.msra.mxu0 %v496
  %500 = vmatprep.subr.mxu0 0.0
  %501 = vmatpush1.xpose.msra.mxu0 0.0
  %502 = vmatprep.subr.mxu0 0.0
  %503 = vmatpush1.xpose.msra.mxu0 0.0
  %504 = vmatprep.subr.mxu0 0.0
  %505 = vmatpush1.xpose.msra.mxu0 0.0
  %506 = vmatprep.subr.mxu0 0.0
  %507 = vmatpush1.xpose.msra.mxu0 0.0
  %508 = vmatprep.subr.mxu0 0.0
  %509 = vmatpush1.xpose.msra.mxu0 0.0
  %510 = vmatprep.subr.mxu0 0.0
  %511 = vmatpush1.xpose.msra.mxu0 0.0
  %512 = vmatprep.subr.mxu0 0.0
  %513 = vmatpush1.xpose.msra.mxu0 0.0
  %514 = vmatprep.subr.mxu0 0.0
  %515 = vmatpush1.xpose.msra.mxu0 0.0
  %516 = vmatprep.subr.mxu0 0.0
  %517 = vmatpush1.xpose.msra.mxu0 0.0
  %518 = vmatprep.subr.mxu0 0.0
  %519 = vmatpush1.xpose.msra.mxu0 0.0
  %520 = vmatprep.subr.mxu0 0.0
  %521 = vmatpush1.xpose.msra.mxu0 0.0
  %522 = vmatprep.subr.mxu0 0.0
  %523 = vmatpush1.xpose.msra.mxu0 0.0
  %524 = vmatprep.subr.mxu0 0.0
  %525 = vmatpush1.xpose.msra.mxu0 0.0
  %526 = vmatprep.subr.mxu0 0.0
  %527 = vmatpush1.xpose.msra.mxu0 0.0
  %528 = vmatprep.subr.mxu0 0.0
  %529 = vmatpush1.xpose.msra.mxu0 0.0
  %530 = vmatprep.subr.mxu0 0.0
  %531 = vmatpush1.xpose.msra.mxu0 0.0
  %532 = vmatprep.subr.mxu0 0.0
  %533 = vmatpush1.xpose.msra.mxu0 0.0
  %534 = vmatprep.subr.mxu0 0.0
  %535 = vmatpush1.xpose.msra.mxu0 0.0
  %536 = vmatprep.subr.mxu0 0.0
  %537 = vmatpush1.xpose.msra.mxu0 0.0
  %538 = vmatprep.subr.mxu0 0.0
  %539 = vmatpush1.xpose.msra.mxu0 0.0
  %540 = vmatprep.subr.mxu0 0.0
  %541 = vmatpush1.xpose.msra.mxu0 0.0
  %542 = vmatprep.subr.mxu0 0.0
  %543 = vmatpush1.xpose.msra.mxu0 0.0
  %544 = vmatprep.subr.mxu0 0.0
  %545 = vmatpush1.xpose.msra.mxu0 0.0
  %546 = vmatprep.subr.mxu0 0.0
  %547 = vmatpush1.xpose.msra.mxu0 0.0
  %548 = vmatprep.subr.mxu0 0.0
  %549 = vmatpush1.xpose.msra.mxu0 0.0
  %550 = vmatprep.subr.mxu0 0.0
  %551 = vmatpush1.xpose.msra.mxu0 0.0
  %552 = vmatprep.subr.mxu0 0.0
  %553 = vmatpush1.xpose.msra.mxu0 0.0
  %554 = vmatprep.subr.mxu0 0.0
  %555 = vmatpush1.xpose.msra.mxu0 0.0
  %556 = vmatprep.subr.mxu0 0.0
  %557 = vmatpush1.xpose.msra.mxu0 0.0
  %558 = vmatprep.subr.mxu0 0.0
  %559 = vmatpush1.xpose.msra.mxu0 0.0
  %560 = vmatprep.subr.mxu0 0.0
  %561 = vmatpush1.xpose.msra.mxu0 0.0
  %562 = vmatprep.mubr.f32.mxu0 0.0
  %563 = vmatmul.mubr.f32.gmra.mrb[0].mxu0 %v496
  %v564 = vpop.f32.mrb[0].mxu0
  %v565 = vadd.f32 0.0, %v564
  %v566 = vpop.f32.mrb[0].mxu0
  %567 = vdwg.mxu0
  %v569 = vsel %vm129, %v23, 0
  %571 = vmatprep.subr.mxu0 0.0
  %572 = vmatpush1.xpose.msra.mxu0 %v569
  %573 = vmatprep.subr.mxu0 0.0
  %574 = vmatpush1.xpose.msra.mxu0 0.0
  %575 = vmatprep.subr.mxu0 0.0
  %576 = vmatpush1.xpose.msra.mxu0 0.0
  %577 = vmatprep.subr.mxu0 0.0
  %578 = vmatpush1.xpose.msra.mxu0 0.0
  %579 = vmatprep.subr.mxu0 0.0
  %580 = vmatpush1.xpose.msra.mxu0 0.0
  %581 = vmatprep.subr.mxu0 0.0
  %582 = vmatpush1.xpose.msra.mxu0 0.0
  %583 = vmatprep.subr.mxu0 0.0
  %584 = vmatpush1.xpose.msra.mxu0 0.0
  %585 = vmatprep.subr.mxu0 0.0
  %586 = vmatpush1.xpose.msra.mxu0 0.0
  %587 = vmatprep.subr.mxu0 0.0
  %588 = vmatpush1.xpose.msra.mxu0 0.0
  %589 = vmatprep.subr.mxu0 0.0
  %590 = vmatpush1.xpose.msra.mxu0 0.0
  %591 = vmatprep.subr.mxu0 0.0
  %592 = vmatpush1.xpose.msra.mxu0 0.0
  %593 = vmatprep.subr.mxu0 0.0
  %594 = vmatpush1.xpose.msra.mxu0 0.0
  %595 = vmatprep.subr.mxu0 0.0
  %596 = vmatpush1.xpose.msra.mxu0 0.0
  %597 = vmatprep.subr.mxu0 0.0
  %598 = vmatpush1.xpose.msra.mxu0 0.0
  %599 = vmatprep.subr.mxu0 0.0
  %600 = vmatpush1.xpose.msra.mxu0 0.0
  %601 = vmatprep.subr.mxu0 0.0
  %602 = vmatpush1.xpose.msra.mxu0 0.0
  %603 = vmatprep.subr.mxu0 0.0
  %604 = vmatpush1.xpose.msra.mxu0 0.0
  %605 = vmatprep.subr.mxu0 0.0
  %606 = vmatpush1.xpose.msra.mxu0 0.0
  %607 = vmatprep.subr.mxu0 0.0
  %608 = vmatpush1.xpose.msra.mxu0 0.0
  %609 = vmatprep.subr.mxu0 0.0
  %610 = vmatpush1.xpose.msra.mxu0 0.0
  %611 = vmatprep.subr.mxu0 0.0
  %612 = vmatpush1.xpose.msra.mxu0 0.0
  %613 = vmatprep.subr.mxu0 0.0
  %614 = vmatpush1.xpose.msra.mxu0 0.0
  %615 = vmatprep.subr.mxu0 0.0
  %616 = vmatpush1.xpose.msra.mxu0 0.0
  %617 = vmatprep.subr.mxu0 0.0
  %618 = vmatpush1.xpose.msra.mxu0 0.0
  %619 = vmatprep.subr.mxu0 0.0
  %620 = vmatpush1.xpose.msra.mxu0 0.0
  %621 = vmatprep.subr.mxu0 0.0
  %622 = vmatpush1.xpose.msra.mxu0 0.0
  %623 = vmatprep.subr.mxu0 0.0
  %624 = vmatpush1.xpose.msra.mxu0 0.0
  %625 = vmatprep.subr.mxu0 0.0
  %626 = vmatpush1.xpose.msra.mxu0 0.0
  %627 = vmatprep.subr.mxu0 0.0
  %628 = vmatpush1.xpose.msra.mxu0 0.0
  %629 = vmatprep.subr.mxu0 0.0
  %630 = vmatpush1.xpose.msra.mxu0 0.0
  %631 = vmatprep.subr.mxu0 0.0
  %632 = vmatpush1.xpose.msra.mxu0 0.0
  %633 = vmatprep.subr.mxu0 0.0
  %634 = vmatpush1.xpose.msra.mxu0 0.0
  %635 = vmatprep.mubr.f32.mxu0 0.0
  %636 = vmatmul.mubr.f32.gmra.mrb[0].mxu0 %v569
  %v637 = vpop.f32.mrb[0].mxu0
  %v638 = vadd.f32 0.0, %v637
  %v639 = vpop.f32.mrb[0].mxu0
  %640 = vdwg.mxu0
  %v642 = vsel %vm129, %v24, 0
  %644 = vmatprep.subr.mxu0 0.0
  %645 = vmatpush1.xpose.msra.mxu0 %v642
  %646 = vmatprep.subr.mxu0 0.0
  %647 = vmatpush1.xpose.msra.mxu0 0.0
  %648 = vmatprep.subr.mxu0 0.0
  %649 = vmatpush1.xpose.msra.mxu0 0.0
  %650 = vmatprep.subr.mxu0 0.0
  %651 = vmatpush1.xpose.msra.mxu0 0.0
  %652 = vmatprep.subr.mxu0 0.0
  %653 = vmatpush1.xpose.msra.mxu0 0.0
  %654 = vmatprep.subr.mxu0 0.0
  %655 = vmatpush1.xpose.msra.mxu0 0.0
  %656 = vmatprep.subr.mxu0 0.0
  %657 = vmatpush1.xpose.msra.mxu0 0.0
  %658 = vmatprep.subr.mxu0 0.0
  %659 = vmatpush1.xpose.msra.mxu0 0.0
  %660 = vmatprep.subr.mxu0 0.0
  %661 = vmatpush1.xpose.msra.mxu0 0.0
  %662 = vmatprep.subr.mxu0 0.0
  %663 = vmatpush1.xpose.msra.mxu0 0.0
  %664 = vmatprep.subr.mxu0 0.0
  %665 = vmatpush1.xpose.msra.mxu0 0.0
  %666 = vmatprep.subr.mxu0 0.0
  %667 = vmatpush1.xpose.msra.mxu0 0.0
  %668 = vmatprep.subr.mxu0 0.0
  %669 = vmatpush1.xpose.msra.mxu0 0.0
  %670 = vmatprep.subr.mxu0 0.0
  %671 = vmatpush1.xpose.msra.mxu0 0.0
  %672 = vmatprep.subr.mxu0 0.0
  %673 = vmatpush1.xpose.msra.mxu0 0.0
  %674 = vmatprep.subr.mxu0 0.0
  %675 = vmatpush1.xpose.msra.mxu0 0.0
  %676 = vmatprep.subr.mxu0 0.0
  %677 = vmatpush1.xpose.msra.mxu0 0.0
  %678 = vmatprep.subr.mxu0 0.0
  %679 = vmatpush1.xpose.msra.mxu0 0.0
  %680 = vmatprep.subr.mxu0 0.0
  %681 = vmatpush1.xpose.msra.mxu0 0.0
  %682 = vmatprep.subr.mxu0 0.0
  %683 = vmatpush1.xpose.msra.mxu0 0.0
  %684 = vmatprep.subr.mxu0 0.0
  %685 = vmatpush1.xpose.msra.mxu0 0.0
  %686 = vmatprep.subr.mxu0 0.0
  %687 = vmatpush1.xpose.msra.mxu0 0.0
  %688 = vmatprep.subr.mxu0 0.0
  %689 = vmatpush1.xpose.msra.mxu0 0.0
  %690 = vmatprep.subr.mxu0 0.0
  %691 = vmatpush1.xpose.msra.mxu0 0.0
  %692 = vmatprep.subr.mxu0 0.0
  %693 = vmatpush1.xpose.msra.mxu0 0.0
  %694 = vmatprep.subr.mxu0 0.0
  %695 = vmatpush1.xpose.msra.mxu0 0.0
  %696 = vmatprep.subr.mxu0 0.0
  %697 = vmatpush1.xpose.msra.mxu0 0.0
  %698 = vmatprep.subr.mxu0 0.0
  %699 = vmatpush1.xpose.msra.mxu0 0.0
  %700 = vmatprep.subr.mxu0 0.0
  %701 = vmatpush1.xpose.msra.mxu0 0.0
  %702 = vmatprep.subr.mxu0 0.0
  %703 = vmatpush1.xpose.msra.mxu0 0.0
  %704 = vmatprep.subr.mxu0 0.0
  %705 = vmatpush1.xpose.msra.mxu0 0.0
  %706 = vmatprep.subr.mxu0 0.0
  %707 = vmatpush1.xpose.msra.mxu0 0.0
  %708 = vmatprep.mubr.f32.mxu0 0.0
  %709 = vmatmul.mubr.f32.gmra.mrb[0].mxu0 %v642
  %v710 = vpop.f32.mrb[0].mxu0
  %v711 = vadd.f32 0.0, %v710
  %v712 = vpop.f32.mrb[0].mxu0
  %713 = vdwg.mxu0
  %v714 = vmul.f32 %v17, %v17
  %v715 = vmul.f32 %v18, %v18
  %v716 = vmul.f32 %v19, %v19
  %v717 = vmul.f32 %v20, %v20
  %v718 = vmul.f32 %v21, %v21
  %v719 = vmul.f32 %v22, %v22
  %v720 = vmul.f32 %v23, %v23
  %v721 = vmul.f32 %v24, %v24
  %v722 = vsel %vm129, %v714, 0.0
  %723 = vadd.xlane.f32.xlu0 %v722
  %v724 = vpop.xlane.xlu0 %723
  %v725 = vsel %vm129, %v715, 0.0
  %726 = vadd.xlane.f32.xlu0 %v725
  %v727 = vpop.xlane.xlu0 %726
  %v728 = vsel %vm129, %v716, 0.0
  %729 = vadd.xlane.f32.xlu0 %v728
  %v730 = vpop.xlane.xlu0 %729
  %v731 = vsel %vm129, %v717, 0.0
  %732 = vadd.xlane.f32.xlu0 %v731
  %v733 = vpop.xlane.xlu0 %732
  %v734 = vsel %vm129, %v718, 0.0
  %735 = vadd.xlane.f32.xlu0 %v734
  %v736 = vpop.xlane.xlu0 %735
  %v737 = vsel %vm129, %v719, 0.0
  %738 = vadd.xlane.f32.xlu0 %v737
  %v739 = vpop.xlane.xlu0 %738
  %v740 = vsel %vm129, %v720, 0.0
  %741 = vadd.xlane.f32.xlu0 %v740
  %v742 = vpop.xlane.xlu0 %741
  %v743 = vsel %vm129, %v721, 0.0
  %744 = vadd.xlane.f32.xlu0 %v743
  %v745 = vpop.xlane.xlu0 %744
  %v747 = vsel %vm129, 1.0, 0
  %v750 = vsel %vm129, %v714, 0
  %752 = vmatprep.subr.mxu0 0.0
  %753 = vmatpush1.xpose.msra.mxu0 %v750
  %754 = vmatprep.subr.mxu0 0.0
  %755 = vmatpush1.xpose.msra.mxu0 0.0
  %756 = vmatprep.subr.mxu0 0.0
  %757 = vmatpush1.xpose.msra.mxu0 0.0
  %758 = vmatprep.subr.mxu0 0.0
  %759 = vmatpush1.xpose.msra.mxu0 0.0
  %760 = vmatprep.subr.mxu0 0.0
  %761 = vmatpush1.xpose.msra.mxu0 0.0
  %762 = vmatprep.subr.mxu0 0.0
  %763 = vmatpush1.xpose.msra.mxu0 0.0
  %764 = vmatprep.subr.mxu0 0.0
  %765 = vmatpush1.xpose.msra.mxu0 0.0
  %766 = vmatprep.subr.mxu0 0.0
  %767 = vmatpush1.xpose.msra.mxu0 0.0
  %768 = vmatprep.subr.mxu0 0.0
  %769 = vmatpush1.xpose.msra.mxu0 0.0
  %770 = vmatprep.subr.mxu0 0.0
  %771 = vmatpush1.xpose.msra.mxu0 0.0
  %772 = vmatprep.subr.mxu0 0.0
  %773 = vmatpush1.xpose.msra.mxu0 0.0
  %774 = vmatprep.subr.mxu0 0.0
  %775 = vmatpush1.xpose.msra.mxu0 0.0
  %776 = vmatprep.subr.mxu0 0.0
  %777 = vmatpush1.xpose.msra.mxu0 0.0
  %778 = vmatprep.subr.mxu0 0.0
  %779 = vmatpush1.xpose.msra.mxu0 0.0
  %780 = vmatprep.subr.mxu0 0.0
  %781 = vmatpush1.xpose.msra.mxu0 0.0
  %782 = vmatprep.subr.mxu0 0.0
  %783 = vmatpush1.xpose.msra.mxu0 0.0
  %784 = vmatprep.subr.mxu0 0.0
  %785 = vmatpush1.xpose.msra.mxu0 0.0
  %786 = vmatprep.subr.mxu0 0.0
  %787 = vmatpush1.xpose.msra.mxu0 0.0
  %788 = vmatprep.subr.mxu0 0.0
  %789 = vmatpush1.xpose.msra.mxu0 0.0
  %790 = vmatprep.subr.mxu0 0.0
  %791 = vmatpush1.xpose.msra.mxu0 0.0
  %792 = vmatprep.subr.mxu0 0.0
  %793 = vmatpush1.xpose.msra.mxu0 0.0
  %794 = vmatprep.subr.mxu0 0.0
  %795 = vmatpush1.xpose.msra.mxu0 0.0
  %796 = vmatprep.subr.mxu0 0.0
  %797 = vmatpush1.xpose.msra.mxu0 0.0
  %798 = vmatprep.subr.mxu0 0.0
  %799 = vmatpush1.xpose.msra.mxu0 0.0
  %800 = vmatprep.subr.mxu0 0.0
  %801 = vmatpush1.xpose.msra.mxu0 0.0
  %802 = vmatprep.subr.mxu0 0.0
  %803 = vmatpush1.xpose.msra.mxu0 0.0
  %804 = vmatprep.subr.mxu0 0.0
  %805 = vmatpush1.xpose.msra.mxu0 0.0
  %806 = vmatprep.subr.mxu0 0.0
  %807 = vmatpush1.xpose.msra.mxu0 0.0
  %808 = vmatprep.subr.mxu0 0.0
  %809 = vmatpush1.xpose.msra.mxu0 0.0
  %810 = vmatprep.subr.mxu0 0.0
  %811 = vmatpush1.xpose.msra.mxu0 0.0
  %812 = vmatprep.subr.mxu0 0.0
  %813 = vmatpush1.xpose.msra.mxu0 0.0
  %814 = vmatprep.subr.mxu0 0.0
  %815 = vmatpush1.xpose.msra.mxu0 0.0
  %816 = vmatprep.mubr.f32.mxu0 0.0
  %817 = vmatmul.mubr.f32.gmra.mrb[0].mxu0 %v747
  %v818 = vpop.f32.mrb[0].mxu0
  %v819 = vadd.f32 0.0, %v818
  %v820 = vpop.f32.mrb[0].mxu0
  %821 = vdwg.mxu0
  %v823 = vsel %vm129, %v715, 0
  %825 = vmatprep.subr.mxu0 0.0
  %826 = vmatpush1.xpose.msra.mxu0 %v823
  %827 = vmatprep.subr.mxu0 0.0
  %828 = vmatpush1.xpose.msra.mxu0 0.0
  %829 = vmatprep.subr.mxu0 0.0
  %830 = vmatpush1.xpose.msra.mxu0 0.0
  %831 = vmatprep.subr.mxu0 0.0
  %832 = vmatpush1.xpose.msra.mxu0 0.0
  %833 = vmatprep.subr.mxu0 0.0
  %834 = vmatpush1.xpose.msra.mxu0 0.0
  %835 = vmatprep.subr.mxu0 0.0
  %836 = vmatpush1.xpose.msra.mxu0 0.0
  %837 = vmatprep.subr.mxu0 0.0
  %838 = vmatpush1.xpose.msra.mxu0 0.0
  %839 = vmatprep.subr.mxu0 0.0
  %840 = vmatpush1.xpose.msra.mxu0 0.0
  %841 = vmatprep.subr.mxu0 0.0
  %842 = vmatpush1.xpose.msra.mxu0 0.0
  %843 = vmatprep.subr.mxu0 0.0
  %844 = vmatpush1.xpose.msra.mxu0 0.0
  %845 = vmatprep.subr.mxu0 0.0
  %846 = vmatpush1.xpose.msra.mxu0 0.0
  %847 = vmatprep.subr.mxu0 0.0
  %848 = vmatpush1.xpose.msra.mxu0 0.0
  %849 = vmatprep.subr.mxu0 0.0
  %850 = vmatpush1.xpose.msra.mxu0 0.0
  %851 = vmatprep.subr.mxu0 0.0
  %852 = vmatpush1.xpose.msra.mxu0 0.0
  %853 = vmatprep.subr.mxu0 0.0
  %854 = vmatpush1.xpose.msra.mxu0 0.0
  %855 = vmatprep.subr.mxu0 0.0
  %856 = vmatpush1.xpose.msra.mxu0 0.0
  %857 = vmatprep.subr.mxu0 0.0
  %858 = vmatpush1.xpose.msra.mxu0 0.0
  %859 = vmatprep.subr.mxu0 0.0
  %860 = vmatpush1.xpose.msra.mxu0 0.0
  %861 = vmatprep.subr.mxu0 0.0
  %862 = vmatpush1.xpose.msra.mxu0 0.0
  %863 = vmatprep.subr.mxu0 0.0
  %864 = vmatpush1.xpose.msra.mxu0 0.0
  %865 = vmatprep.subr.mxu0 0.0
  %866 = vmatpush1.xpose.msra.mxu0 0.0
  %867 = vmatprep.subr.mxu0 0.0
  %868 = vmatpush1.xpose.msra.mxu0 0.0
  %869 = vmatprep.subr.mxu0 0.0
  %870 = vmatpush1.xpose.msra.mxu0 0.0
  %871 = vmatprep.subr.mxu0 0.0
  %872 = vmatpush1.xpose.msra.mxu0 0.0
  %873 = vmatprep.subr.mxu0 0.0
  %874 = vmatpush1.xpose.msra.mxu0 0.0
  %875 = vmatprep.subr.mxu0 0.0
  %876 = vmatpush1.xpose.msra.mxu0 0.0
  %877 = vmatprep.subr.mxu0 0.0
  %878 = vmatpush1.xpose.msra.mxu0 0.0
  %879 = vmatprep.subr.mxu0 0.0
  %880 = vmatpush1.xpose.msra.mxu0 0.0
  %881 = vmatprep.subr.mxu0 0.0
  %882 = vmatpush1.xpose.msra.mxu0 0.0
  %883 = vmatprep.subr.mxu0 0.0
  %884 = vmatpush1.xpose.msra.mxu0 0.0
  %885 = vmatprep.subr.mxu0 0.0
  %886 = vmatpush1.xpose.msra.mxu0 0.0
  %887 = vmatprep.subr.mxu0 0.0
  %888 = vmatpush1.xpose.msra.mxu0 0.0
  %889 = vmatprep.mubr.f32.mxu0 0.0
  %890 = vmatmul.mubr.f32.gmra.mrb[0].mxu0 %v747
  %v891 = vpop.f32.mrb[0].mxu0
  %v892 = vadd.f32 0.0, %v891
  %v893 = vpop.f32.mrb[0].mxu0
  %894 = vdwg.mxu0
  %v896 = vsel %vm129, %v716, 0
  %898 = vmatprep.subr.mxu0 0.0
  %899 = vmatpush1.xpose.msra.mxu0 %v896
  %900 = vmatprep.subr.mxu0 0.0
  %901 = vmatpush1.xpose.msra.mxu0 0.0
  %902 = vmatprep.subr.mxu0 0.0
  %903 = vmatpush1.xpose.msra.mxu0 0.0
  %904 = vmatprep.subr.mxu0 0.0
  %905 = vmatpush1.xpose.msra.mxu0 0.0
  %906 = vmatprep.subr.mxu0 0.0
  %907 = vmatpush1.xpose.msra.mxu0 0.0
  %908 = vmatprep.subr.mxu0 0.0
  %909 = vmatpush1.xpose.msra.mxu0 0.0
  %910 = vmatprep.subr.mxu0 0.0
  %911 = vmatpush1.xpose.msra.mxu0 0.0
  %912 = vmatprep.subr.mxu0 0.0
  %913 = vmatpush1.xpose.msra.mxu0 0.0
  %914 = vmatprep.subr.mxu0 0.0
  %915 = vmatpush1.xpose.msra.mxu0 0.0
  %916 = vmatprep.subr.mxu0 0.0
  %917 = vmatpush1.xpose.msra.mxu0 0.0
  %918 = vmatprep.subr.mxu0 0.0
  %919 = vmatpush1.xpose.msra.mxu0 0.0
  %920 = vmatprep.subr.mxu0 0.0
  %921 = vmatpush1.xpose.msra.mxu0 0.0
  %922 = vmatprep.subr.mxu0 0.0
  %923 = vmatpush1.xpose.msra.mxu0 0.0
  %924 = vmatprep.subr.mxu0 0.0
  %925 = vmatpush1.xpose.msra.mxu0 0.0
  %926 = vmatprep.subr.mxu0 0.0
  %927 = vmatpush1.xpose.msra.mxu0 0.0
  %928 = vmatprep.subr.mxu0 0.0
  %929 = vmatpush1.xpose.msra.mxu0 0.0
  %930 = vmatprep.subr.mxu0 0.0
  %931 = vmatpush1.xpose.msra.mxu0 0.0
  %932 = vmatprep.subr.mxu0 0.0
  %933 = vmatpush1.xpose.msra.mxu0 0.0
  %934 = vmatprep.subr.mxu0 0.0
  %935 = vmatpush1.xpose.msra.mxu0 0.0
  %936 = vmatprep.subr.mxu0 0.0
  %937 = vmatpush1.xpose.msra.mxu0 0.0
  %938 = vmatprep.subr.mxu0 0.0
  %939 = vmatpush1.xpose.msra.mxu0 0.0
  %940 = vmatprep.subr.mxu0 0.0
  %941 = vmatpush1.xpose.msra.mxu0 0.0
  %942 = vmatprep.subr.mxu0 0.0
  %943 = vmatpush1.xpose.msra.mxu0 0.0
  %944 = vmatprep.subr.mxu0 0.0
  %945 = vmatpush1.xpose.msra.mxu0 0.0
  %946 = vmatprep.subr.mxu0 0.0
  %947 = vmatpush1.xpose.msra.mxu0 0.0
  %948 = vmatprep.subr.mxu0 0.0
  %949 = vmatpush1.xpose.msra.mxu0 0.0
  %950 = vmatprep.subr.mxu0 0.0
  %951 = vmatpush1.xpose.msra.mxu0 0.0
  %952 = vmatprep.subr.mxu0 0.0
  %953 = vmatpush1.xpose.msra.mxu0 0.0
  %954 = vmatprep.subr.mxu0 0.0
  %955 = vmatpush1.xpose.msra.mxu0 0.0
  %956 = vmatprep.subr.mxu0 0.0
  %957 = vmatpush1.xpose.msra.mxu0 0.0
  %958 = vmatprep.subr.mxu0 0.0
  %959 = vmatpush1.xpose.msra.mxu0 0.0
  %960 = vmatprep.subr.mxu0 0.0
  %961 = vmatpush1.xpose.msra.mxu0 0.0
  %962 = vmatprep.mubr.f32.mxu0 0.0
  %963 = vmatmul.mubr.f32.gmra.mrb[0].mxu0 %v747
  %v964 = vpop.f32.mrb[0].mxu0
  %v965 = vadd.f32 0.0, %v964
  %v966 = vpop.f32.mrb[0].mxu0
  %967 = vdwg.mxu0
  %v969 = vsel %vm129, %v717, 0
  %971 = vmatprep.subr.mxu0 0.0
  %972 = vmatpush1.xpose.msra.mxu0 %v969
  %973 = vmatprep.subr.mxu0 0.0
  %974 = vmatpush1.xpose.msra.mxu0 0.0
  %975 = vmatprep.subr.mxu0 0.0
  %976 = vmatpush1.xpose.msra.mxu0 0.0
  %977 = vmatprep.subr.mxu0 0.0
  %978 = vmatpush1.xpose.msra.mxu0 0.0
  %979 = vmatprep.subr.mxu0 0.0
  %980 = vmatpush1.xpose.msra.mxu0 0.0
  %981 = vmatprep.subr.mxu0 0.0
  %982 = vmatpush1.xpose.msra.mxu0 0.0
  %983 = vmatprep.subr.mxu0 0.0
  %984 = vmatpush1.xpose.msra.mxu0 0.0
  %985 = vmatprep.subr.mxu0 0.0
  %986 = vmatpush1.xpose.msra.mxu0 0.0
  %987 = vmatprep.subr.mxu0 0.0
  %988 = vmatpush1.xpose.msra.mxu0 0.0
  %989 = vmatprep.subr.mxu0 0.0
  %990 = vmatpush1.xpose.msra.mxu0 0.0
  %991 = vmatprep.subr.mxu0 0.0
  %992 = vmatpush1.xpose.msra.mxu0 0.0
  %993 = vmatprep.subr.mxu0 0.0
  %994 = vmatpush1.xpose.msra.mxu0 0.0
  %995 = vmatprep.subr.mxu0 0.0
  %996 = vmatpush1.xpose.msra.mxu0 0.0
  %997 = vmatprep.subr.mxu0 0.0
  %998 = vmatpush1.xpose.msra.mxu0 0.0
  %999 = vmatprep.subr.mxu0 0.0
  %1000 = vmatpush1.xpose.msra.mxu0 0.0
  %1001 = vmatprep.subr.mxu0 0.0
  %1002 = vmatpush1.xpose.msra.mxu0 0.0
  %1003 = vmatprep.subr.mxu0 0.0
  %1004 = vmatpush1.xpose.msra.mxu0 0.0
  %1005 = vmatprep.subr.mxu0 0.0
  %1006 = vmatpush1.xpose.msra.mxu0 0.0
  %1007 = vmatprep.subr.mxu0 0.0
  %1008 = vmatpush1.xpose.msra.mxu0 0.0
  %1009 = vmatprep.subr.mxu0 0.0
  %1010 = vmatpush1.xpose.msra.mxu0 0.0
  %1011 = vmatprep.subr.mxu0 0.0
  %1012 = vmatpush1.xpose.msra.mxu0 0.0
  %1013 = vmatprep.subr.mxu0 0.0
  %1014 = vmatpush1.xpose.msra.mxu0 0.0
  %1015 = vmatprep.subr.mxu0 0.0
  %1016 = vmatpush1.xpose.msra.mxu0 0.0
  %1017 = vmatprep.subr.mxu0 0.0
  %1018 = vmatpush1.xpose.msra.mxu0 0.0
  %1019 = vmatprep.subr.mxu0 0.0
  %1020 = vmatpush1.xpose.msra.mxu0 0.0
  %1021 = vmatprep.subr.mxu0 0.0
  %1022 = vmatpush1.xpose.msra.mxu0 0.0
  %1023 = vmatprep.subr.mxu0 0.0
  %1024 = vmatpush1.xpose.msra.mxu0 0.0
  %1025 = vmatprep.subr.mxu0 0.0
  %1026 = vmatpush1.xpose.msra.mxu0 0.0
  %1027 = vmatprep.subr.mxu0 0.0
  %1028 = vmatpush1.xpose.msra.mxu0 0.0
  %1029 = vmatprep.subr.mxu0 0.0
  %1030 = vmatpush1.xpose.msra.mxu0 0.0
  %1031 = vmatprep.subr.mxu0 0.0
  %1032 = vmatpush1.xpose.msra.mxu0 0.0
  %1033 = vmatprep.subr.mxu0 0.0
  %1034 = vmatpush1.xpose.msra.mxu0 0.0
  %1035 = vmatprep.mubr.f32.mxu0 0.0
  %1036 = vmatmul.mubr.f32.gmra.mrb[0].mxu0 %v747
  %v1037 = vpop.f32.mrb[0].mxu0
  %v1038 = vadd.f32 0.0, %v1037
  %v1039 = vpop.f32.mrb[0].mxu0
  %1040 = vdwg.mxu0
  %v1042 = vsel %vm129, %v718, 0
  %1044 = vmatprep.subr.mxu0 0.0
  %1045 = vmatpush1.xpose.msra.mxu0 %v1042
  %1046 = vmatprep.subr.mxu0 0.0
  %1047 = vmatpush1.xpose.msra.mxu0 0.0
  %1048 = vmatprep.subr.mxu0 0.0
  %1049 = vmatpush1.xpose.msra.mxu0 0.0
  %1050 = vmatprep.subr.mxu0 0.0
  %1051 = vmatpush1.xpose.msra.mxu0 0.0
  %1052 = vmatprep.subr.mxu0 0.0
  %1053 = vmatpush1.xpose.msra.mxu0 0.0
  %1054 = vmatprep.subr.mxu0 0.0
  %1055 = vmatpush1.xpose.msra.mxu0 0.0
  %1056 = vmatprep.subr.mxu0 0.0
  %1057 = vmatpush1.xpose.msra.mxu0 0.0
  %1058 = vmatprep.subr.mxu0 0.0
  %1059 = vmatpush1.xpose.msra.mxu0 0.0
  %1060 = vmatprep.subr.mxu0 0.0
  %1061 = vmatpush1.xpose.msra.mxu0 0.0
  %1062 = vmatprep.subr.mxu0 0.0
  %1063 = vmatpush1.xpose.msra.mxu0 0.0
  %1064 = vmatprep.subr.mxu0 0.0
  %1065 = vmatpush1.xpose.msra.mxu0 0.0
  %1066 = vmatprep.subr.mxu0 0.0
  %1067 = vmatpush1.xpose.msra.mxu0 0.0
  %1068 = vmatprep.subr.mxu0 0.0
  %1069 = vmatpush1.xpose.msra.mxu0 0.0
  %1070 = vmatprep.subr.mxu0 0.0
  %1071 = vmatpush1.xpose.msra.mxu0 0.0
  %1072 = vmatprep.subr.mxu0 0.0
  %1073 = vmatpush1.xpose.msra.mxu0 0.0
  %1074 = vmatprep.subr.mxu0 0.0
  %1075 = vmatpush1.xpose.msra.mxu0 0.0
  %1076 = vmatprep.subr.mxu0 0.0
  %1077 = vmatpush1.xpose.msra.mxu0 0.0
  %1078 = vmatprep.subr.mxu0 0.0
  %1079 = vmatpush1.xpose.msra.mxu0 0.0
  %1080 = vmatprep.subr.mxu0 0.0
  %1081 = vmatpush1.xpose.msra.mxu0 0.0
  %1082 = vmatprep.subr.mxu0 0.0
  %1083 = vmatpush1.xpose.msra.mxu0 0.0
  %1084 = vmatprep.subr.mxu0 0.0
  %1085 = vmatpush1.xpose.msra.mxu0 0.0
  %1086 = vmatprep.subr.mxu0 0.0
  %1087 = vmatpush1.xpose.msra.mxu0 0.0
  %1088 = vmatprep.subr.mxu0 0.0
  %1089 = vmatpush1.xpose.msra.mxu0 0.0
  %1090 = vmatprep.subr.mxu0 0.0
  %1091 = vmatpush1.xpose.msra.mxu0 0.0
  %1092 = vmatprep.subr.mxu0 0.0
  %1093 = vmatpush1.xpose.msra.mxu0 0.0
  %1094 = vmatprep.subr.mxu0 0.0
  %1095 = vmatpush1.xpose.msra.mxu0 0.0
  %1096 = vmatprep.subr.mxu0 0.0
  %1097 = vmatpush1.xpose.msra.mxu0 0.0
  %1098 = vmatprep.subr.mxu0 0.0
  %1099 = vmatpush1.xpose.msra.mxu0 0.0
  %1100 = vmatprep.subr.mxu0 0.0
  %1101 = vmatpush1.xpose.msra.mxu0 0.0
  %1102 = vmatprep.subr.mxu0 0.0
  %1103 = vmatpush1.xpose.msra.mxu0 0.0
  %1104 = vmatprep.subr.mxu0 0.0
  %1105 = vmatpush1.xpose.msra.mxu0 0.0
  %1106 = vmatprep.subr.mxu0 0.0
  %1107 = vmatpush1.xpose.msra.mxu0 0.0
  %1108 = vmatprep.mubr.f32.mxu0 0.0
  %1109 = vmatmul.mubr.f32.gmra.mrb[0].mxu0 %v747
  %v1110 = vpop.f32.mrb[0].mxu0
  %v1111 = vadd.f32 0.0, %v1110
  %v1112 = vpop.f32.mrb[0].mxu0
  %1113 = vdwg.mxu0
  %v1115 = vsel %vm129, %v719, 0
  %1117 = vmatprep.subr.mxu0 0.0
  %1118 = vmatpush1.xpose.msra.mxu0 %v1115
  %1119 = vmatprep.subr.mxu0 0.0
  %1120 = vmatpush1.xpose.msra.mxu0 0.0
  %1121 = vmatprep.subr.mxu0 0.0
  %1122 = vmatpush1.xpose.msra.mxu0 0.0
  %1123 = vmatprep.subr.mxu0 0.0
  %1124 = vmatpush1.xpose.msra.mxu0 0.0
  %1125 = vmatprep.subr.mxu0 0.0
  %1126 = vmatpush1.xpose.msra.mxu0 0.0
  %1127 = vmatprep.subr.mxu0 0.0
  %1128 = vmatpush1.xpose.msra.mxu0 0.0
  %1129 = vmatprep.subr.mxu0 0.0
  %1130 = vmatpush1.xpose.msra.mxu0 0.0
  %1131 = vmatprep.subr.mxu0 0.0
  %1132 = vmatpush1.xpose.msra.mxu0 0.0
  %1133 = vmatprep.subr.mxu0 0.0
  %1134 = vmatpush1.xpose.msra.mxu0 0.0
  %1135 = vmatprep.subr.mxu0 0.0
  %1136 = vmatpush1.xpose.msra.mxu0 0.0
  %1137 = vmatprep.subr.mxu0 0.0
  %1138 = vmatpush1.xpose.msra.mxu0 0.0
  %1139 = vmatprep.subr.mxu0 0.0
  %1140 = vmatpush1.xpose.msra.mxu0 0.0
  %1141 = vmatprep.subr.mxu0 0.0
  %1142 = vmatpush1.xpose.msra.mxu0 0.0
  %1143 = vmatprep.subr.mxu0 0.0
  %1144 = vmatpush1.xpose.msra.mxu0 0.0
  %1145 = vmatprep.subr.mxu0 0.0
  %1146 = vmatpush1.xpose.msra.mxu0 0.0
  %1147 = vmatprep.subr.mxu0 0.0
  %1148 = vmatpush1.xpose.msra.mxu0 0.0
  %1149 = vmatprep.subr.mxu0 0.0
  %1150 = vmatpush1.xpose.msra.mxu0 0.0
  %1151 = vmatprep.subr.mxu0 0.0
  %1152 = vmatpush1.xpose.msra.mxu0 0.0
  %1153 = vmatprep.subr.mxu0 0.0
  %1154 = vmatpush1.xpose.msra.mxu0 0.0
  %1155 = vmatprep.subr.mxu0 0.0
  %1156 = vmatpush1.xpose.msra.mxu0 0.0
  %1157 = vmatprep.subr.mxu0 0.0
  %1158 = vmatpush1.xpose.msra.mxu0 0.0
  %1159 = vmatprep.subr.mxu0 0.0
  %1160 = vmatpush1.xpose.msra.mxu0 0.0
  %1161 = vmatprep.subr.mxu0 0.0
  %1162 = vmatpush1.xpose.msra.mxu0 0.0
  %1163 = vmatprep.subr.mxu0 0.0
  %1164 = vmatpush1.xpose.msra.mxu0 0.0
  %1165 = vmatprep.subr.mxu0 0.0
  %1166 = vmatpush1.xpose.msra.mxu0 0.0
  %1167 = vmatprep.subr.mxu0 0.0
  %1168 = vmatpush1.xpose.msra.mxu0 0.0
  %1169 = vmatprep.subr.mxu0 0.0
  %1170 = vmatpush1.xpose.msra.mxu0 0.0
  %1171 = vmatprep.subr.mxu0 0.0
  %1172 = vmatpush1.xpose.msra.mxu0 0.0
  %1173 = vmatprep.subr.mxu0 0.0
  %1174 = vmatpush1.xpose.msra.mxu0 0.0
  %1175 = vmatprep.subr.mxu0 0.0
  %1176 = vmatpush1.xpose.msra.mxu0 0.0
  %1177 = vmatprep.subr.mxu0 0.0
  %1178 = vmatpush1.xpose.msra.mxu0 0.0
  %1179 = vmatprep.subr.mxu0 0.0
  %1180 = vmatpush1.xpose.msra.mxu0 0.0
  %1181 = vmatprep.mubr.f32.mxu0 0.0
  %1182 = vmatmul.mubr.f32.gmra.mrb[0].mxu0 %v747
  %v1183 = vpop.f32.mrb[0].mxu0
  %v1184 = vadd.f32 0.0, %v1183
  %v1185 = vpop.f32.mrb[0].mxu0
  %1186 = vdwg.mxu0
  %v1188 = vsel %vm129, %v720, 0
  %1190 = vmatprep.subr.mxu0 0.0
  %1191 = vmatpush1.xpose.msra.mxu0 %v1188
  %1192 = vmatprep.subr.mxu0 0.0
  %1193 = vmatpush1.xpose.msra.mxu0 0.0
  %1194 = vmatprep.subr.mxu0 0.0
  %1195 = vmatpush1.xpose.msra.mxu0 0.0
  %1196 = vmatprep.subr.mxu0 0.0
  %1197 = vmatpush1.xpose.msra.mxu0 0.0
  %1198 = vmatprep.subr.mxu0 0.0
  %1199 = vmatpush1.xpose.msra.mxu0 0.0
  %1200 = vmatprep.subr.mxu0 0.0
  %1201 = vmatpush1.xpose.msra.mxu0 0.0
  %1202 = vmatprep.subr.mxu0 0.0
  %1203 = vmatpush1.xpose.msra.mxu0 0.0
  %1204 = vmatprep.subr.mxu0 0.0
  %1205 = vmatpush1.xpose.msra.mxu0 0.0
  %1206 = vmatprep.subr.mxu0 0.0
  %1207 = vmatpush1.xpose.msra.mxu0 0.0
  %1208 = vmatprep.subr.mxu0 0.0
  %1209 = vmatpush1.xpose.msra.mxu0 0.0
  %1210 = vmatprep.subr.mxu0 0.0
  %1211 = vmatpush1.xpose.msra.mxu0 0.0
  %1212 = vmatprep.subr.mxu0 0.0
  %1213 = vmatpush1.xpose.msra.mxu0 0.0
  %1214 = vmatprep.subr.mxu0 0.0
  %1215 = vmatpush1.xpose.msra.mxu0 0.0
  %1216 = vmatprep.subr.mxu0 0.0
  %1217 = vmatpush1.xpose.msra.mxu0 0.0
  %1218 = vmatprep.subr.mxu0 0.0
  %1219 = vmatpush1.xpose.msra.mxu0 0.0
  %1220 = vmatprep.subr.mxu0 0.0
  %1221 = vmatpush1.xpose.msra.mxu0 0.0
  %1222 = vmatprep.subr.mxu0 0.0
  %1223 = vmatpush1.xpose.msra.mxu0 0.0
  %1224 = vmatprep.subr.mxu0 0.0
  %1225 = vmatpush1.xpose.msra.mxu0 0.0
  %1226 = vmatprep.subr.mxu0 0.0
  %1227 = vmatpush1.xpose.msra.mxu0 0.0
  %1228 = vmatprep.subr.mxu0 0.0
  %1229 = vmatpush1.xpose.msra.mxu0 0.0
  %1230 = vmatprep.subr.mxu0 0.0
  %1231 = vmatpush1.xpose.msra.mxu0 0.0
  %1232 = vmatprep.subr.mxu0 0.0
  %1233 = vmatpush1.xpose.msra.mxu0 0.0
  %1234 = vmatprep.subr.mxu0 0.0
  %1235 = vmatpush1.xpose.msra.mxu0 0.0
  %1236 = vmatprep.subr.mxu0 0.0
  %1237 = vmatpush1.xpose.msra.mxu0 0.0
  %1238 = vmatprep.subr.mxu0 0.0
  %1239 = vmatpush1.xpose.msra.mxu0 0.0
  %1240 = vmatprep.subr.mxu0 0.0
  %1241 = vmatpush1.xpose.msra.mxu0 0.0
  %1242 = vmatprep.subr.mxu0 0.0
  %1243 = vmatpush1.xpose.msra.mxu0 0.0
  %1244 = vmatprep.subr.mxu0 0.0
  %1245 = vmatpush1.xpose.msra.mxu0 0.0
  %1246 = vmatprep.subr.mxu0 0.0
  %1247 = vmatpush1.xpose.msra.mxu0 0.0
  %1248 = vmatprep.subr.mxu0 0.0
  %1249 = vmatpush1.xpose.msra.mxu0 0.0
  %1250 = vmatprep.subr.mxu0 0.0
  %1251 = vmatpush1.xpose.msra.mxu0 0.0
  %1252 = vmatprep.subr.mxu0 0.0
  %1253 = vmatpush1.xpose.msra.mxu0 0.0
  %1254 = vmatprep.mubr.f32.mxu0 0.0
  %1255 = vmatmul.mubr.f32.gmra.mrb[0].mxu0 %v747
  %v1256 = vpop.f32.mrb[0].mxu0
  %v1257 = vadd.f32 0.0, %v1256
  %v1258 = vpop.f32.mrb[0].mxu0
  %1259 = vdwg.mxu0
  %v1261 = vsel %vm129, %v721, 0
  %1263 = vmatprep.subr.mxu0 0.0
  %1264 = vmatpush1.xpose.msra.mxu0 %v1261
  %1265 = vmatprep.subr.mxu0 0.0
  %1266 = vmatpush1.xpose.msra.mxu0 0.0
  %1267 = vmatprep.subr.mxu0 0.0
  %1268 = vmatpush1.xpose.msra.mxu0 0.0
  %1269 = vmatprep.subr.mxu0 0.0
  %1270 = vmatpush1.xpose.msra.mxu0 0.0
  %1271 = vmatprep.subr.mxu0 0.0
  %1272 = vmatpush1.xpose.msra.mxu0 0.0
  %1273 = vmatprep.subr.mxu0 0.0
  %1274 = vmatpush1.xpose.msra.mxu0 0.0
  %1275 = vmatprep.subr.mxu0 0.0
  %1276 = vmatpush1.xpose.msra.mxu0 0.0
  %1277 = vmatprep.subr.mxu0 0.0
  %1278 = vmatpush1.xpose.msra.mxu0 0.0
  %1279 = vmatprep.subr.mxu0 0.0
  %1280 = vmatpush1.xpose.msra.mxu0 0.0
  %1281 = vmatprep.subr.mxu0 0.0
  %1282 = vmatpush1.xpose.msra.mxu0 0.0
  %1283 = vmatprep.subr.mxu0 0.0
  %1284 = vmatpush1.xpose.msra.mxu0 0.0
  %1285 = vmatprep.subr.mxu0 0.0
  %1286 = vmatpush1.xpose.msra.mxu0 0.0
  %1287 = vmatprep.subr.mxu0 0.0
  %1288 = vmatpush1.xpose.msra.mxu0 0.0
  %1289 = vmatprep.subr.mxu0 0.0
  %1290 = vmatpush1.xpose.msra.mxu0 0.0
  %1291 = vmatprep.subr.mxu0 0.0
  %1292 = vmatpush1.xpose.msra.mxu0 0.0
  %1293 = vmatprep.subr.mxu0 0.0
  %1294 = vmatpush1.xpose.msra.mxu0 0.0
  %1295 = vmatprep.subr.mxu0 0.0
  %1296 = vmatpush1.xpose.msra.mxu0 0.0
  %1297 = vmatprep.subr.mxu0 0.0
  %1298 = vmatpush1.xpose.msra.mxu0 0.0
  %1299 = vmatprep.subr.mxu0 0.0
  %1300 = vmatpush1.xpose.msra.mxu0 0.0
  %1301 = vmatprep.subr.mxu0 0.0
  %1302 = vmatpush1.xpose.msra.mxu0 0.0
  %1303 = vmatprep.subr.mxu0 0.0
  %1304 = vmatpush1.xpose.msra.mxu0 0.0
  %1305 = vmatprep.subr.mxu0 0.0
  %1306 = vmatpush1.xpose.msra.mxu0 0.0
  %1307 = vmatprep.subr.mxu0 0.0
  %1308 = vmatpush1.xpose.msra.mxu0 0.0
  %1309 = vmatprep.subr.mxu0 0.0
  %1310 = vmatpush1.xpose.msra.mxu0 0.0
  %1311 = vmatprep.subr.mxu0 0.0
  %1312 = vmatpush1.xpose.msra.mxu0 0.0
  %1313 = vmatprep.subr.mxu0 0.0
  %1314 = vmatpush1.xpose.msra.mxu0 0.0
  %1315 = vmatprep.subr.mxu0 0.0
  %1316 = vmatpush1.xpose.msra.mxu0 0.0
  %1317 = vmatprep.subr.mxu0 0.0
  %1318 = vmatpush1.xpose.msra.mxu0 0.0
  %1319 = vmatprep.subr.mxu0 0.0
  %1320 = vmatpush1.xpose.msra.mxu0 0.0
  %1321 = vmatprep.subr.mxu0 0.0
  %1322 = vmatpush1.xpose.msra.mxu0 0.0
  %1323 = vmatprep.subr.mxu0 0.0
  %1324 = vmatpush1.xpose.msra.mxu0 0.0
  %1325 = vmatprep.subr.mxu0 0.0
  %1326 = vmatpush1.xpose.msra.mxu0 0.0
  %1327 = vmatprep.mubr.f32.mxu0 0.0
  %1328 = vmatmul.mubr.f32.gmra.mrb[0].mxu0 %v747
  %v1329 = vpop.f32.mrb[0].mxu0
  %v1330 = vadd.f32 0.0, %v1329
  %v1331 = vpop.f32.mrb[0].mxu0
  %1332 = vdwg.mxu0
  %v1333 = vlaneseq
  %v1334 = vshrl.u32 %v1333, 7
  %v1335 = vsub.s32 0, %v1334
  %v1336 = vrot.slane %v819, %v1335
  %v1337 = vlaneseq
  %v1338 = vshrl.u32 %v1337, 7
  %v1339 = vsub.s32 0, %v1338
  %v1340 = vrot.slane %v892, %v1339
  %v1341 = vlaneseq
  %v1342 = vshrl.u32 %v1341, 7
  %v1343 = vsub.s32 0, %v1342
  %v1344 = vrot.slane %v965, %v1343
  %v1345 = vlaneseq
  %v1346 = vshrl.u32 %v1345, 7
  %v1347 = vsub.s32 0, %v1346
  %v1348 = vrot.slane %v1038, %v1347
  %v1349 = vlaneseq
  %v1350 = vshrl.u32 %v1349, 7
  %v1351 = vsub.s32 0, %v1350
  %v1352 = vrot.slane %v1111, %v1351
  %v1353 = vlaneseq
  %v1354 = vshrl.u32 %v1353, 7
  %v1355 = vsub.s32 0, %v1354
  %v1356 = vrot.slane %v1184, %v1355
  %v1357 = vlaneseq
  %v1358 = vshrl.u32 %v1357, 7
  %v1359 = vsub.s32 0, %v1358
  %v1360 = vrot.slane %v1257, %v1359
  %v1361 = vlaneseq
  %v1362 = vshrl.u32 %v1361, 7
  %v1363 = vsub.s32 0, %v1362
  %v1364 = vrot.slane %v1330, %v1363
  %v1365 = vadd.f32 %v724, %v1336
  %v1366 = vadd.f32 %v727, %v1340
  %v1367 = vadd.f32 %v730, %v1344
  %v1368 = vadd.f32 %v733, %v1348
  %v1369 = vadd.f32 %v736, %v1352
  %v1370 = vadd.f32 %v739, %v1356
  %v1371 = vadd.f32 %v742, %v1360
  %v1372 = vadd.f32 %v745, %v1364
  %v1373 = vmul.f32 %v200, 2.0
  %v1374 = vmul.f32 %v273, 2.0
  %v1375 = vmul.f32 %v346, 2.0
  %v1376 = vmul.f32 %v419, 2.0
  %v1377 = vmul.f32 %v492, 2.0
  %v1378 = vmul.f32 %v565, 2.0
  %v1379 = vmul.f32 %v638, 2.0
  %v1380 = vmul.f32 %v711, 2.0
  %v1381 = vsub.f32 %v1365, %v1373
  %v1382 = vsub.f32 %v1366, %v1374
  %v1383 = vsub.f32 %v1367, %v1375
  %v1384 = vsub.f32 %v1368, %v1376
  %v1385 = vsub.f32 %v1369, %v1377
  %v1386 = vsub.f32 %v1370, %v1378
  %v1387 = vsub.f32 %v1371, %v1379
  %v1388 = vsub.f32 %v1372, %v1380
  %v1389 = vmax.f32 %v1381, 0.0
  %v1390 = vmax.f32 %v1382, 0.0
  %v1391 = vmax.f32 %v1383, 0.0
  %v1392 = vmax.f32 %v1384, 0.0
  %v1393 = vmax.f32 %v1385, 0.0
  %v1394 = vmax.f32 %v1386, 0.0
  %v1395 = vmax.f32 %v1387, 0.0
  %v1396 = vmax.f32 %v1388, 0.0
  %v1397 = vrsqrt.pop %v1389
  %v1398 = vmul.f32 %v1389, %v1397
  %vm1399 = vcmp.eq.f32.partialorder %v1389, inf
  %v1400 = vsel %vm1399, %v1389, %v1398
  %vm1401 = vcmp.eq.f32.partialorder %v1389, 0.0
  %v1402 = vand.u32 %v1389, 2147483648
  %v1403 = vsel %vm1401, %v1402, %v1400
  %v1404 = vrsqrt.pop %v1390
  %v1405 = vmul.f32 %v1390, %v1404
  %vm1406 = vcmp.eq.f32.partialorder %v1390, inf
  %v1407 = vsel %vm1406, %v1390, %v1405
  %vm1408 = vcmp.eq.f32.partialorder %v1390, 0.0
  %v1409 = vand.u32 %v1390, 2147483648
  %v1410 = vsel %vm1408, %v1409, %v1407
  %v1411 = vrsqrt.pop %v1391
  %v1412 = vmul.f32 %v1391, %v1411
  %vm1413 = vcmp.eq.f32.partialorder %v1391, inf
  %v1414 = vsel %vm1413, %v1391, %v1412
  %vm1415 = vcmp.eq.f32.partialorder %v1391, 0.0
  %v1416 = vand.u32 %v1391, 2147483648
  %v1417 = vsel %vm1415, %v1416, %v1414
  %v1418 = vrsqrt.pop %v1392
  %v1419 = vmul.f32 %v1392, %v1418
  %vm1420 = vcmp.eq.f32.partialorder %v1392, inf
  %v1421 = vsel %vm1420, %v1392, %v1419
  %vm1422 = vcmp.eq.f32.partialorder %v1392, 0.0
  %v1423 = vand.u32 %v1392, 2147483648
  %v1424 = vsel %vm1422, %v1423, %v1421
  %v1425 = vrsqrt.pop %v1393
  %v1426 = vmul.f32 %v1393, %v1425
  %vm1427 = vcmp.eq.f32.partialorder %v1393, inf
  %v1428 = vsel %vm1427, %v1393, %v1426
  %vm1429 = vcmp.eq.f32.partialorder %v1393, 0.0
  %v1430 = vand.u32 %v1393, 2147483648
  %v1431 = vsel %vm1429, %v1430, %v1428
  %v1432 = vrsqrt.pop %v1394
  %v1433 = vmul.f32 %v1394, %v1432
  %vm1434 = vcmp.eq.f32.partialorder %v1394, inf
  %v1435 = vsel %vm1434, %v1394, %v1433
  %vm1436 = vcmp.eq.f32.partialorder %v1394, 0.0
  %v1437 = vand.u32 %v1394, 2147483648
  %v1438 = vsel %vm1436, %v1437, %v1435
  %v1439 = vrsqrt.pop %v1395
  %v1440 = vmul.f32 %v1395, %v1439
  %vm1441 = vcmp.eq.f32.partialorder %v1395, inf
  %v1442 = vsel %vm1441, %v1395, %v1440
  %vm1443 = vcmp.eq.f32.partialorder %v1395, 0.0
  %v1444 = vand.u32 %v1395, 2147483648
  %v1445 = vsel %vm1443, %v1444, %v1442
  %v1446 = vrsqrt.pop %v1396
  %v1447 = vmul.f32 %v1396, %v1446
  %vm1448 = vcmp.eq.f32.partialorder %v1396, inf
  %v1449 = vsel %vm1448, %v1396, %v1447
  %vm1450 = vcmp.eq.f32.partialorder %v1396, 0.0
  %v1451 = vand.u32 %v1396, 2147483648
  %v1452 = vsel %vm1450, %v1451, %v1449
  %vm1453 = vcmask 64512
  %v1454 = vsel %vm1453, %v113, 0.0
  %1455 = vadd.xlane.f32.xlu0 %v1454
  %v1456 = vpop.xlane.xlu0 %1455
  %v1457 = vsel %vm1453, %v114, 0.0
  %1458 = vadd.xlane.f32.xlu0 %v1457
  %v1459 = vpop.xlane.xlu0 %1458
  %v1460 = vsel %vm1453, %v115, 0.0
  %1461 = vadd.xlane.f32.xlu0 %v1460
  %v1462 = vpop.xlane.xlu0 %1461
  %v1463 = vsel %vm1453, %v116, 0.0
  %1464 = vadd.xlane.f32.xlu0 %v1463
  %v1465 = vpop.xlane.xlu0 %1464
  %v1466 = vsel %vm1453, %v117, 0.0
  %1467 = vadd.xlane.f32.xlu0 %v1466
  %v1468 = vpop.xlane.xlu0 %1467
  %v1469 = vsel %vm1453, %v118, 0.0
  %1470 = vadd.xlane.f32.xlu0 %v1469
  %v1471 = vpop.xlane.xlu0 %1470
  %v1472 = vsel %vm1453, %v119, 0.0
  %1473 = vadd.xlane.f32.xlu0 %v1472
  %v1474 = vpop.xlane.xlu0 %1473
  %v1475 = vsel %vm1453, %v120, 0.0
  %1476 = vadd.xlane.f32.xlu0 %v1475
  %v1477 = vpop.xlane.xlu0 %1476
  %v1478 = vsel %vm1453, %v121, 0.0
  %1479 = vadd.xlane.f32.xlu0 %v1478
  %v1480 = vpop.xlane.xlu0 %1479
  %v1481 = vsel %vm1453, %v122, 0.0
  %1482 = vadd.xlane.f32.xlu0 %v1481
  %v1483 = vpop.xlane.xlu0 %1482
  %v1484 = vsel %vm1453, %v123, 0.0
  %1485 = vadd.xlane.f32.xlu0 %v1484
  %v1486 = vpop.xlane.xlu0 %1485
  %v1487 = vsel %vm1453, %v124, 0.0
  %1488 = vadd.xlane.f32.xlu0 %v1487
  %v1489 = vpop.xlane.xlu0 %1488
  %v1490 = vsel %vm1453, %v125, 0.0
  %1491 = vadd.xlane.f32.xlu0 %v1490
  %v1492 = vpop.xlane.xlu0 %1491
  %v1493 = vsel %vm1453, %v126, 0.0
  %1494 = vadd.xlane.f32.xlu0 %v1493
  %v1495 = vpop.xlane.xlu0 %1494
  %v1496 = vsel %vm1453, %v127, 0.0
  %1497 = vadd.xlane.f32.xlu0 %v1496
  %v1498 = vpop.xlane.xlu0 %1497
  %v1499 = vsel %vm1453, %v128, 0.0
  %1500 = vadd.xlane.f32.xlu0 %v1499
  %v1501 = vpop.xlane.xlu0 %1500
  %v1502 = vmul.f32 %v1456, %v1480
  %v1503 = vmul.f32 %v1459, %v1483
  %v1504 = vmul.f32 %v1462, %v1486
  %v1505 = vmul.f32 %v1465, %v1489
  %v1506 = vmul.f32 %v1468, %v1492
  %v1507 = vmul.f32 %v1471, %v1495
  %v1508 = vmul.f32 %v1474, %v1498
  %v1509 = vmul.f32 %v1477, %v1501
  %v1510 = vrot.slane %v1502, 4
  %v1511 = vadd.f32 %v1502, %v1510
  %v1512 = vrot.slane %v1511, 2
  %v1513 = vadd.f32 %v1511, %v1512
  %v1514 = vrot.slane %v1513, 1
  %v1515 = vadd.f32 %v1513, %v1514
  %v1516 = vrot.slane %v1503, 4
  %v1517 = vadd.f32 %v1503, %v1516
  %v1518 = vrot.slane %v1517, 2
  %v1519 = vadd.f32 %v1517, %v1518
  %v1520 = vrot.slane %v1519, 1
  %v1521 = vadd.f32 %v1519, %v1520
  %v1522 = vrot.slane %v1504, 4
  %v1523 = vadd.f32 %v1504, %v1522
  %v1524 = vrot.slane %v1523, 2
  %v1525 = vadd.f32 %v1523, %v1524
  %v1526 = vrot.slane %v1525, 1
  %v1527 = vadd.f32 %v1525, %v1526
  %v1528 = vrot.slane %v1505, 4
  %v1529 = vadd.f32 %v1505, %v1528
  %v1530 = vrot.slane %v1529, 2
  %v1531 = vadd.f32 %v1529, %v1530
  %v1532 = vrot.slane %v1531, 1
  %v1533 = vadd.f32 %v1531, %v1532
  %v1534 = vrot.slane %v1506, 4
  %v1535 = vadd.f32 %v1506, %v1534
  %v1536 = vrot.slane %v1535, 2
  %v1537 = vadd.f32 %v1535, %v1536
  %v1538 = vrot.slane %v1537, 1
  %v1539 = vadd.f32 %v1537, %v1538
  %v1540 = vrot.slane %v1507, 4
  %v1541 = vadd.f32 %v1507, %v1540
  %v1542 = vrot.slane %v1541, 2
  %v1543 = vadd.f32 %v1541, %v1542
  %v1544 = vrot.slane %v1543, 1
  %v1545 = vadd.f32 %v1543, %v1544
  %v1546 = vrot.slane %v1508, 4
  %v1547 = vadd.f32 %v1508, %v1546
  %v1548 = vrot.slane %v1547, 2
  %v1549 = vadd.f32 %v1547, %v1548
  %v1550 = vrot.slane %v1549, 1
  %v1551 = vadd.f32 %v1549, %v1550
  %v1552 = vrot.slane %v1509, 4
  %v1553 = vadd.f32 %v1509, %v1552
  %v1554 = vrot.slane %v1553, 2
  %v1555 = vadd.f32 %v1553, %v1554
  %v1556 = vrot.slane %v1555, 1
  %v1557 = vadd.f32 %v1555, %v1556
  %vm1558 = vcmask 0
  %1559 = vst.msk [vmem:[%s5] sm:$0x1] %vm1558, %v1515
  %1560 = vst.msk [vmem:[%s5 + $0x1] sm:$0x1] %vm1558, %v1521
  %1561 = vst.msk [vmem:[%s5 + $0x2] sm:$0x1] %vm1558, %v1527
  %1562 = vst.msk [vmem:[%s5 + $0x3] sm:$0x1] %vm1558, %v1533
  %1563 = vst.msk [vmem:[%s5 + $0x4] sm:$0x1] %vm1558, %v1539
  %1564 = vst.msk [vmem:[%s5 + $0x5] sm:$0x1] %vm1558, %v1545
  %1565 = vst.msk [vmem:[%s5 + $0x6] sm:$0x1] %vm1558, %v1551
  %1566 = vst.msk [vmem:[%s5 + $0x7] sm:$0x1] %vm1558, %v1557
  %v1567 = vlaneseq
  %v1568 = vand.u32 %v1567, 127
  %vm1569 = vcmp.eq.s32.totalorder %v1568, 0
  %v1570 = vsel %vm1569, 1, 0
  %v1571 = vcvt.s32.f32 %v1570
  %v1572 = vmul.f32 %v1403, %v1571
  %v1573 = vmul.f32 %v1410, %v1571
  %v1574 = vmul.f32 %v1417, %v1571
  %v1575 = vmul.f32 %v1424, %v1571
  %v1576 = vmul.f32 %v1431, %v1571
  %v1577 = vmul.f32 %v1438, %v1571
  %v1578 = vmul.f32 %v1445, %v1571
  %v1579 = vmul.f32 %v1452, %v1571
  %v1580 = vsel %vm1453, %v1572, 0.0
  %1581 = vadd.xlane.f32.xlu0 %v1580
  %v1582 = vpop.xlane.xlu0 %1581
  %v1583 = vsel %vm1453, %v1573, 0.0
  %1584 = vadd.xlane.f32.xlu0 %v1583
  %v1585 = vpop.xlane.xlu0 %1584
  %v1586 = vsel %vm1453, %v1574, 0.0
  %1587 = vadd.xlane.f32.xlu0 %v1586
  %v1588 = vpop.xlane.xlu0 %1587
  %v1589 = vsel %vm1453, %v1575, 0.0
  %1590 = vadd.xlane.f32.xlu0 %v1589
  %v1591 = vpop.xlane.xlu0 %1590
  %v1592 = vsel %vm1453, %v1576, 0.0
  %1593 = vadd.xlane.f32.xlu0 %v1592
  %v1594 = vpop.xlane.xlu0 %1593
  %v1595 = vsel %vm1453, %v1577, 0.0
  %1596 = vadd.xlane.f32.xlu0 %v1595
  %v1597 = vpop.xlane.xlu0 %1596
  %v1598 = vsel %vm1453, %v1578, 0.0
  %1599 = vadd.xlane.f32.xlu0 %v1598
  %v1600 = vpop.xlane.xlu0 %1599
  %v1601 = vsel %vm1453, %v1579, 0.0
  %1602 = vadd.xlane.f32.xlu0 %v1601
  %v1603 = vpop.xlane.xlu0 %1602
  %v1604 = vmul.f32 %v113, %v1571
  %v1605 = vmul.f32 %v114, %v1571
  %v1606 = vmul.f32 %v115, %v1571
  %v1607 = vmul.f32 %v116, %v1571
  %v1608 = vmul.f32 %v117, %v1571
  %v1609 = vmul.f32 %v118, %v1571
  %v1610 = vmul.f32 %v119, %v1571
  %v1611 = vmul.f32 %v120, %v1571
  %v1612 = vsel %vm1453, %v1604, 0.0
  %1613 = vadd.xlane.f32.xlu0 %v1612
  %v1614 = vpop.xlane.xlu0 %1613
  %v1615 = vsel %vm1453, %v1605, 0.0
  %1616 = vadd.xlane.f32.xlu0 %v1615
  %v1617 = vpop.xlane.xlu0 %1616
  %v1618 = vsel %vm1453, %v1606, 0.0
  %1619 = vadd.xlane.f32.xlu0 %v1618
  %v1620 = vpop.xlane.xlu0 %1619
  %v1621 = vsel %vm1453, %v1607, 0.0
  %1622 = vadd.xlane.f32.xlu0 %v1621
  %v1623 = vpop.xlane.xlu0 %1622
  %v1624 = vsel %vm1453, %v1608, 0.0
  %1625 = vadd.xlane.f32.xlu0 %v1624
  %v1626 = vpop.xlane.xlu0 %1625
  %v1627 = vsel %vm1453, %v1609, 0.0
  %1628 = vadd.xlane.f32.xlu0 %v1627
  %v1629 = vpop.xlane.xlu0 %1628
  %v1630 = vsel %vm1453, %v1610, 0.0
  %1631 = vadd.xlane.f32.xlu0 %v1630
  %v1632 = vpop.xlane.xlu0 %1631
  %v1633 = vsel %vm1453, %v1611, 0.0
  %1634 = vadd.xlane.f32.xlu0 %v1633
  %v1635 = vpop.xlane.xlu0 %1634
  %v1636 = vmul.f32 %v1614, %v121
  %v1637 = vmul.f32 %v1617, %v122
  %v1638 = vmul.f32 %v1620, %v123
  %v1639 = vmul.f32 %v1623, %v124
  %v1640 = vmul.f32 %v1626, %v125
  %v1641 = vmul.f32 %v1629, %v126
  %v1642 = vmul.f32 %v1632, %v127
  %v1643 = vmul.f32 %v1635, %v128
  %v1644 = vadd.f32 %v1582, 0.2
  %v1645 = vadd.f32 %v1585, 0.2
  %v1646 = vadd.f32 %v1588, 0.2
  %v1647 = vadd.f32 %v1591, 0.2
  %v1648 = vadd.f32 %v1594, 0.2
  %v1649 = vadd.f32 %v1597, 0.2
  %v1650 = vadd.f32 %v1600, 0.2
  %v1651 = vadd.f32 %v1603, 0.2
  %v1652 = vsub.f32 %v1644, %v1403
  %v1653 = vsub.f32 %v1645, %v1410
  %v1654 = vsub.f32 %v1646, %v1417
  %v1655 = vsub.f32 %v1647, %v1424
  %v1656 = vsub.f32 %v1648, %v1431
  %v1657 = vsub.f32 %v1649, %v1438
  %v1658 = vsub.f32 %v1650, %v1445
  %v1659 = vsub.f32 %v1651, %v1452
  %v1660 = vmax.f32 %v1652, 0.0
  %v1661 = vmax.f32 %v1653, 0.0
  %v1662 = vmax.f32 %v1654, 0.0
  %v1663 = vmax.f32 %v1655, 0.0
  %v1664 = vmax.f32 %v1656, 0.0
  %v1665 = vmax.f32 %v1657, 0.0
  %v1666 = vmax.f32 %v1658, 0.0
  %v1667 = vmax.f32 %v1659, 0.0
  %v1668 = vmul.f32 %v1660, %v1636
  %v1669 = vmul.f32 %v1661, %v1637
  %v1670 = vmul.f32 %v1662, %v1638
  %v1671 = vmul.f32 %v1663, %v1639
  %v1672 = vmul.f32 %v1664, %v1640
  %v1673 = vmul.f32 %v1665, %v1641
  %v1674 = vmul.f32 %v1666, %v1642
  %v1675 = vmul.f32 %v1667, %v1643
  %v1676 = vsel %vm1453, %v1668, 0.0
  %1677 = vadd.xlane.f32.xlu0 %v1676
  %v1678 = vpop.xlane.xlu0 %1677
  %v1679 = vsel %vm1453, %v1669, 0.0
  %1680 = vadd.xlane.f32.xlu0 %v1679
  %v1681 = vpop.xlane.xlu0 %1680
  %v1682 = vsel %vm1453, %v1670, 0.0
  %1683 = vadd.xlane.f32.xlu0 %v1682
  %v1684 = vpop.xlane.xlu0 %1683
  %v1685 = vsel %vm1453, %v1671, 0.0
  %1686 = vadd.xlane.f32.xlu0 %v1685
  %v1687 = vpop.xlane.xlu0 %1686
  %v1688 = vsel %vm1453, %v1672, 0.0
  %1689 = vadd.xlane.f32.xlu0 %v1688
  %v1690 = vpop.xlane.xlu0 %1689
  %v1691 = vsel %vm1453, %v1673, 0.0
  %1692 = vadd.xlane.f32.xlu0 %v1691
  %v1693 = vpop.xlane.xlu0 %1692
  %v1694 = vsel %vm1453, %v1674, 0.0
  %1695 = vadd.xlane.f32.xlu0 %v1694
  %v1696 = vpop.xlane.xlu0 %1695
  %v1697 = vsel %vm1453, %v1675, 0.0
  %1698 = vadd.xlane.f32.xlu0 %v1697
  %v1699 = vpop.xlane.xlu0 %1698
  %v1700 = vrot.slane %v1678, 4
  %v1701 = vadd.f32 %v1678, %v1700
  %v1702 = vrot.slane %v1701, 2
  %v1703 = vadd.f32 %v1701, %v1702
  %v1704 = vrot.slane %v1703, 1
  %v1705 = vadd.f32 %v1703, %v1704
  %v1706 = vrot.slane %v1681, 4
  %v1707 = vadd.f32 %v1681, %v1706
  %v1708 = vrot.slane %v1707, 2
  %v1709 = vadd.f32 %v1707, %v1708
  %v1710 = vrot.slane %v1709, 1
  %v1711 = vadd.f32 %v1709, %v1710
  %v1712 = vrot.slane %v1684, 4
  %v1713 = vadd.f32 %v1684, %v1712
  %v1714 = vrot.slane %v1713, 2
  %v1715 = vadd.f32 %v1713, %v1714
  %v1716 = vrot.slane %v1715, 1
  %v1717 = vadd.f32 %v1715, %v1716
  %v1718 = vrot.slane %v1687, 4
  %v1719 = vadd.f32 %v1687, %v1718
  %v1720 = vrot.slane %v1719, 2
  %v1721 = vadd.f32 %v1719, %v1720
  %v1722 = vrot.slane %v1721, 1
  %v1723 = vadd.f32 %v1721, %v1722
  %v1724 = vrot.slane %v1690, 4
  %v1725 = vadd.f32 %v1690, %v1724
  %v1726 = vrot.slane %v1725, 2
  %v1727 = vadd.f32 %v1725, %v1726
  %v1728 = vrot.slane %v1727, 1
  %v1729 = vadd.f32 %v1727, %v1728
  %v1730 = vrot.slane %v1693, 4
  %v1731 = vadd.f32 %v1693, %v1730
  %v1732 = vrot.slane %v1731, 2
  %v1733 = vadd.f32 %v1731, %v1732
  %v1734 = vrot.slane %v1733, 1
  %v1735 = vadd.f32 %v1733, %v1734
  %v1736 = vrot.slane %v1696, 4
  %v1737 = vadd.f32 %v1696, %v1736
  %v1738 = vrot.slane %v1737, 2
  %v1739 = vadd.f32 %v1737, %v1738
  %v1740 = vrot.slane %v1739, 1
  %v1741 = vadd.f32 %v1739, %v1740
  %v1742 = vrot.slane %v1699, 4
  %v1743 = vadd.f32 %v1699, %v1742
  %v1744 = vrot.slane %v1743, 2
  %v1745 = vadd.f32 %v1743, %v1744
  %v1746 = vrot.slane %v1745, 1
  %v1747 = vadd.f32 %v1745, %v1746
  %v1748 = vadd.f32 %v1705, 0.0
  %v1749 = vadd.f32 %v1711, 0.0
  %v1750 = vadd.f32 %v1717, 0.0
  %v1751 = vadd.f32 %v1723, 0.0
  %v1752 = vadd.f32 %v1729, 0.0
  %v1753 = vadd.f32 %v1735, 0.0
  %v1754 = vadd.f32 %v1741, 0.0
  %v1755 = vadd.f32 %v1747, 0.0
  %vm1756 = vcmp.ne.f32.partialorder %v1668, 0.0
  %vm1757 = vcmp.ne.f32.partialorder %v1669, 0.0
  %vm1758 = vcmp.ne.f32.partialorder %v1670, 0.0
  %vm1759 = vcmp.ne.f32.partialorder %v1671, 0.0
  %vm1760 = vcmp.ne.f32.partialorder %v1672, 0.0
  %vm1761 = vcmp.ne.f32.partialorder %v1673, 0.0
  %vm1762 = vcmp.ne.f32.partialorder %v1674, 0.0
  %vm1763 = vcmp.ne.f32.partialorder %v1675, 0.0
  %v1764 = vsel %vm1756, 1, 0
  %v1765 = vsel %vm1757, 1, 0
  %v1766 = vsel %vm1758, 1, 0
  %v1767 = vsel %vm1759, 1, 0
  %v1768 = vsel %vm1760, 1, 0
  %v1769 = vsel %vm1761, 1, 0
  %v1770 = vsel %vm1762, 1, 0
  %v1771 = vsel %vm1763, 1, 0
  %v1772 = vcvt.s32.f32 %v1764
  %v1773 = vcvt.s32.f32 %v1765
  %v1774 = vcvt.s32.f32 %v1766
  %v1775 = vcvt.s32.f32 %v1767
  %v1776 = vcvt.s32.f32 %v1768
  %v1777 = vcvt.s32.f32 %v1769
  %v1778 = vcvt.s32.f32 %v1770
  %v1779 = vcvt.s32.f32 %v1771
  %v1780 = vsel %vm1453, %v1772, 0.0
  %1781 = vadd.xlane.f32.xlu0 %v1780
  %v1782 = vpop.xlane.xlu0 %1781
  %v1783 = vsel %vm1453, %v1773, 0.0
  %1784 = vadd.xlane.f32.xlu0 %v1783
  %v1785 = vpop.xlane.xlu0 %1784
  %v1786 = vsel %vm1453, %v1774, 0.0
  %1787 = vadd.xlane.f32.xlu0 %v1786
  %v1788 = vpop.xlane.xlu0 %1787
  %v1789 = vsel %vm1453, %v1775, 0.0
  %1790 = vadd.xlane.f32.xlu0 %v1789
  %v1791 = vpop.xlane.xlu0 %1790
  %v1792 = vsel %vm1453, %v1776, 0.0
  %1793 = vadd.xlane.f32.xlu0 %v1792
  %v1794 = vpop.xlane.xlu0 %1793
  %v1795 = vsel %vm1453, %v1777, 0.0
  %1796 = vadd.xlane.f32.xlu0 %v1795
  %v1797 = vpop.xlane.xlu0 %1796
  %v1798 = vsel %vm1453, %v1778, 0.0
  %1799 = vadd.xlane.f32.xlu0 %v1798
  %v1800 = vpop.xlane.xlu0 %1799
  %v1801 = vsel %vm1453, %v1779, 0.0
  %1802 = vadd.xlane.f32.xlu0 %v1801
  %v1803 = vpop.xlane.xlu0 %1802
  %v1804 = vrot.slane %v1782, 4
  %v1805 = vadd.f32 %v1782, %v1804
  %v1806 = vrot.slane %v1805, 2
  %v1807 = vadd.f32 %v1805, %v1806
  %v1808 = vrot.slane %v1807, 1
  %v1809 = vadd.f32 %v1807, %v1808
  %v1810 = vrot.slane %v1785, 4
  %v1811 = vadd.f32 %v1785, %v1810
  %v1812 = vrot.slane %v1811, 2
  %v1813 = vadd.f32 %v1811, %v1812
  %v1814 = vrot.slane %v1813, 1
  %v1815 = vadd.f32 %v1813, %v1814
  %v1816 = vrot.slane %v1788, 4
  %v1817 = vadd.f32 %v1788, %v1816
  %v1818 = vrot.slane %v1817, 2
  %v1819 = vadd.f32 %v1817, %v1818
  %v1820 = vrot.slane %v1819, 1
  %v1821 = vadd.f32 %v1819, %v1820
  %v1822 = vrot.slane %v1791, 4
  %v1823 = vadd.f32 %v1791, %v1822
  %v1824 = vrot.slane %v1823, 2
  %v1825 = vadd.f32 %v1823, %v1824
  %v1826 = vrot.slane %v1825, 1
  %v1827 = vadd.f32 %v1825, %v1826
  %v1828 = vrot.slane %v1794, 4
  %v1829 = vadd.f32 %v1794, %v1828
  %v1830 = vrot.slane %v1829, 2
  %v1831 = vadd.f32 %v1829, %v1830
  %v1832 = vrot.slane %v1831, 1
  %v1833 = vadd.f32 %v1831, %v1832
  %v1834 = vrot.slane %v1797, 4
  %v1835 = vadd.f32 %v1797, %v1834
  %v1836 = vrot.slane %v1835, 2
  %v1837 = vadd.f32 %v1835, %v1836
  %v1838 = vrot.slane %v1837, 1
  %v1839 = vadd.f32 %v1837, %v1838
  %v1840 = vrot.slane %v1800, 4
  %v1841 = vadd.f32 %v1800, %v1840
  %v1842 = vrot.slane %v1841, 2
  %v1843 = vadd.f32 %v1841, %v1842
  %v1844 = vrot.slane %v1843, 1
  %v1845 = vadd.f32 %v1843, %v1844
  %v1846 = vrot.slane %v1803, 4
  %v1847 = vadd.f32 %v1803, %v1846
  %v1848 = vrot.slane %v1847, 2
  %v1849 = vadd.f32 %v1847, %v1848
  %v1850 = vrot.slane %v1849, 1
  %v1851 = vadd.f32 %v1849, %v1850
  %v1852 = vadd.f32 %v1809, 0.0
  %v1853 = vadd.f32 %v1815, 0.0
  %v1854 = vadd.f32 %v1821, 0.0
  %v1855 = vadd.f32 %v1827, 0.0
  %v1856 = vadd.f32 %v1833, 0.0
  %v1857 = vadd.f32 %v1839, 0.0
  %v1858 = vadd.f32 %v1845, 0.0
  %v1859 = vadd.f32 %v1851, 0.0
  %vm1860 = vcmp.eq.s32.totalorder %v1568, 1
  %v1861 = vsel %vm1860, 1, 0
  %v1862 = vcvt.s32.f32 %v1861
  %v1863 = vmul.f32 %v1403, %v1862
  %v1864 = vmul.f32 %v1410, %v1862
  %v1865 = vmul.f32 %v1417, %v1862
  %v1866 = vmul.f32 %v1424, %v1862
  %v1867 = vmul.f32 %v1431, %v1862
  %v1868 = vmul.f32 %v1438, %v1862
  %v1869 = vmul.f32 %v1445, %v1862
  %v1870 = vmul.f32 %v1452, %v1862
  %v1871 = vsel %vm1453, %v1863, 0.0
  %1872 = vadd.xlane.f32.xlu0 %v1871
  %v1873 = vpop.xlane.xlu0 %1872
  %v1874 = vsel %vm1453, %v1864, 0.0
  %1875 = vadd.xlane.f32.xlu0 %v1874
  %v1876 = vpop.xlane.xlu0 %1875
  %v1877 = vsel %vm1453, %v1865, 0.0
  %1878 = vadd.xlane.f32.xlu0 %v1877
  %v1879 = vpop.xlane.xlu0 %1878
  %v1880 = vsel %vm1453, %v1866, 0.0
  %1881 = vadd.xlane.f32.xlu0 %v1880
  %v1882 = vpop.xlane.xlu0 %1881
  %v1883 = vsel %vm1453, %v1867, 0.0
  %1884 = vadd.xlane.f32.xlu0 %v1883
  %v1885 = vpop.xlane.xlu0 %1884
  %v1886 = vsel %vm1453, %v1868, 0.0
  %1887 = vadd.xlane.f32.xlu0 %v1886
  %v1888 = vpop.xlane.xlu0 %1887
  %v1889 = vsel %vm1453, %v1869, 0.0
  %1890 = vadd.xlane.f32.xlu0 %v1889
  %v1891 = vpop.xlane.xlu0 %1890
  %v1892 = vsel %vm1453, %v1870, 0.0
  %1893 = vadd.xlane.f32.xlu0 %v1892
  %v1894 = vpop.xlane.xlu0 %1893
  %v1895 = vmul.f32 %v113, %v1862
  %v1896 = vmul.f32 %v114, %v1862
  %v1897 = vmul.f32 %v115, %v1862
  %v1898 = vmul.f32 %v116, %v1862
  %v1899 = vmul.f32 %v117, %v1862
  %v1900 = vmul.f32 %v118, %v1862
  %v1901 = vmul.f32 %v119, %v1862
  %v1902 = vmul.f32 %v120, %v1862
  %v1903 = vsel %vm1453, %v1895, 0.0
  %1904 = vadd.xlane.f32.xlu0 %v1903
  %v1905 = vpop.xlane.xlu0 %1904
  %v1906 = vsel %vm1453, %v1896, 0.0
  %1907 = vadd.xlane.f32.xlu0 %v1906
  %v1908 = vpop.xlane.xlu0 %1907
  %v1909 = vsel %vm1453, %v1897, 0.0
  %1910 = vadd.xlane.f32.xlu0 %v1909
  %v1911 = vpop.xlane.xlu0 %1910
  %v1912 = vsel %vm1453, %v1898, 0.0
  %1913 = vadd.xlane.f32.xlu0 %v1912
  %v1914 = vpop.xlane.xlu0 %1913
  %v1915 = vsel %vm1453, %v1899, 0.0
  %1916 = vadd.xlane.f32.xlu0 %v1915
  %v1917 = vpop.xlane.xlu0 %1916
  %v1918 = vsel %vm1453, %v1900, 0.0
  %1919 = vadd.xlane.f32.xlu0 %v1918
  %v1920 = vpop.xlane.xlu0 %1919
  %v1921 = vsel %vm1453, %v1901, 0.0
  %1922 = vadd.xlane.f32.xlu0 %v1921
  %v1923 = vpop.xlane.xlu0 %1922
  %v1924 = vsel %vm1453, %v1902, 0.0
  %1925 = vadd.xlane.f32.xlu0 %v1924
  %v1926 = vpop.xlane.xlu0 %1925
  %v1927 = vmul.f32 %v1905, %v121
  %v1928 = vmul.f32 %v1908, %v122
  %v1929 = vmul.f32 %v1911, %v123
  %v1930 = vmul.f32 %v1914, %v124
  %v1931 = vmul.f32 %v1917, %v125
  %v1932 = vmul.f32 %v1920, %v126
  %v1933 = vmul.f32 %v1923, %v127
  %v1934 = vmul.f32 %v1926, %v128
  %v1935 = vadd.f32 %v1873, 0.2
  %v1936 = vadd.f32 %v1876, 0.2
  %v1937 = vadd.f32 %v1879, 0.2
  %v1938 = vadd.f32 %v1882, 0.2
  %v1939 = vadd.f32 %v1885, 0.2
  %v1940 = vadd.f32 %v1888, 0.2
  %v1941 = vadd.f32 %v1891, 0.2
  %v1942 = vadd.f32 %v1894, 0.2
  %v1943 = vsub.f32 %v1935, %v1403
  %v1944 = vsub.f32 %v1936, %v1410
  %v1945 = vsub.f32 %v1937, %v1417
  %v1946 = vsub.f32 %v1938, %v1424
  %v1947 = vsub.f32 %v1939, %v1431
  %v1948 = vsub.f32 %v1940, %v1438
  %v1949 = vsub.f32 %v1941, %v1445
  %v1950 = vsub.f32 %v1942, %v1452
  %v1951 = vmax.f32 %v1943, 0.0
  %v1952 = vmax.f32 %v1944, 0.0
  %v1953 = vmax.f32 %v1945, 0.0
  %v1954 = vmax.f32 %v1946, 0.0
  %v1955 = vmax.f32 %v1947, 0.0
  %v1956 = vmax.f32 %v1948, 0.0
  %v1957 = vmax.f32 %v1949, 0.0
  %v1958 = vmax.f32 %v1950, 0.0
  %v1959 = vmul.f32 %v1951, %v1927
  %v1960 = vmul.f32 %v1952, %v1928
  %v1961 = vmul.f32 %v1953, %v1929
  %v1962 = vmul.f32 %v1954, %v1930
  %v1963 = vmul.f32 %v1955, %v1931
  %v1964 = vmul.f32 %v1956, %v1932
  %v1965 = vmul.f32 %v1957, %v1933
  %v1966 = vmul.f32 %v1958, %v1934
  %v1967 = vsel %vm1453, %v1959, 0.0
  %1968 = vadd.xlane.f32.xlu0 %v1967
  %v1969 = vpop.xlane.xlu0 %1968
  %v1970 = vsel %vm1453, %v1960, 0.0
  %1971 = vadd.xlane.f32.xlu0 %v1970
  %v1972 = vpop.xlane.xlu0 %1971
  %v1973 = vsel %vm1453, %v1961, 0.0
  %1974 = vadd.xlane.f32.xlu0 %v1973
  %v1975 = vpop.xlane.xlu0 %1974
  %v1976 = vsel %vm1453, %v1962, 0.0
  %1977 = vadd.xlane.f32.xlu0 %v1976
  %v1978 = vpop.xlane.xlu0 %1977
  %v1979 = vsel %vm1453, %v1963, 0.0
  %1980 = vadd.xlane.f32.xlu0 %v1979
  %v1981 = vpop.xlane.xlu0 %1980
  %v1982 = vsel %vm1453, %v1964, 0.0
  %1983 = vadd.xlane.f32.xlu0 %v1982
  %v1984 = vpop.xlane.xlu0 %1983
  %v1985 = vsel %vm1453, %v1965, 0.0
  %1986 = vadd.xlane.f32.xlu0 %v1985
  %v1987 = vpop.xlane.xlu0 %1986
  %v1988 = vsel %vm1453, %v1966, 0.0
  %1989 = vadd.xlane.f32.xlu0 %v1988
  %v1990 = vpop.xlane.xlu0 %1989
  %v1991 = vrot.slane %v1969, 4
  %v1992 = vadd.f32 %v1969, %v1991
  %v1993 = vrot.slane %v1992, 2
  %v1994 = vadd.f32 %v1992, %v1993
  %v1995 = vrot.slane %v1994, 1
  %v1996 = vadd.f32 %v1994, %v1995
  %v1997 = vrot.slane %v1972, 4
  %v1998 = vadd.f32 %v1972, %v1997
  %v1999 = vrot.slane %v1998, 2
  %v2000 = vadd.f32 %v1998, %v1999
  %v2001 = vrot.slane %v2000, 1
  %v2002 = vadd.f32 %v2000, %v2001
  %v2003 = vrot.slane %v1975, 4
  %v2004 = vadd.f32 %v1975, %v2003
  %v2005 = vrot.slane %v2004, 2
  %v2006 = vadd.f32 %v2004, %v2005
  %v2007 = vrot.slane %v2006, 1
  %v2008 = vadd.f32 %v2006, %v2007
  %v2009 = vrot.slane %v1978, 4
  %v2010 = vadd.f32 %v1978, %v2009
  %v2011 = vrot.slane %v2010, 2
  %v2012 = vadd.f32 %v2010, %v2011
  %v2013 = vrot.slane %v2012, 1
  %v2014 = vadd.f32 %v2012, %v2013
  %v2015 = vrot.slane %v1981, 4
  %v2016 = vadd.f32 %v1981, %v2015
  %v2017 = vrot.slane %v2016, 2
  %v2018 = vadd.f32 %v2016, %v2017
  %v2019 = vrot.slane %v2018, 1
  %v2020 = vadd.f32 %v2018, %v2019
  %v2021 = vrot.slane %v1984, 4
  %v2022 = vadd.f32 %v1984, %v2021
  %v2023 = vrot.slane %v2022, 2
  %v2024 = vadd.f32 %v2022, %v2023
  %v2025 = vrot.slane %v2024, 1
  %v2026 = vadd.f32 %v2024, %v2025
  %v2027 = vrot.slane %v1987, 4
  %v2028 = vadd.f32 %v1987, %v2027
  %v2029 = vrot.slane %v2028, 2
  %v2030 = vadd.f32 %v2028, %v2029
  %v2031 = vrot.slane %v2030, 1
  %v2032 = vadd.f32 %v2030, %v2031
  %v2033 = vrot.slane %v1990, 4
  %v2034 = vadd.f32 %v1990, %v2033
  %v2035 = vrot.slane %v2034, 2
  %v2036 = vadd.f32 %v2034, %v2035
  %v2037 = vrot.slane %v2036, 1
  %v2038 = vadd.f32 %v2036, %v2037
  %v2039 = vadd.f32 %v1748, %v1996
  %v2040 = vadd.f32 %v1749, %v2002
  %v2041 = vadd.f32 %v1750, %v2008
  %v2042 = vadd.f32 %v1751, %v2014
  %v2043 = vadd.f32 %v1752, %v2020
  %v2044 = vadd.f32 %v1753, %v2026
  %v2045 = vadd.f32 %v1754, %v2032
  %v2046 = vadd.f32 %v1755, %v2038
  %vm2047 = vcmp.ne.f32.partialorder %v1959, 0.0
  %vm2048 = vcmp.ne.f32.partialorder %v1960, 0.0
  %vm2049 = vcmp.ne.f32.partialorder %v1961, 0.0
  %vm2050 = vcmp.ne.f32.partialorder %v1962, 0.0
  %vm2051 = vcmp.ne.f32.partialorder %v1963, 0.0
  %vm2052 = vcmp.ne.f32.partialorder %v1964, 0.0
  %vm2053 = vcmp.ne.f32.partialorder %v1965, 0.0
  %vm2054 = vcmp.ne.f32.partialorder %v1966, 0.0
  %v2055 = vsel %vm2047, 1, 0
  %v2056 = vsel %vm2048, 1, 0
  %v2057 = vsel %vm2049, 1, 0
  %v2058 = vsel %vm2050, 1, 0
  %v2059 = vsel %vm2051, 1, 0
  %v2060 = vsel %vm2052, 1, 0
  %v2061 = vsel %vm2053, 1, 0
  %v2062 = vsel %vm2054, 1, 0
  %v2063 = vcvt.s32.f32 %v2055
  %v2064 = vcvt.s32.f32 %v2056
  %v2065 = vcvt.s32.f32 %v2057
  %v2066 = vcvt.s32.f32 %v2058
  %v2067 = vcvt.s32.f32 %v2059
  %v2068 = vcvt.s32.f32 %v2060
  %v2069 = vcvt.s32.f32 %v2061
  %v2070 = vcvt.s32.f32 %v2062
  %v2071 = vsel %vm1453, %v2063, 0.0
  %2072 = vadd.xlane.f32.xlu0 %v2071
  %v2073 = vpop.xlane.xlu0 %2072
  %v2074 = vsel %vm1453, %v2064, 0.0
  %2075 = vadd.xlane.f32.xlu0 %v2074
  %v2076 = vpop.xlane.xlu0 %2075
  %v2077 = vsel %vm1453, %v2065, 0.0
  %2078 = vadd.xlane.f32.xlu0 %v2077
  %v2079 = vpop.xlane.xlu0 %2078
  %v2080 = vsel %vm1453, %v2066, 0.0
  %2081 = vadd.xlane.f32.xlu0 %v2080
  %v2082 = vpop.xlane.xlu0 %2081
  %v2083 = vsel %vm1453, %v2067, 0.0
  %2084 = vadd.xlane.f32.xlu0 %v2083
  %v2085 = vpop.xlane.xlu0 %2084
  %v2086 = vsel %vm1453, %v2068, 0.0
  %2087 = vadd.xlane.f32.xlu0 %v2086
  %v2088 = vpop.xlane.xlu0 %2087
  %v2089 = vsel %vm1453, %v2069, 0.0
  %2090 = vadd.xlane.f32.xlu0 %v2089
  %v2091 = vpop.xlane.xlu0 %2090
  %v2092 = vsel %vm1453, %v2070, 0.0
  %2093 = vadd.xlane.f32.xlu0 %v2092
  %v2094 = vpop.xlane.xlu0 %2093
  %v2095 = vrot.slane %v2073, 4
  %v2096 = vadd.f32 %v2073, %v2095
  %v2097 = vrot.slane %v2096, 2
  %v2098 = vadd.f32 %v2096, %v2097
  %v2099 = vrot.slane %v2098, 1
  %v2100 = vadd.f32 %v2098, %v2099
  %v2101 = vrot.slane %v2076, 4
  %v2102 = vadd.f32 %v2076, %v2101
  %v2103 = vrot.slane %v2102, 2
  %v2104 = vadd.f32 %v2102, %v2103
  %v2105 = vrot.slane %v2104, 1
  %v2106 = vadd.f32 %v2104, %v2105
  %v2107 = vrot.slane %v2079, 4
  %v2108 = vadd.f32 %v2079, %v2107
  %v2109 = vrot.slane %v2108, 2
  %v2110 = vadd.f32 %v2108, %v2109
  %v2111 = vrot.slane %v2110, 1
  %v2112 = vadd.f32 %v2110, %v2111
  %v2113 = vrot.slane %v2082, 4
  %v2114 = vadd.f32 %v2082, %v2113
  %v2115 = vrot.slane %v2114, 2
  %v2116 = vadd.f32 %v2114, %v2115
  %v2117 = vrot.slane %v2116, 1
  %v2118 = vadd.f32 %v2116, %v2117
  %v2119 = vrot.slane %v2085, 4
  %v2120 = vadd.f32 %v2085, %v2119
  %v2121 = vrot.slane %v2120, 2
  %v2122 = vadd.f32 %v2120, %v2121
  %v2123 = vrot.slane %v2122, 1
  %v2124 = vadd.f32 %v2122, %v2123
  %v2125 = vrot.slane %v2088, 4
  %v2126 = vadd.f32 %v2088, %v2125
  %v2127 = vrot.slane %v2126, 2
  %v2128 = vadd.f32 %v2126, %v2127
  %v2129 = vrot.slane %v2128, 1
  %v2130 = vadd.f32 %v2128, %v2129
  %v2131 = vrot.slane %v2091, 4
  %v2132 = vadd.f32 %v2091, %v2131
  %v2133 = vrot.slane %v2132, 2
  %v2134 = vadd.f32 %v2132, %v2133
  %v2135 = vrot.slane %v2134, 1
  %v2136 = vadd.f32 %v2134, %v2135
  %v2137 = vrot.slane %v2094, 4
  %v2138 = vadd.f32 %v2094, %v2137
  %v2139 = vrot.slane %v2138, 2
  %v2140 = vadd.f32 %v2138, %v2139
  %v2141 = vrot.slane %v2140, 1
  %v2142 = vadd.f32 %v2140, %v2141
  %v2143 = vadd.f32 %v1852, %v2100
  %v2144 = vadd.f32 %v1853, %v2106
  %v2145 = vadd.f32 %v1854, %v2112
  %v2146 = vadd.f32 %v1855, %v2118
  %v2147 = vadd.f32 %v1856, %v2124
  %v2148 = vadd.f32 %v1857, %v2130
  %v2149 = vadd.f32 %v1858, %v2136
  %v2150 = vadd.f32 %v1859, %v2142
  %vm2151 = vcmp.eq.s32.totalorder %v1568, 2
  %v2152 = vsel %vm2151, 1, 0
  %v2153 = vcvt.s32.f32 %v2152
  %v2154 = vmul.f32 %v1403, %v2153
  %v2155 = vmul.f32 %v1410, %v2153
  %v2156 = vmul.f32 %v1417, %v2153
  %v2157 = vmul.f32 %v1424, %v2153
  %v2158 = vmul.f32 %v1431, %v2153
  %v2159 = vmul.f32 %v1438, %v2153
  %v2160 = vmul.f32 %v1445, %v2153
  %v2161 = vmul.f32 %v1452, %v2153
  %v2162 = vsel %vm1453, %v2154, 0.0
  %2163 = vadd.xlane.f32.xlu0 %v2162
  %v2164 = vpop.xlane.xlu0 %2163
  %v2165 = vsel %vm1453, %v2155, 0.0
  %2166 = vadd.xlane.f32.xlu0 %v2165
  %v2167 = vpop.xlane.xlu0 %2166
  %v2168 = vsel %vm1453, %v2156, 0.0
  %2169 = vadd.xlane.f32.xlu0 %v2168
  %v2170 = vpop.xlane.xlu0 %2169
  %v2171 = vsel %vm1453, %v2157, 0.0
  %2172 = vadd.xlane.f32.xlu0 %v2171
  %v2173 = vpop.xlane.xlu0 %2172
  %v2174 = vsel %vm1453, %v2158, 0.0
  %2175 = vadd.xlane.f32.xlu0 %v2174
  %v2176 = vpop.xlane.xlu0 %2175
  %v2177 = vsel %vm1453, %v2159, 0.0
  %2178 = vadd.xlane.f32.xlu0 %v2177
  %v2179 = vpop.xlane.xlu0 %2178
  %v2180 = vsel %vm1453, %v2160, 0.0
  %2181 = vadd.xlane.f32.xlu0 %v2180
  %v2182 = vpop.xlane.xlu0 %2181
  %v2183 = vsel %vm1453, %v2161, 0.0
  %2184 = vadd.xlane.f32.xlu0 %v2183
  %v2185 = vpop.xlane.xlu0 %2184
  %v2186 = vmul.f32 %v113, %v2153
  %v2187 = vmul.f32 %v114, %v2153
  %v2188 = vmul.f32 %v115, %v2153
  %v2189 = vmul.f32 %v116, %v2153
  %v2190 = vmul.f32 %v117, %v2153
  %v2191 = vmul.f32 %v118, %v2153
  %v2192 = vmul.f32 %v119, %v2153
  %v2193 = vmul.f32 %v120, %v2153
  %v2194 = vsel %vm1453, %v2186, 0.0
  %2195 = vadd.xlane.f32.xlu0 %v2194
  %v2196 = vpop.xlane.xlu0 %2195
  %v2197 = vsel %vm1453, %v2187, 0.0
  %2198 = vadd.xlane.f32.xlu0 %v2197
  %v2199 = vpop.xlane.xlu0 %2198
  %v2200 = vsel %vm1453, %v2188, 0.0
  %2201 = vadd.xlane.f32.xlu0 %v2200
  %v2202 = vpop.xlane.xlu0 %2201
  %v2203 = vsel %vm1453, %v2189, 0.0
  %2204 = vadd.xlane.f32.xlu0 %v2203
  %v2205 = vpop.xlane.xlu0 %2204
  %v2206 = vsel %vm1453, %v2190, 0.0
  %2207 = vadd.xlane.f32.xlu0 %v2206
  %v2208 = vpop.xlane.xlu0 %2207
  %v2209 = vsel %vm1453, %v2191, 0.0
  %2210 = vadd.xlane.f32.xlu0 %v2209
  %v2211 = vpop.xlane.xlu0 %2210
  %v2212 = vsel %vm1453, %v2192, 0.0
  %2213 = vadd.xlane.f32.xlu0 %v2212
  %v2214 = vpop.xlane.xlu0 %2213
  %v2215 = vsel %vm1453, %v2193, 0.0
  %2216 = vadd.xlane.f32.xlu0 %v2215
  %v2217 = vpop.xlane.xlu0 %2216
  %v2218 = vmul.f32 %v2196, %v121
  %v2219 = vmul.f32 %v2199, %v122
  %v2220 = vmul.f32 %v2202, %v123
  %v2221 = vmul.f32 %v2205, %v124
  %v2222 = vmul.f32 %v2208, %v125
  %v2223 = vmul.f32 %v2211, %v126
  %v2224 = vmul.f32 %v2214, %v127
  %v2225 = vmul.f32 %v2217, %v128
  %v2226 = vadd.f32 %v2164, 0.2
  %v2227 = vadd.f32 %v2167, 0.2
  %v2228 = vadd.f32 %v2170, 0.2
  %v2229 = vadd.f32 %v2173, 0.2
  %v2230 = vadd.f32 %v2176, 0.2
  %v2231 = vadd.f32 %v2179, 0.2
  %v2232 = vadd.f32 %v2182, 0.2
  %v2233 = vadd.f32 %v2185, 0.2
  %v2234 = vsub.f32 %v2226, %v1403
  %v2235 = vsub.f32 %v2227, %v1410
  %v2236 = vsub.f32 %v2228, %v1417
  %v2237 = vsub.f32 %v2229, %v1424
  %v2238 = vsub.f32 %v2230, %v1431
  %v2239 = vsub.f32 %v2231, %v1438
  %v2240 = vsub.f32 %v2232, %v1445
  %v2241 = vsub.f32 %v2233, %v1452
  %v2242 = vmax.f32 %v2234, 0.0
  %v2243 = vmax.f32 %v2235, 0.0
  %v2244 = vmax.f32 %v2236, 0.0
  %v2245 = vmax.f32 %v2237, 0.0
  %v2246 = vmax.f32 %v2238, 0.0
  %v2247 = vmax.f32 %v2239, 0.0
  %v2248 = vmax.f32 %v2240, 0.0
  %v2249 = vmax.f32 %v2241, 0.0
  %v2250 = vmul.f32 %v2242, %v2218
  %v2251 = vmul.f32 %v2243, %v2219
  %v2252 = vmul.f32 %v2244, %v2220
  %v2253 = vmul.f32 %v2245, %v2221
  %v2254 = vmul.f32 %v2246, %v2222
  %v2255 = vmul.f32 %v2247, %v2223
  %v2256 = vmul.f32 %v2248, %v2224
  %v2257 = vmul.f32 %v2249, %v2225
  %v2258 = vsel %vm1453, %v2250, 0.0
  %2259 = vadd.xlane.f32.xlu0 %v2258
  %v2260 = vpop.xlane.xlu0 %2259
  %v2261 = vsel %vm1453, %v2251, 0.0
  %2262 = vadd.xlane.f32.xlu0 %v2261
  %v2263 = vpop.xlane.xlu0 %2262
  %v2264 = vsel %vm1453, %v2252, 0.0
  %2265 = vadd.xlane.f32.xlu0 %v2264
  %v2266 = vpop.xlane.xlu0 %2265
  %v2267 = vsel %vm1453, %v2253, 0.0
  %2268 = vadd.xlane.f32.xlu0 %v2267
  %v2269 = vpop.xlane.xlu0 %2268
  %v2270 = vsel %vm1453, %v2254, 0.0
  %2271 = vadd.xlane.f32.xlu0 %v2270
  %v2272 = vpop.xlane.xlu0 %2271
  %v2273 = vsel %vm1453, %v2255, 0.0
  %2274 = vadd.xlane.f32.xlu0 %v2273
  %v2275 = vpop.xlane.xlu0 %2274
  %v2276 = vsel %vm1453, %v2256, 0.0
  %2277 = vadd.xlane.f32.xlu0 %v2276
  %v2278 = vpop.xlane.xlu0 %2277
  %v2279 = vsel %vm1453, %v2257, 0.0
  %2280 = vadd.xlane.f32.xlu0 %v2279
  %v2281 = vpop.xlane.xlu0 %2280
  %v2282 = vrot.slane %v2260, 4
  %v2283 = vadd.f32 %v2260, %v2282
  %v2284 = vrot.slane %v2283, 2
  %v2285 = vadd.f32 %v2283, %v2284
  %v2286 = vrot.slane %v2285, 1
  %v2287 = vadd.f32 %v2285, %v2286
  %v2288 = vrot.slane %v2263, 4
  %v2289 = vadd.f32 %v2263, %v2288
  %v2290 = vrot.slane %v2289, 2
  %v2291 = vadd.f32 %v2289, %v2290
  %v2292 = vrot.slane %v2291, 1
  %v2293 = vadd.f32 %v2291, %v2292
  %v2294 = vrot.slane %v2266, 4
  %v2295 = vadd.f32 %v2266, %v2294
  %v2296 = vrot.slane %v2295, 2
  %v2297 = vadd.f32 %v2295, %v2296
  %v2298 = vrot.slane %v2297, 1
  %v2299 = vadd.f32 %v2297, %v2298
  %v2300 = vrot.slane %v2269, 4
  %v2301 = vadd.f32 %v2269, %v2300
  %v2302 = vrot.slane %v2301, 2
  %v2303 = vadd.f32 %v2301, %v2302
  %v2304 = vrot.slane %v2303, 1
  %v2305 = vadd.f32 %v2303, %v2304
  %v2306 = vrot.slane %v2272, 4
  %v2307 = vadd.f32 %v2272, %v2306
  %v2308 = vrot.slane %v2307, 2
  %v2309 = vadd.f32 %v2307, %v2308
  %v2310 = vrot.slane %v2309, 1
  %v2311 = vadd.f32 %v2309, %v2310
  %v2312 = vrot.slane %v2275, 4
  %v2313 = vadd.f32 %v2275, %v2312
  %v2314 = vrot.slane %v2313, 2
  %v2315 = vadd.f32 %v2313, %v2314
  %v2316 = vrot.slane %v2315, 1
  %v2317 = vadd.f32 %v2315, %v2316
  %v2318 = vrot.slane %v2278, 4
  %v2319 = vadd.f32 %v2278, %v2318
  %v2320 = vrot.slane %v2319, 2
  %v2321 = vadd.f32 %v2319, %v2320
  %v2322 = vrot.slane %v2321, 1
  %v2323 = vadd.f32 %v2321, %v2322
  %v2324 = vrot.slane %v2281, 4
  %v2325 = vadd.f32 %v2281, %v2324
  %v2326 = vrot.slane %v2325, 2
  %v2327 = vadd.f32 %v2325, %v2326
  %v2328 = vrot.slane %v2327, 1
  %v2329 = vadd.f32 %v2327, %v2328
  %v2330 = vadd.f32 %v2039, %v2287
  %v2331 = vadd.f32 %v2040, %v2293
  %v2332 = vadd.f32 %v2041, %v2299
  %v2333 = vadd.f32 %v2042, %v2305
  %v2334 = vadd.f32 %v2043, %v2311
  %v2335 = vadd.f32 %v2044, %v2317
  %v2336 = vadd.f32 %v2045, %v2323
  %v2337 = vadd.f32 %v2046, %v2329
  %vm2338 = vcmp.ne.f32.partialorder %v2250, 0.0
  %vm2339 = vcmp.ne.f32.partialorder %v2251, 0.0
  %vm2340 = vcmp.ne.f32.partialorder %v2252, 0.0
  %vm2341 = vcmp.ne.f32.partialorder %v2253, 0.0
  %vm2342 = vcmp.ne.f32.partialorder %v2254, 0.0
  %vm2343 = vcmp.ne.f32.partialorder %v2255, 0.0
  %vm2344 = vcmp.ne.f32.partialorder %v2256, 0.0
  %vm2345 = vcmp.ne.f32.partialorder %v2257, 0.0
  %v2346 = vsel %vm2338, 1, 0
  %v2347 = vsel %vm2339, 1, 0
  %v2348 = vsel %vm2340, 1, 0
  %v2349 = vsel %vm2341, 1, 0
  %v2350 = vsel %vm2342, 1, 0
  %v2351 = vsel %vm2343, 1, 0
  %v2352 = vsel %vm2344, 1, 0
  %v2353 = vsel %vm2345, 1, 0
  %v2354 = vcvt.s32.f32 %v2346
  %v2355 = vcvt.s32.f32 %v2347
  %v2356 = vcvt.s32.f32 %v2348
  %v2357 = vcvt.s32.f32 %v2349
  %v2358 = vcvt.s32.f32 %v2350
  %v2359 = vcvt.s32.f32 %v2351
  %v2360 = vcvt.s32.f32 %v2352
  %v2361 = vcvt.s32.f32 %v2353
  %v2362 = vsel %vm1453, %v2354, 0.0
  %2363 = vadd.xlane.f32.xlu0 %v2362
  %v2364 = vpop.xlane.xlu0 %2363
  %v2365 = vsel %vm1453, %v2355, 0.0
  %2366 = vadd.xlane.f32.xlu0 %v2365
  %v2367 = vpop.xlane.xlu0 %2366
  %v2368 = vsel %vm1453, %v2356, 0.0
  %2369 = vadd.xlane.f32.xlu0 %v2368
  %v2370 = vpop.xlane.xlu0 %2369
  %v2371 = vsel %vm1453, %v2357, 0.0
  %2372 = vadd.xlane.f32.xlu0 %v2371
  %v2373 = vpop.xlane.xlu0 %2372
  %v2374 = vsel %vm1453, %v2358, 0.0
  %2375 = vadd.xlane.f32.xlu0 %v2374
  %v2376 = vpop.xlane.xlu0 %2375
  %v2377 = vsel %vm1453, %v2359, 0.0
  %2378 = vadd.xlane.f32.xlu0 %v2377
  %v2379 = vpop.xlane.xlu0 %2378
  %v2380 = vsel %vm1453, %v2360, 0.0
  %2381 = vadd.xlane.f32.xlu0 %v2380
  %v2382 = vpop.xlane.xlu0 %2381
  %v2383 = vsel %vm1453, %v2361, 0.0
  %2384 = vadd.xlane.f32.xlu0 %v2383
  %v2385 = vpop.xlane.xlu0 %2384
  %v2386 = vrot.slane %v2364, 4
  %v2387 = vadd.f32 %v2364, %v2386
  %v2388 = vrot.slane %v2387, 2
  %v2389 = vadd.f32 %v2387, %v2388
  %v2390 = vrot.slane %v2389, 1
  %v2391 = vadd.f32 %v2389, %v2390
  %v2392 = vrot.slane %v2367, 4
  %v2393 = vadd.f32 %v2367, %v2392
  %v2394 = vrot.slane %v2393, 2
  %v2395 = vadd.f32 %v2393, %v2394
  %v2396 = vrot.slane %v2395, 1
  %v2397 = vadd.f32 %v2395, %v2396
  %v2398 = vrot.slane %v2370, 4
  %v2399 = vadd.f32 %v2370, %v2398
  %v2400 = vrot.slane %v2399, 2
  %v2401 = vadd.f32 %v2399, %v2400
  %v2402 = vrot.slane %v2401, 1
  %v2403 = vadd.f32 %v2401, %v2402
  %v2404 = vrot.slane %v2373, 4
  %v2405 = vadd.f32 %v2373, %v2404
  %v2406 = vrot.slane %v2405, 2
  %v2407 = vadd.f32 %v2405, %v2406
  %v2408 = vrot.slane %v2407, 1
  %v2409 = vadd.f32 %v2407, %v2408
  %v2410 = vrot.slane %v2376, 4
  %v2411 = vadd.f32 %v2376, %v2410
  %v2412 = vrot.slane %v2411, 2
  %v2413 = vadd.f32 %v2411, %v2412
  %v2414 = vrot.slane %v2413, 1
  %v2415 = vadd.f32 %v2413, %v2414
  %v2416 = vrot.slane %v2379, 4
  %v2417 = vadd.f32 %v2379, %v2416
  %v2418 = vrot.slane %v2417, 2
  %v2419 = vadd.f32 %v2417, %v2418
  %v2420 = vrot.slane %v2419, 1
  %v2421 = vadd.f32 %v2419, %v2420
  %v2422 = vrot.slane %v2382, 4
  %v2423 = vadd.f32 %v2382, %v2422
  %v2424 = vrot.slane %v2423, 2
  %v2425 = vadd.f32 %v2423, %v2424
  %v2426 = vrot.slane %v2425, 1
  %v2427 = vadd.f32 %v2425, %v2426
  %v2428 = vrot.slane %v2385, 4
  %v2429 = vadd.f32 %v2385, %v2428
  %v2430 = vrot.slane %v2429, 2
  %v2431 = vadd.f32 %v2429, %v2430
  %v2432 = vrot.slane %v2431, 1
  %v2433 = vadd.f32 %v2431, %v2432
  %v2434 = vadd.f32 %v2143, %v2391
  %v2435 = vadd.f32 %v2144, %v2397
  %v2436 = vadd.f32 %v2145, %v2403
  %v2437 = vadd.f32 %v2146, %v2409
  %v2438 = vadd.f32 %v2147, %v2415
  %v2439 = vadd.f32 %v2148, %v2421
  %v2440 = vadd.f32 %v2149, %v2427
  %v2441 = vadd.f32 %v2150, %v2433
  %vm2442 = vcmp.eq.s32.totalorder %v1568, 3
  %v2443 = vsel %vm2442, 1, 0
  %v2444 = vcvt.s32.f32 %v2443
  %v2445 = vmul.f32 %v1403, %v2444
  %v2446 = vmul.f32 %v1410, %v2444
  %v2447 = vmul.f32 %v1417, %v2444
  %v2448 = vmul.f32 %v1424, %v2444
  %v2449 = vmul.f32 %v1431, %v2444
  %v2450 = vmul.f32 %v1438, %v2444
  %v2451 = vmul.f32 %v1445, %v2444
  %v2452 = vmul.f32 %v1452, %v2444
  %v2453 = vsel %vm1453, %v2445, 0.0
  %2454 = vadd.xlane.f32.xlu0 %v2453
  %v2455 = vpop.xlane.xlu0 %2454
  %v2456 = vsel %vm1453, %v2446, 0.0
  %2457 = vadd.xlane.f32.xlu0 %v2456
  %v2458 = vpop.xlane.xlu0 %2457
  %v2459 = vsel %vm1453, %v2447, 0.0
  %2460 = vadd.xlane.f32.xlu0 %v2459
  %v2461 = vpop.xlane.xlu0 %2460
  %v2462 = vsel %vm1453, %v2448, 0.0
  %2463 = vadd.xlane.f32.xlu0 %v2462
  %v2464 = vpop.xlane.xlu0 %2463
  %v2465 = vsel %vm1453, %v2449, 0.0
  %2466 = vadd.xlane.f32.xlu0 %v2465
  %v2467 = vpop.xlane.xlu0 %2466
  %v2468 = vsel %vm1453, %v2450, 0.0
  %2469 = vadd.xlane.f32.xlu0 %v2468
  %v2470 = vpop.xlane.xlu0 %2469
  %v2471 = vsel %vm1453, %v2451, 0.0
  %2472 = vadd.xlane.f32.xlu0 %v2471
  %v2473 = vpop.xlane.xlu0 %2472
  %v2474 = vsel %vm1453, %v2452, 0.0
  %2475 = vadd.xlane.f32.xlu0 %v2474
  %v2476 = vpop.xlane.xlu0 %2475
  %v2477 = vmul.f32 %v113, %v2444
  %v2478 = vmul.f32 %v114, %v2444
  %v2479 = vmul.f32 %v115, %v2444
  %v2480 = vmul.f32 %v116, %v2444
  %v2481 = vmul.f32 %v117, %v2444
  %v2482 = vmul.f32 %v118, %v2444
  %v2483 = vmul.f32 %v119, %v2444
  %v2484 = vmul.f32 %v120, %v2444
  %v2485 = vsel %vm1453, %v2477, 0.0
  %2486 = vadd.xlane.f32.xlu0 %v2485
  %v2487 = vpop.xlane.xlu0 %2486
  %v2488 = vsel %vm1453, %v2478, 0.0
  %2489 = vadd.xlane.f32.xlu0 %v2488
  %v2490 = vpop.xlane.xlu0 %2489
  %v2491 = vsel %vm1453, %v2479, 0.0
  %2492 = vadd.xlane.f32.xlu0 %v2491
  %v2493 = vpop.xlane.xlu0 %2492
  %v2494 = vsel %vm1453, %v2480, 0.0
  %2495 = vadd.xlane.f32.xlu0 %v2494
  %v2496 = vpop.xlane.xlu0 %2495
  %v2497 = vsel %vm1453, %v2481, 0.0
  %2498 = vadd.xlane.f32.xlu0 %v2497
  %v2499 = vpop.xlane.xlu0 %2498
  %v2500 = vsel %vm1453, %v2482, 0.0
  %2501 = vadd.xlane.f32.xlu0 %v2500
  %v2502 = vpop.xlane.xlu0 %2501
  %v2503 = vsel %vm1453, %v2483, 0.0
  %2504 = vadd.xlane.f32.xlu0 %v2503
  %v2505 = vpop.xlane.xlu0 %2504
  %v2506 = vsel %vm1453, %v2484, 0.0
  %2507 = vadd.xlane.f32.xlu0 %v2506
  %v2508 = vpop.xlane.xlu0 %2507
  %v2509 = vmul.f32 %v2487, %v121
  %v2510 = vmul.f32 %v2490, %v122
  %v2511 = vmul.f32 %v2493, %v123
  %v2512 = vmul.f32 %v2496, %v124
  %v2513 = vmul.f32 %v2499, %v125
  %v2514 = vmul.f32 %v2502, %v126
  %v2515 = vmul.f32 %v2505, %v127
  %v2516 = vmul.f32 %v2508, %v128
  %v2517 = vadd.f32 %v2455, 0.2
  %v2518 = vadd.f32 %v2458, 0.2
  %v2519 = vadd.f32 %v2461, 0.2
  %v2520 = vadd.f32 %v2464, 0.2
  %v2521 = vadd.f32 %v2467, 0.2
  %v2522 = vadd.f32 %v2470, 0.2
  %v2523 = vadd.f32 %v2473, 0.2
  %v2524 = vadd.f32 %v2476, 0.2
  %v2525 = vsub.f32 %v2517, %v1403
  %v2526 = vsub.f32 %v2518, %v1410
  %v2527 = vsub.f32 %v2519, %v1417
  %v2528 = vsub.f32 %v2520, %v1424
  %v2529 = vsub.f32 %v2521, %v1431
  %v2530 = vsub.f32 %v2522, %v1438
  %v2531 = vsub.f32 %v2523, %v1445
  %v2532 = vsub.f32 %v2524, %v1452
  %v2533 = vmax.f32 %v2525, 0.0
  %v2534 = vmax.f32 %v2526, 0.0
  %v2535 = vmax.f32 %v2527, 0.0
  %v2536 = vmax.f32 %v2528, 0.0
  %v2537 = vmax.f32 %v2529, 0.0
  %v2538 = vmax.f32 %v2530, 0.0
  %v2539 = vmax.f32 %v2531, 0.0
  %v2540 = vmax.f32 %v2532, 0.0
  %v2541 = vmul.f32 %v2533, %v2509
  %v2542 = vmul.f32 %v2534, %v2510
  %v2543 = vmul.f32 %v2535, %v2511
  %v2544 = vmul.f32 %v2536, %v2512
  %v2545 = vmul.f32 %v2537, %v2513
  %v2546 = vmul.f32 %v2538, %v2514
  %v2547 = vmul.f32 %v2539, %v2515
  %v2548 = vmul.f32 %v2540, %v2516
  %v2549 = vsel %vm1453, %v2541, 0.0
  %2550 = vadd.xlane.f32.xlu0 %v2549
  %v2551 = vpop.xlane.xlu0 %2550
  %v2552 = vsel %vm1453, %v2542, 0.0
  %2553 = vadd.xlane.f32.xlu0 %v2552
  %v2554 = vpop.xlane.xlu0 %2553
  %v2555 = vsel %vm1453, %v2543, 0.0
  %2556 = vadd.xlane.f32.xlu0 %v2555
  %v2557 = vpop.xlane.xlu0 %2556
  %v2558 = vsel %vm1453, %v2544, 0.0
  %2559 = vadd.xlane.f32.xlu0 %v2558
  %v2560 = vpop.xlane.xlu0 %2559
  %v2561 = vsel %vm1453, %v2545, 0.0
  %2562 = vadd.xlane.f32.xlu0 %v2561
  %v2563 = vpop.xlane.xlu0 %2562
  %v2564 = vsel %vm1453, %v2546, 0.0
  %2565 = vadd.xlane.f32.xlu0 %v2564
  %v2566 = vpop.xlane.xlu0 %2565
  %v2567 = vsel %vm1453, %v2547, 0.0
  %2568 = vadd.xlane.f32.xlu0 %v2567
  %v2569 = vpop.xlane.xlu0 %2568
  %v2570 = vsel %vm1453, %v2548, 0.0
  %2571 = vadd.xlane.f32.xlu0 %v2570
  %v2572 = vpop.xlane.xlu0 %2571
  %v2573 = vrot.slane %v2551, 4
  %v2574 = vadd.f32 %v2551, %v2573
  %v2575 = vrot.slane %v2574, 2
  %v2576 = vadd.f32 %v2574, %v2575
  %v2577 = vrot.slane %v2576, 1
  %v2578 = vadd.f32 %v2576, %v2577
  %v2579 = vrot.slane %v2554, 4
  %v2580 = vadd.f32 %v2554, %v2579
  %v2581 = vrot.slane %v2580, 2
  %v2582 = vadd.f32 %v2580, %v2581
  %v2583 = vrot.slane %v2582, 1
  %v2584 = vadd.f32 %v2582, %v2583
  %v2585 = vrot.slane %v2557, 4
  %v2586 = vadd.f32 %v2557, %v2585
  %v2587 = vrot.slane %v2586, 2
  %v2588 = vadd.f32 %v2586, %v2587
  %v2589 = vrot.slane %v2588, 1
  %v2590 = vadd.f32 %v2588, %v2589
  %v2591 = vrot.slane %v2560, 4
  %v2592 = vadd.f32 %v2560, %v2591
  %v2593 = vrot.slane %v2592, 2
  %v2594 = vadd.f32 %v2592, %v2593
  %v2595 = vrot.slane %v2594, 1
  %v2596 = vadd.f32 %v2594, %v2595
  %v2597 = vrot.slane %v2563, 4
  %v2598 = vadd.f32 %v2563, %v2597
  %v2599 = vrot.slane %v2598, 2
  %v2600 = vadd.f32 %v2598, %v2599
  %v2601 = vrot.slane %v2600, 1
  %v2602 = vadd.f32 %v2600, %v2601
  %v2603 = vrot.slane %v2566, 4
  %v2604 = vadd.f32 %v2566, %v2603
  %v2605 = vrot.slane %v2604, 2
  %v2606 = vadd.f32 %v2604, %v2605
  %v2607 = vrot.slane %v2606, 1
  %v2608 = vadd.f32 %v2606, %v2607
  %v2609 = vrot.slane %v2569, 4
  %v2610 = vadd.f32 %v2569, %v2609
  %v2611 = vrot.slane %v2610, 2
  %v2612 = vadd.f32 %v2610, %v2611
  %v2613 = vrot.slane %v2612, 1
  %v2614 = vadd.f32 %v2612, %v2613
  %v2615 = vrot.slane %v2572, 4
  %v2616 = vadd.f32 %v2572, %v2615
  %v2617 = vrot.slane %v2616, 2
  %v2618 = vadd.f32 %v2616, %v2617
  %v2619 = vrot.slane %v2618, 1
  %v2620 = vadd.f32 %v2618, %v2619
  %v2621 = vadd.f32 %v2330, %v2578
  %v2622 = vadd.f32 %v2331, %v2584
  %v2623 = vadd.f32 %v2332, %v2590
  %v2624 = vadd.f32 %v2333, %v2596
  %v2625 = vadd.f32 %v2334, %v2602
  %v2626 = vadd.f32 %v2335, %v2608
  %v2627 = vadd.f32 %v2336, %v2614
  %v2628 = vadd.f32 %v2337, %v2620
  %vm2629 = vcmp.ne.f32.partialorder %v2541, 0.0
  %vm2630 = vcmp.ne.f32.partialorder %v2542, 0.0
  %vm2631 = vcmp.ne.f32.partialorder %v2543, 0.0
  %vm2632 = vcmp.ne.f32.partialorder %v2544, 0.0
  %vm2633 = vcmp.ne.f32.partialorder %v2545, 0.0
  %vm2634 = vcmp.ne.f32.partialorder %v2546, 0.0
  %vm2635 = vcmp.ne.f32.partialorder %v2547, 0.0
  %vm2636 = vcmp.ne.f32.partialorder %v2548, 0.0
  %v2637 = vsel %vm2629, 1, 0
  %v2638 = vsel %vm2630, 1, 0
  %v2639 = vsel %vm2631, 1, 0
  %v2640 = vsel %vm2632, 1, 0
  %v2641 = vsel %vm2633, 1, 0
  %v2642 = vsel %vm2634, 1, 0
  %v2643 = vsel %vm2635, 1, 0
  %v2644 = vsel %vm2636, 1, 0
  %v2645 = vcvt.s32.f32 %v2637
  %v2646 = vcvt.s32.f32 %v2638
  %v2647 = vcvt.s32.f32 %v2639
  %v2648 = vcvt.s32.f32 %v2640
  %v2649 = vcvt.s32.f32 %v2641
  %v2650 = vcvt.s32.f32 %v2642
  %v2651 = vcvt.s32.f32 %v2643
  %v2652 = vcvt.s32.f32 %v2644
  %v2653 = vsel %vm1453, %v2645, 0.0
  %2654 = vadd.xlane.f32.xlu0 %v2653
  %v2655 = vpop.xlane.xlu0 %2654
  %v2656 = vsel %vm1453, %v2646, 0.0
  %2657 = vadd.xlane.f32.xlu0 %v2656
  %v2658 = vpop.xlane.xlu0 %2657
  %v2659 = vsel %vm1453, %v2647, 0.0
  %2660 = vadd.xlane.f32.xlu0 %v2659
  %v2661 = vpop.xlane.xlu0 %2660
  %v2662 = vsel %vm1453, %v2648, 0.0
  %2663 = vadd.xlane.f32.xlu0 %v2662
  %v2664 = vpop.xlane.xlu0 %2663
  %v2665 = vsel %vm1453, %v2649, 0.0
  %2666 = vadd.xlane.f32.xlu0 %v2665
  %v2667 = vpop.xlane.xlu0 %2666
  %v2668 = vsel %vm1453, %v2650, 0.0
  %2669 = vadd.xlane.f32.xlu0 %v2668
  %v2670 = vpop.xlane.xlu0 %2669
  %v2671 = vsel %vm1453, %v2651, 0.0
  %2672 = vadd.xlane.f32.xlu0 %v2671
  %v2673 = vpop.xlane.xlu0 %2672
  %v2674 = vsel %vm1453, %v2652, 0.0
  %2675 = vadd.xlane.f32.xlu0 %v2674
  %v2676 = vpop.xlane.xlu0 %2675
  %v2677 = vrot.slane %v2655, 4
  %v2678 = vadd.f32 %v2655, %v2677
  %v2679 = vrot.slane %v2678, 2
  %v2680 = vadd.f32 %v2678, %v2679
  %v2681 = vrot.slane %v2680, 1
  %v2682 = vadd.f32 %v2680, %v2681
  %v2683 = vrot.slane %v2658, 4
  %v2684 = vadd.f32 %v2658, %v2683
  %v2685 = vrot.slane %v2684, 2
  %v2686 = vadd.f32 %v2684, %v2685
  %v2687 = vrot.slane %v2686, 1
  %v2688 = vadd.f32 %v2686, %v2687
  %v2689 = vrot.slane %v2661, 4
  %v2690 = vadd.f32 %v2661, %v2689
  %v2691 = vrot.slane %v2690, 2
  %v2692 = vadd.f32 %v2690, %v2691
  %v2693 = vrot.slane %v2692, 1
  %v2694 = vadd.f32 %v2692, %v2693
  %v2695 = vrot.slane %v2664, 4
  %v2696 = vadd.f32 %v2664, %v2695
  %v2697 = vrot.slane %v2696, 2
  %v2698 = vadd.f32 %v2696, %v2697
  %v2699 = vrot.slane %v2698, 1
  %v2700 = vadd.f32 %v2698, %v2699
  %v2701 = vrot.slane %v2667, 4
  %v2702 = vadd.f32 %v2667, %v2701
  %v2703 = vrot.slane %v2702, 2
  %v2704 = vadd.f32 %v2702, %v2703
  %v2705 = vrot.slane %v2704, 1
  %v2706 = vadd.f32 %v2704, %v2705
  %v2707 = vrot.slane %v2670, 4
  %v2708 = vadd.f32 %v2670, %v2707
  %v2709 = vrot.slane %v2708, 2
  %v2710 = vadd.f32 %v2708, %v2709
  %v2711 = vrot.slane %v2710, 1
  %v2712 = vadd.f32 %v2710, %v2711
  %v2713 = vrot.slane %v2673, 4
  %v2714 = vadd.f32 %v2673, %v2713
  %v2715 = vrot.slane %v2714, 2
  %v2716 = vadd.f32 %v2714, %v2715
  %v2717 = vrot.slane %v2716, 1
  %v2718 = vadd.f32 %v2716, %v2717
  %v2719 = vrot.slane %v2676, 4
  %v2720 = vadd.f32 %v2676, %v2719
  %v2721 = vrot.slane %v2720, 2
  %v2722 = vadd.f32 %v2720, %v2721
  %v2723 = vrot.slane %v2722, 1
  %v2724 = vadd.f32 %v2722, %v2723
  %v2725 = vadd.f32 %v2434, %v2682
  %v2726 = vadd.f32 %v2435, %v2688
  %v2727 = vadd.f32 %v2436, %v2694
  %v2728 = vadd.f32 %v2437, %v2700
  %v2729 = vadd.f32 %v2438, %v2706
  %v2730 = vadd.f32 %v2439, %v2712
  %v2731 = vadd.f32 %v2440, %v2718
  %v2732 = vadd.f32 %v2441, %v2724
  %vm2733 = vcmp.eq.s32.totalorder %v1568, 4
  %v2734 = vsel %vm2733, 1, 0
  %v2735 = vcvt.s32.f32 %v2734
  %v2736 = vmul.f32 %v1403, %v2735
  %v2737 = vmul.f32 %v1410, %v2735
  %v2738 = vmul.f32 %v1417, %v2735
  %v2739 = vmul.f32 %v1424, %v2735
  %v2740 = vmul.f32 %v1431, %v2735
  %v2741 = vmul.f32 %v1438, %v2735
  %v2742 = vmul.f32 %v1445, %v2735
  %v2743 = vmul.f32 %v1452, %v2735
  %v2744 = vsel %vm1453, %v2736, 0.0
  %2745 = vadd.xlane.f32.xlu0 %v2744
  %v2746 = vpop.xlane.xlu0 %2745
  %v2747 = vsel %vm1453, %v2737, 0.0
  %2748 = vadd.xlane.f32.xlu0 %v2747
  %v2749 = vpop.xlane.xlu0 %2748
  %v2750 = vsel %vm1453, %v2738, 0.0
  %2751 = vadd.xlane.f32.xlu0 %v2750
  %v2752 = vpop.xlane.xlu0 %2751
  %v2753 = vsel %vm1453, %v2739, 0.0
  %2754 = vadd.xlane.f32.xlu0 %v2753
  %v2755 = vpop.xlane.xlu0 %2754
  %v2756 = vsel %vm1453, %v2740, 0.0
  %2757 = vadd.xlane.f32.xlu0 %v2756
  %v2758 = vpop.xlane.xlu0 %2757
  %v2759 = vsel %vm1453, %v2741, 0.0
  %2760 = vadd.xlane.f32.xlu0 %v2759
  %v2761 = vpop.xlane.xlu0 %2760
  %v2762 = vsel %vm1453, %v2742, 0.0
  %2763 = vadd.xlane.f32.xlu0 %v2762
  %v2764 = vpop.xlane.xlu0 %2763
  %v2765 = vsel %vm1453, %v2743, 0.0
  %2766 = vadd.xlane.f32.xlu0 %v2765
  %v2767 = vpop.xlane.xlu0 %2766
  %v2768 = vmul.f32 %v113, %v2735
  %v2769 = vmul.f32 %v114, %v2735
  %v2770 = vmul.f32 %v115, %v2735
  %v2771 = vmul.f32 %v116, %v2735
  %v2772 = vmul.f32 %v117, %v2735
  %v2773 = vmul.f32 %v118, %v2735
  %v2774 = vmul.f32 %v119, %v2735
  %v2775 = vmul.f32 %v120, %v2735
  %v2776 = vsel %vm1453, %v2768, 0.0
  %2777 = vadd.xlane.f32.xlu0 %v2776
  %v2778 = vpop.xlane.xlu0 %2777
  %v2779 = vsel %vm1453, %v2769, 0.0
  %2780 = vadd.xlane.f32.xlu0 %v2779
  %v2781 = vpop.xlane.xlu0 %2780
  %v2782 = vsel %vm1453, %v2770, 0.0
  %2783 = vadd.xlane.f32.xlu0 %v2782
  %v2784 = vpop.xlane.xlu0 %2783
  %v2785 = vsel %vm1453, %v2771, 0.0
  %2786 = vadd.xlane.f32.xlu0 %v2785
  %v2787 = vpop.xlane.xlu0 %2786
  %v2788 = vsel %vm1453, %v2772, 0.0
  %2789 = vadd.xlane.f32.xlu0 %v2788
  %v2790 = vpop.xlane.xlu0 %2789
  %v2791 = vsel %vm1453, %v2773, 0.0
  %2792 = vadd.xlane.f32.xlu0 %v2791
  %v2793 = vpop.xlane.xlu0 %2792
  %v2794 = vsel %vm1453, %v2774, 0.0
  %2795 = vadd.xlane.f32.xlu0 %v2794
  %v2796 = vpop.xlane.xlu0 %2795
  %v2797 = vsel %vm1453, %v2775, 0.0
  %2798 = vadd.xlane.f32.xlu0 %v2797
  %v2799 = vpop.xlane.xlu0 %2798
  %v2800 = vmul.f32 %v2778, %v121
  %v2801 = vmul.f32 %v2781, %v122
  %v2802 = vmul.f32 %v2784, %v123
  %v2803 = vmul.f32 %v2787, %v124
  %v2804 = vmul.f32 %v2790, %v125
  %v2805 = vmul.f32 %v2793, %v126
  %v2806 = vmul.f32 %v2796, %v127
  %v2807 = vmul.f32 %v2799, %v128
  %v2808 = vadd.f32 %v2746, 0.2
  %v2809 = vadd.f32 %v2749, 0.2
  %v2810 = vadd.f32 %v2752, 0.2
  %v2811 = vadd.f32 %v2755, 0.2
  %v2812 = vadd.f32 %v2758, 0.2
  %v2813 = vadd.f32 %v2761, 0.2
  %v2814 = vadd.f32 %v2764, 0.2
  %v2815 = vadd.f32 %v2767, 0.2
  %v2816 = vsub.f32 %v2808, %v1403
  %v2817 = vsub.f32 %v2809, %v1410
  %v2818 = vsub.f32 %v2810, %v1417
  %v2819 = vsub.f32 %v2811, %v1424
  %v2820 = vsub.f32 %v2812, %v1431
  %v2821 = vsub.f32 %v2813, %v1438
  %v2822 = vsub.f32 %v2814, %v1445
  %v2823 = vsub.f32 %v2815, %v1452
  %v2824 = vmax.f32 %v2816, 0.0
  %v2825 = vmax.f32 %v2817, 0.0
  %v2826 = vmax.f32 %v2818, 0.0
  %v2827 = vmax.f32 %v2819, 0.0
  %v2828 = vmax.f32 %v2820, 0.0
  %v2829 = vmax.f32 %v2821, 0.0
  %v2830 = vmax.f32 %v2822, 0.0
  %v2831 = vmax.f32 %v2823, 0.0
  %v2832 = vmul.f32 %v2824, %v2800
  %v2833 = vmul.f32 %v2825, %v2801
  %v2834 = vmul.f32 %v2826, %v2802
  %v2835 = vmul.f32 %v2827, %v2803
  %v2836 = vmul.f32 %v2828, %v2804
  %v2837 = vmul.f32 %v2829, %v2805
  %v2838 = vmul.f32 %v2830, %v2806
  %v2839 = vmul.f32 %v2831, %v2807
  %v2840 = vsel %vm1453, %v2832, 0.0
  %2841 = vadd.xlane.f32.xlu0 %v2840
  %v2842 = vpop.xlane.xlu0 %2841
  %v2843 = vsel %vm1453, %v2833, 0.0
  %2844 = vadd.xlane.f32.xlu0 %v2843
  %v2845 = vpop.xlane.xlu0 %2844
  %v2846 = vsel %vm1453, %v2834, 0.0
  %2847 = vadd.xlane.f32.xlu0 %v2846
  %v2848 = vpop.xlane.xlu0 %2847
  %v2849 = vsel %vm1453, %v2835, 0.0
  %2850 = vadd.xlane.f32.xlu0 %v2849
  %v2851 = vpop.xlane.xlu0 %2850
  %v2852 = vsel %vm1453, %v2836, 0.0
  %2853 = vadd.xlane.f32.xlu0 %v2852
  %v2854 = vpop.xlane.xlu0 %2853
  %v2855 = vsel %vm1453, %v2837, 0.0
  %2856 = vadd.xlane.f32.xlu0 %v2855
  %v2857 = vpop.xlane.xlu0 %2856
  %v2858 = vsel %vm1453, %v2838, 0.0
  %2859 = vadd.xlane.f32.xlu0 %v2858
  %v2860 = vpop.xlane.xlu0 %2859
  %v2861 = vsel %vm1453, %v2839, 0.0
  %2862 = vadd.xlane.f32.xlu0 %v2861
  %v2863 = vpop.xlane.xlu0 %2862
  %v2864 = vrot.slane %v2842, 4
  %v2865 = vadd.f32 %v2842, %v2864
  %v2866 = vrot.slane %v2865, 2
  %v2867 = vadd.f32 %v2865, %v2866
  %v2868 = vrot.slane %v2867, 1
  %v2869 = vadd.f32 %v2867, %v2868
  %v2870 = vrot.slane %v2845, 4
  %v2871 = vadd.f32 %v2845, %v2870
  %v2872 = vrot.slane %v2871, 2
  %v2873 = vadd.f32 %v2871, %v2872
  %v2874 = vrot.slane %v2873, 1
  %v2875 = vadd.f32 %v2873, %v2874
  %v2876 = vrot.slane %v2848, 4
  %v2877 = vadd.f32 %v2848, %v2876
  %v2878 = vrot.slane %v2877, 2
  %v2879 = vadd.f32 %v2877, %v2878
  %v2880 = vrot.slane %v2879, 1
  %v2881 = vadd.f32 %v2879, %v2880
  %v2882 = vrot.slane %v2851, 4
  %v2883 = vadd.f32 %v2851, %v2882
  %v2884 = vrot.slane %v2883, 2
  %v2885 = vadd.f32 %v2883, %v2884
  %v2886 = vrot.slane %v2885, 1
  %v2887 = vadd.f32 %v2885, %v2886
  %v2888 = vrot.slane %v2854, 4
  %v2889 = vadd.f32 %v2854, %v2888
  %v2890 = vrot.slane %v2889, 2
  %v2891 = vadd.f32 %v2889, %v2890
  %v2892 = vrot.slane %v2891, 1
  %v2893 = vadd.f32 %v2891, %v2892
  %v2894 = vrot.slane %v2857, 4
  %v2895 = vadd.f32 %v2857, %v2894
  %v2896 = vrot.slane %v2895, 2
  %v2897 = vadd.f32 %v2895, %v2896
  %v2898 = vrot.slane %v2897, 1
  %v2899 = vadd.f32 %v2897, %v2898
  %v2900 = vrot.slane %v2860, 4
  %v2901 = vadd.f32 %v2860, %v2900
  %v2902 = vrot.slane %v2901, 2
  %v2903 = vadd.f32 %v2901, %v2902
  %v2904 = vrot.slane %v2903, 1
  %v2905 = vadd.f32 %v2903, %v2904
  %v2906 = vrot.slane %v2863, 4
  %v2907 = vadd.f32 %v2863, %v2906
  %v2908 = vrot.slane %v2907, 2
  %v2909 = vadd.f32 %v2907, %v2908
  %v2910 = vrot.slane %v2909, 1
  %v2911 = vadd.f32 %v2909, %v2910
  %v2912 = vadd.f32 %v2621, %v2869
  %v2913 = vadd.f32 %v2622, %v2875
  %v2914 = vadd.f32 %v2623, %v2881
  %v2915 = vadd.f32 %v2624, %v2887
  %v2916 = vadd.f32 %v2625, %v2893
  %v2917 = vadd.f32 %v2626, %v2899
  %v2918 = vadd.f32 %v2627, %v2905
  %v2919 = vadd.f32 %v2628, %v2911
  %vm2920 = vcmp.ne.f32.partialorder %v2832, 0.0
  %vm2921 = vcmp.ne.f32.partialorder %v2833, 0.0
  %vm2922 = vcmp.ne.f32.partialorder %v2834, 0.0
  %vm2923 = vcmp.ne.f32.partialorder %v2835, 0.0
  %vm2924 = vcmp.ne.f32.partialorder %v2836, 0.0
  %vm2925 = vcmp.ne.f32.partialorder %v2837, 0.0
  %vm2926 = vcmp.ne.f32.partialorder %v2838, 0.0
  %vm2927 = vcmp.ne.f32.partialorder %v2839, 0.0
  %v2928 = vsel %vm2920, 1, 0
  %v2929 = vsel %vm2921, 1, 0
  %v2930 = vsel %vm2922, 1, 0
  %v2931 = vsel %vm2923, 1, 0
  %v2932 = vsel %vm2924, 1, 0
  %v2933 = vsel %vm2925, 1, 0
  %v2934 = vsel %vm2926, 1, 0
  %v2935 = vsel %vm2927, 1, 0
  %v2936 = vcvt.s32.f32 %v2928
  %v2937 = vcvt.s32.f32 %v2929
  %v2938 = vcvt.s32.f32 %v2930
  %v2939 = vcvt.s32.f32 %v2931
  %v2940 = vcvt.s32.f32 %v2932
  %v2941 = vcvt.s32.f32 %v2933
  %v2942 = vcvt.s32.f32 %v2934
  %v2943 = vcvt.s32.f32 %v2935
  %v2944 = vsel %vm1453, %v2936, 0.0
  %2945 = vadd.xlane.f32.xlu0 %v2944
  %v2946 = vpop.xlane.xlu0 %2945
  %v2947 = vsel %vm1453, %v2937, 0.0
  %2948 = vadd.xlane.f32.xlu0 %v2947
  %v2949 = vpop.xlane.xlu0 %2948
  %v2950 = vsel %vm1453, %v2938, 0.0
  %2951 = vadd.xlane.f32.xlu0 %v2950
  %v2952 = vpop.xlane.xlu0 %2951
  %v2953 = vsel %vm1453, %v2939, 0.0
  %2954 = vadd.xlane.f32.xlu0 %v2953
  %v2955 = vpop.xlane.xlu0 %2954
  %v2956 = vsel %vm1453, %v2940, 0.0
  %2957 = vadd.xlane.f32.xlu0 %v2956
  %v2958 = vpop.xlane.xlu0 %2957
  %v2959 = vsel %vm1453, %v2941, 0.0
  %2960 = vadd.xlane.f32.xlu0 %v2959
  %v2961 = vpop.xlane.xlu0 %2960
  %v2962 = vsel %vm1453, %v2942, 0.0
  %2963 = vadd.xlane.f32.xlu0 %v2962
  %v2964 = vpop.xlane.xlu0 %2963
  %v2965 = vsel %vm1453, %v2943, 0.0
  %2966 = vadd.xlane.f32.xlu0 %v2965
  %v2967 = vpop.xlane.xlu0 %2966
  %v2968 = vrot.slane %v2946, 4
  %v2969 = vadd.f32 %v2946, %v2968
  %v2970 = vrot.slane %v2969, 2
  %v2971 = vadd.f32 %v2969, %v2970
  %v2972 = vrot.slane %v2971, 1
  %v2973 = vadd.f32 %v2971, %v2972
  %v2974 = vrot.slane %v2949, 4
  %v2975 = vadd.f32 %v2949, %v2974
  %v2976 = vrot.slane %v2975, 2
  %v2977 = vadd.f32 %v2975, %v2976
  %v2978 = vrot.slane %v2977, 1
  %v2979 = vadd.f32 %v2977, %v2978
  %v2980 = vrot.slane %v2952, 4
  %v2981 = vadd.f32 %v2952, %v2980
  %v2982 = vrot.slane %v2981, 2
  %v2983 = vadd.f32 %v2981, %v2982
  %v2984 = vrot.slane %v2983, 1
  %v2985 = vadd.f32 %v2983, %v2984
  %v2986 = vrot.slane %v2955, 4
  %v2987 = vadd.f32 %v2955, %v2986
  %v2988 = vrot.slane %v2987, 2
  %v2989 = vadd.f32 %v2987, %v2988
  %v2990 = vrot.slane %v2989, 1
  %v2991 = vadd.f32 %v2989, %v2990
  %v2992 = vrot.slane %v2958, 4
  %v2993 = vadd.f32 %v2958, %v2992
  %v2994 = vrot.slane %v2993, 2
  %v2995 = vadd.f32 %v2993, %v2994
  %v2996 = vrot.slane %v2995, 1
  %v2997 = vadd.f32 %v2995, %v2996
  %v2998 = vrot.slane %v2961, 4
  %v2999 = vadd.f32 %v2961, %v2998
  %v3000 = vrot.slane %v2999, 2
  %v3001 = vadd.f32 %v2999, %v3000
  %v3002 = vrot.slane %v3001, 1
  %v3003 = vadd.f32 %v3001, %v3002
  %v3004 = vrot.slane %v2964, 4
  %v3005 = vadd.f32 %v2964, %v3004
  %v3006 = vrot.slane %v3005, 2
  %v3007 = vadd.f32 %v3005, %v3006
  %v3008 = vrot.slane %v3007, 1
  %v3009 = vadd.f32 %v3007, %v3008
  %v3010 = vrot.slane %v2967, 4
  %v3011 = vadd.f32 %v2967, %v3010
  %v3012 = vrot.slane %v3011, 2
  %v3013 = vadd.f32 %v3011, %v3012
  %v3014 = vrot.slane %v3013, 1
  %v3015 = vadd.f32 %v3013, %v3014
  %v3016 = vadd.f32 %v2725, %v2973
  %v3017 = vadd.f32 %v2726, %v2979
  %v3018 = vadd.f32 %v2727, %v2985
  %v3019 = vadd.f32 %v2728, %v2991
  %v3020 = vadd.f32 %v2729, %v2997
  %v3021 = vadd.f32 %v2730, %v3003
  %v3022 = vadd.f32 %v2731, %v3009
  %v3023 = vadd.f32 %v2732, %v3015
  %vm3024 = vcmp.eq.s32.totalorder %v1568, 5
  %v3025 = vsel %vm3024, 1, 0
  %v3026 = vcvt.s32.f32 %v3025
  %v3027 = vmul.f32 %v1403, %v3026
  %v3028 = vmul.f32 %v1410, %v3026
  %v3029 = vmul.f32 %v1417, %v3026
  %v3030 = vmul.f32 %v1424, %v3026
  %v3031 = vmul.f32 %v1431, %v3026
  %v3032 = vmul.f32 %v1438, %v3026
  %v3033 = vmul.f32 %v1445, %v3026
  %v3034 = vmul.f32 %v1452, %v3026
  %v3035 = vsel %vm1453, %v3027, 0.0
  %3036 = vadd.xlane.f32.xlu0 %v3035
  %v3037 = vpop.xlane.xlu0 %3036
  %v3038 = vsel %vm1453, %v3028, 0.0
  %3039 = vadd.xlane.f32.xlu0 %v3038
  %v3040 = vpop.xlane.xlu0 %3039
  %v3041 = vsel %vm1453, %v3029, 0.0
  %3042 = vadd.xlane.f32.xlu0 %v3041
  %v3043 = vpop.xlane.xlu0 %3042
  %v3044 = vsel %vm1453, %v3030, 0.0
  %3045 = vadd.xlane.f32.xlu0 %v3044
  %v3046 = vpop.xlane.xlu0 %3045
  %v3047 = vsel %vm1453, %v3031, 0.0
  %3048 = vadd.xlane.f32.xlu0 %v3047
  %v3049 = vpop.xlane.xlu0 %3048
  %v3050 = vsel %vm1453, %v3032, 0.0
  %3051 = vadd.xlane.f32.xlu0 %v3050
  %v3052 = vpop.xlane.xlu0 %3051
  %v3053 = vsel %vm1453, %v3033, 0.0
  %3054 = vadd.xlane.f32.xlu0 %v3053
  %v3055 = vpop.xlane.xlu0 %3054
  %v3056 = vsel %vm1453, %v3034, 0.0
  %3057 = vadd.xlane.f32.xlu0 %v3056
  %v3058 = vpop.xlane.xlu0 %3057
  %v3059 = vmul.f32 %v113, %v3026
  %v3060 = vmul.f32 %v114, %v3026
  %v3061 = vmul.f32 %v115, %v3026
  %v3062 = vmul.f32 %v116, %v3026
  %v3063 = vmul.f32 %v117, %v3026
  %v3064 = vmul.f32 %v118, %v3026
  %v3065 = vmul.f32 %v119, %v3026
  %v3066 = vmul.f32 %v120, %v3026
  %v3067 = vsel %vm1453, %v3059, 0.0
  %3068 = vadd.xlane.f32.xlu0 %v3067
  %v3069 = vpop.xlane.xlu0 %3068
  %v3070 = vsel %vm1453, %v3060, 0.0
  %3071 = vadd.xlane.f32.xlu0 %v3070
  %v3072 = vpop.xlane.xlu0 %3071
  %v3073 = vsel %vm1453, %v3061, 0.0
  %3074 = vadd.xlane.f32.xlu0 %v3073
  %v3075 = vpop.xlane.xlu0 %3074
  %v3076 = vsel %vm1453, %v3062, 0.0
  %3077 = vadd.xlane.f32.xlu0 %v3076
  %v3078 = vpop.xlane.xlu0 %3077
  %v3079 = vsel %vm1453, %v3063, 0.0
  %3080 = vadd.xlane.f32.xlu0 %v3079
  %v3081 = vpop.xlane.xlu0 %3080
  %v3082 = vsel %vm1453, %v3064, 0.0
  %3083 = vadd.xlane.f32.xlu0 %v3082
  %v3084 = vpop.xlane.xlu0 %3083
  %v3085 = vsel %vm1453, %v3065, 0.0
  %3086 = vadd.xlane.f32.xlu0 %v3085
  %v3087 = vpop.xlane.xlu0 %3086
  %v3088 = vsel %vm1453, %v3066, 0.0
  %3089 = vadd.xlane.f32.xlu0 %v3088
  %v3090 = vpop.xlane.xlu0 %3089
  %v3091 = vmul.f32 %v3069, %v121
  %v3092 = vmul.f32 %v3072, %v122
  %v3093 = vmul.f32 %v3075, %v123
  %v3094 = vmul.f32 %v3078, %v124
  %v3095 = vmul.f32 %v3081, %v125
  %v3096 = vmul.f32 %v3084, %v126
  %v3097 = vmul.f32 %v3087, %v127
  %v3098 = vmul.f32 %v3090, %v128
  %v3099 = vadd.f32 %v3037, 0.2
  %v3100 = vadd.f32 %v3040, 0.2
  %v3101 = vadd.f32 %v3043, 0.2
  %v3102 = vadd.f32 %v3046, 0.2
  %v3103 = vadd.f32 %v3049, 0.2
  %v3104 = vadd.f32 %v3052, 0.2
  %v3105 = vadd.f32 %v3055, 0.2
  %v3106 = vadd.f32 %v3058, 0.2
  %v3107 = vsub.f32 %v3099, %v1403
  %v3108 = vsub.f32 %v3100, %v1410
  %v3109 = vsub.f32 %v3101, %v1417
  %v3110 = vsub.f32 %v3102, %v1424
  %v3111 = vsub.f32 %v3103, %v1431
  %v3112 = vsub.f32 %v3104, %v1438
  %v3113 = vsub.f32 %v3105, %v1445
  %v3114 = vsub.f32 %v3106, %v1452
  %v3115 = vmax.f32 %v3107, 0.0
  %v3116 = vmax.f32 %v3108, 0.0
  %v3117 = vmax.f32 %v3109, 0.0
  %v3118 = vmax.f32 %v3110, 0.0
  %v3119 = vmax.f32 %v3111, 0.0
  %v3120 = vmax.f32 %v3112, 0.0
  %v3121 = vmax.f32 %v3113, 0.0
  %v3122 = vmax.f32 %v3114, 0.0
  %v3123 = vmul.f32 %v3115, %v3091
  %v3124 = vmul.f32 %v3116, %v3092
  %v3125 = vmul.f32 %v3117, %v3093
  %v3126 = vmul.f32 %v3118, %v3094
  %v3127 = vmul.f32 %v3119, %v3095
  %v3128 = vmul.f32 %v3120, %v3096
  %v3129 = vmul.f32 %v3121, %v3097
  %v3130 = vmul.f32 %v3122, %v3098
  %v3131 = vsel %vm1453, %v3123, 0.0
  %3132 = vadd.xlane.f32.xlu0 %v3131
  %v3133 = vpop.xlane.xlu0 %3132
  %v3134 = vsel %vm1453, %v3124, 0.0
  %3135 = vadd.xlane.f32.xlu0 %v3134
  %v3136 = vpop.xlane.xlu0 %3135
  %v3137 = vsel %vm1453, %v3125, 0.0
  %3138 = vadd.xlane.f32.xlu0 %v3137
  %v3139 = vpop.xlane.xlu0 %3138
  %v3140 = vsel %vm1453, %v3126, 0.0
  %3141 = vadd.xlane.f32.xlu0 %v3140
  %v3142 = vpop.xlane.xlu0 %3141
  %v3143 = vsel %vm1453, %v3127, 0.0
  %3144 = vadd.xlane.f32.xlu0 %v3143
  %v3145 = vpop.xlane.xlu0 %3144
  %v3146 = vsel %vm1453, %v3128, 0.0
  %3147 = vadd.xlane.f32.xlu0 %v3146
  %v3148 = vpop.xlane.xlu0 %3147
  %v3149 = vsel %vm1453, %v3129, 0.0
  %3150 = vadd.xlane.f32.xlu0 %v3149
  %v3151 = vpop.xlane.xlu0 %3150
  %v3152 = vsel %vm1453, %v3130, 0.0
  %3153 = vadd.xlane.f32.xlu0 %v3152
  %v3154 = vpop.xlane.xlu0 %3153
  %v3155 = vrot.slane %v3133, 4
  %v3156 = vadd.f32 %v3133, %v3155
  %v3157 = vrot.slane %v3156, 2
  %v3158 = vadd.f32 %v3156, %v3157
  %v3159 = vrot.slane %v3158, 1
  %v3160 = vadd.f32 %v3158, %v3159
  %v3161 = vrot.slane %v3136, 4
  %v3162 = vadd.f32 %v3136, %v3161
  %v3163 = vrot.slane %v3162, 2
  %v3164 = vadd.f32 %v3162, %v3163
  %v3165 = vrot.slane %v3164, 1
  %v3166 = vadd.f32 %v3164, %v3165
  %v3167 = vrot.slane %v3139, 4
  %v3168 = vadd.f32 %v3139, %v3167
  %v3169 = vrot.slane %v3168, 2
  %v3170 = vadd.f32 %v3168, %v3169
  %v3171 = vrot.slane %v3170, 1
  %v3172 = vadd.f32 %v3170, %v3171
  %v3173 = vrot.slane %v3142, 4
  %v3174 = vadd.f32 %v3142, %v3173
  %v3175 = vrot.slane %v3174, 2
  %v3176 = vadd.f32 %v3174, %v3175
  %v3177 = vrot.slane %v3176, 1
  %v3178 = vadd.f32 %v3176, %v3177
  %v3179 = vrot.slane %v3145, 4
  %v3180 = vadd.f32 %v3145, %v3179
  %v3181 = vrot.slane %v3180, 2
  %v3182 = vadd.f32 %v3180, %v3181
  %v3183 = vrot.slane %v3182, 1
  %v3184 = vadd.f32 %v3182, %v3183
  %v3185 = vrot.slane %v3148, 4
  %v3186 = vadd.f32 %v3148, %v3185
  %v3187 = vrot.slane %v3186, 2
  %v3188 = vadd.f32 %v3186, %v3187
  %v3189 = vrot.slane %v3188, 1
  %v3190 = vadd.f32 %v3188, %v3189
  %v3191 = vrot.slane %v3151, 4
  %v3192 = vadd.f32 %v3151, %v3191
  %v3193 = vrot.slane %v3192, 2
  %v3194 = vadd.f32 %v3192, %v3193
  %v3195 = vrot.slane %v3194, 1
  %v3196 = vadd.f32 %v3194, %v3195
  %v3197 = vrot.slane %v3154, 4
  %v3198 = vadd.f32 %v3154, %v3197
  %v3199 = vrot.slane %v3198, 2
  %v3200 = vadd.f32 %v3198, %v3199
  %v3201 = vrot.slane %v3200, 1
  %v3202 = vadd.f32 %v3200, %v3201
  %v3203 = vadd.f32 %v2912, %v3160
  %v3204 = vadd.f32 %v2913, %v3166
  %v3205 = vadd.f32 %v2914, %v3172
  %v3206 = vadd.f32 %v2915, %v3178
  %v3207 = vadd.f32 %v2916, %v3184
  %v3208 = vadd.f32 %v2917, %v3190
  %v3209 = vadd.f32 %v2918, %v3196
  %v3210 = vadd.f32 %v2919, %v3202
  %vm3211 = vcmp.ne.f32.partialorder %v3123, 0.0
  %vm3212 = vcmp.ne.f32.partialorder %v3124, 0.0
  %vm3213 = vcmp.ne.f32.partialorder %v3125, 0.0
  %vm3214 = vcmp.ne.f32.partialorder %v3126, 0.0
  %vm3215 = vcmp.ne.f32.partialorder %v3127, 0.0
  %vm3216 = vcmp.ne.f32.partialorder %v3128, 0.0
  %vm3217 = vcmp.ne.f32.partialorder %v3129, 0.0
  %vm3218 = vcmp.ne.f32.partialorder %v3130, 0.0
  %v3219 = vsel %vm3211, 1, 0
  %v3220 = vsel %vm3212, 1, 0
  %v3221 = vsel %vm3213, 1, 0
  %v3222 = vsel %vm3214, 1, 0
  %v3223 = vsel %vm3215, 1, 0
  %v3224 = vsel %vm3216, 1, 0
  %v3225 = vsel %vm3217, 1, 0
  %v3226 = vsel %vm3218, 1, 0
  %v3227 = vcvt.s32.f32 %v3219
  %v3228 = vcvt.s32.f32 %v3220
  %v3229 = vcvt.s32.f32 %v3221
  %v3230 = vcvt.s32.f32 %v3222
  %v3231 = vcvt.s32.f32 %v3223
  %v3232 = vcvt.s32.f32 %v3224
  %v3233 = vcvt.s32.f32 %v3225
  %v3234 = vcvt.s32.f32 %v3226
  %v3235 = vsel %vm1453, %v3227, 0.0
  %3236 = vadd.xlane.f32.xlu0 %v3235
  %v3237 = vpop.xlane.xlu0 %3236
  %v3238 = vsel %vm1453, %v3228, 0.0
  %3239 = vadd.xlane.f32.xlu0 %v3238
  %v3240 = vpop.xlane.xlu0 %3239
  %v3241 = vsel %vm1453, %v3229, 0.0
  %3242 = vadd.xlane.f32.xlu0 %v3241
  %v3243 = vpop.xlane.xlu0 %3242
  %v3244 = vsel %vm1453, %v3230, 0.0
  %3245 = vadd.xlane.f32.xlu0 %v3244
  %v3246 = vpop.xlane.xlu0 %3245
  %v3247 = vsel %vm1453, %v3231, 0.0
  %3248 = vadd.xlane.f32.xlu0 %v3247
  %v3249 = vpop.xlane.xlu0 %3248
  %v3250 = vsel %vm1453, %v3232, 0.0
  %3251 = vadd.xlane.f32.xlu0 %v3250
  %v3252 = vpop.xlane.xlu0 %3251
  %v3253 = vsel %vm1453, %v3233, 0.0
  %3254 = vadd.xlane.f32.xlu0 %v3253
  %v3255 = vpop.xlane.xlu0 %3254
  %v3256 = vsel %vm1453, %v3234, 0.0
  %3257 = vadd.xlane.f32.xlu0 %v3256
  %v3258 = vpop.xlane.xlu0 %3257
  %v3259 = vrot.slane %v3237, 4
  %v3260 = vadd.f32 %v3237, %v3259
  %v3261 = vrot.slane %v3260, 2
  %v3262 = vadd.f32 %v3260, %v3261
  %v3263 = vrot.slane %v3262, 1
  %v3264 = vadd.f32 %v3262, %v3263
  %v3265 = vrot.slane %v3240, 4
  %v3266 = vadd.f32 %v3240, %v3265
  %v3267 = vrot.slane %v3266, 2
  %v3268 = vadd.f32 %v3266, %v3267
  %v3269 = vrot.slane %v3268, 1
  %v3270 = vadd.f32 %v3268, %v3269
  %v3271 = vrot.slane %v3243, 4
  %v3272 = vadd.f32 %v3243, %v3271
  %v3273 = vrot.slane %v3272, 2
  %v3274 = vadd.f32 %v3272, %v3273
  %v3275 = vrot.slane %v3274, 1
  %v3276 = vadd.f32 %v3274, %v3275
  %v3277 = vrot.slane %v3246, 4
  %v3278 = vadd.f32 %v3246, %v3277
  %v3279 = vrot.slane %v3278, 2
  %v3280 = vadd.f32 %v3278, %v3279
  %v3281 = vrot.slane %v3280, 1
  %v3282 = vadd.f32 %v3280, %v3281
  %v3283 = vrot.slane %v3249, 4
  %v3284 = vadd.f32 %v3249, %v3283
  %v3285 = vrot.slane %v3284, 2
  %v3286 = vadd.f32 %v3284, %v3285
  %v3287 = vrot.slane %v3286, 1
  %v3288 = vadd.f32 %v3286, %v3287
  %v3289 = vrot.slane %v3252, 4
  %v3290 = vadd.f32 %v3252, %v3289
  %v3291 = vrot.slane %v3290, 2
  %v3292 = vadd.f32 %v3290, %v3291
  %v3293 = vrot.slane %v3292, 1
  %v3294 = vadd.f32 %v3292, %v3293
  %v3295 = vrot.slane %v3255, 4
  %v3296 = vadd.f32 %v3255, %v3295
  %v3297 = vrot.slane %v3296, 2
  %v3298 = vadd.f32 %v3296, %v3297
  %v3299 = vrot.slane %v3298, 1
  %v3300 = vadd.f32 %v3298, %v3299
  %v3301 = vrot.slane %v3258, 4
  %v3302 = vadd.f32 %v3258, %v3301
  %v3303 = vrot.slane %v3302, 2
  %v3304 = vadd.f32 %v3302, %v3303
  %v3305 = vrot.slane %v3304, 1
  %v3306 = vadd.f32 %v3304, %v3305
  %v3307 = vadd.f32 %v3016, %v3264
  %v3308 = vadd.f32 %v3017, %v3270
  %v3309 = vadd.f32 %v3018, %v3276
  %v3310 = vadd.f32 %v3019, %v3282
  %v3311 = vadd.f32 %v3020, %v3288
  %v3312 = vadd.f32 %v3021, %v3294
  %v3313 = vadd.f32 %v3022, %v3300
  %v3314 = vadd.f32 %v3023, %v3306
  %vm3315 = vcmp.eq.s32.totalorder %v1568, 6
  %v3316 = vsel %vm3315, 1, 0
  %v3317 = vcvt.s32.f32 %v3316
  %v3318 = vmul.f32 %v1403, %v3317
  %v3319 = vmul.f32 %v1410, %v3317
  %v3320 = vmul.f32 %v1417, %v3317
  %v3321 = vmul.f32 %v1424, %v3317
  %v3322 = vmul.f32 %v1431, %v3317
  %v3323 = vmul.f32 %v1438, %v3317
  %v3324 = vmul.f32 %v1445, %v3317
  %v3325 = vmul.f32 %v1452, %v3317
  %v3326 = vsel %vm1453, %v3318, 0.0
  %3327 = vadd.xlane.f32.xlu0 %v3326
  %v3328 = vpop.xlane.xlu0 %3327
  %v3329 = vsel %vm1453, %v3319, 0.0
  %3330 = vadd.xlane.f32.xlu0 %v3329
  %v3331 = vpop.xlane.xlu0 %3330
  %v3332 = vsel %vm1453, %v3320, 0.0
  %3333 = vadd.xlane.f32.xlu0 %v3332
  %v3334 = vpop.xlane.xlu0 %3333
  %v3335 = vsel %vm1453, %v3321, 0.0
  %3336 = vadd.xlane.f32.xlu0 %v3335
  %v3337 = vpop.xlane.xlu0 %3336
  %v3338 = vsel %vm1453, %v3322, 0.0
  %3339 = vadd.xlane.f32.xlu0 %v3338
  %v3340 = vpop.xlane.xlu0 %3339
  %v3341 = vsel %vm1453, %v3323, 0.0
  %3342 = vadd.xlane.f32.xlu0 %v3341
  %v3343 = vpop.xlane.xlu0 %3342
  %v3344 = vsel %vm1453, %v3324, 0.0
  %3345 = vadd.xlane.f32.xlu0 %v3344
  %v3346 = vpop.xlane.xlu0 %3345
  %v3347 = vsel %vm1453, %v3325, 0.0
  %3348 = vadd.xlane.f32.xlu0 %v3347
  %v3349 = vpop.xlane.xlu0 %3348
  %v3350 = vmul.f32 %v113, %v3317
  %v3351 = vmul.f32 %v114, %v3317
  %v3352 = vmul.f32 %v115, %v3317
  %v3353 = vmul.f32 %v116, %v3317
  %v3354 = vmul.f32 %v117, %v3317
  %v3355 = vmul.f32 %v118, %v3317
  %v3356 = vmul.f32 %v119, %v3317
  %v3357 = vmul.f32 %v120, %v3317
  %v3358 = vsel %vm1453, %v3350, 0.0
  %3359 = vadd.xlane.f32.xlu0 %v3358
  %v3360 = vpop.xlane.xlu0 %3359
  %v3361 = vsel %vm1453, %v3351, 0.0
  %3362 = vadd.xlane.f32.xlu0 %v3361
  %v3363 = vpop.xlane.xlu0 %3362
  %v3364 = vsel %vm1453, %v3352, 0.0
  %3365 = vadd.xlane.f32.xlu0 %v3364
  %v3366 = vpop.xlane.xlu0 %3365
  %v3367 = vsel %vm1453, %v3353, 0.0
  %3368 = vadd.xlane.f32.xlu0 %v3367
  %v3369 = vpop.xlane.xlu0 %3368
  %v3370 = vsel %vm1453, %v3354, 0.0
  %3371 = vadd.xlane.f32.xlu0 %v3370
  %v3372 = vpop.xlane.xlu0 %3371
  %v3373 = vsel %vm1453, %v3355, 0.0
  %3374 = vadd.xlane.f32.xlu0 %v3373
  %v3375 = vpop.xlane.xlu0 %3374
  %v3376 = vsel %vm1453, %v3356, 0.0
  %3377 = vadd.xlane.f32.xlu0 %v3376
  %v3378 = vpop.xlane.xlu0 %3377
  %v3379 = vsel %vm1453, %v3357, 0.0
  %3380 = vadd.xlane.f32.xlu0 %v3379
  %v3381 = vpop.xlane.xlu0 %3380
  %v3382 = vmul.f32 %v3360, %v121
  %v3383 = vmul.f32 %v3363, %v122
  %v3384 = vmul.f32 %v3366, %v123
  %v3385 = vmul.f32 %v3369, %v124
  %v3386 = vmul.f32 %v3372, %v125
  %v3387 = vmul.f32 %v3375, %v126
  %v3388 = vmul.f32 %v3378, %v127
  %v3389 = vmul.f32 %v3381, %v128
  %v3390 = vadd.f32 %v3328, 0.2
  %v3391 = vadd.f32 %v3331, 0.2
  %v3392 = vadd.f32 %v3334, 0.2
  %v3393 = vadd.f32 %v3337, 0.2
  %v3394 = vadd.f32 %v3340, 0.2
  %v3395 = vadd.f32 %v3343, 0.2
  %v3396 = vadd.f32 %v3346, 0.2
  %v3397 = vadd.f32 %v3349, 0.2
  %v3398 = vsub.f32 %v3390, %v1403
  %v3399 = vsub.f32 %v3391, %v1410
  %v3400 = vsub.f32 %v3392, %v1417
  %v3401 = vsub.f32 %v3393, %v1424
  %v3402 = vsub.f32 %v3394, %v1431
  %v3403 = vsub.f32 %v3395, %v1438
  %v3404 = vsub.f32 %v3396, %v1445
  %v3405 = vsub.f32 %v3397, %v1452
  %v3406 = vmax.f32 %v3398, 0.0
  %v3407 = vmax.f32 %v3399, 0.0
  %v3408 = vmax.f32 %v3400, 0.0
  %v3409 = vmax.f32 %v3401, 0.0
  %v3410 = vmax.f32 %v3402, 0.0
  %v3411 = vmax.f32 %v3403, 0.0
  %v3412 = vmax.f32 %v3404, 0.0
  %v3413 = vmax.f32 %v3405, 0.0
  %v3414 = vmul.f32 %v3406, %v3382
  %v3415 = vmul.f32 %v3407, %v3383
  %v3416 = vmul.f32 %v3408, %v3384
  %v3417 = vmul.f32 %v3409, %v3385
  %v3418 = vmul.f32 %v3410, %v3386
  %v3419 = vmul.f32 %v3411, %v3387
  %v3420 = vmul.f32 %v3412, %v3388
  %v3421 = vmul.f32 %v3413, %v3389
  %v3422 = vsel %vm1453, %v3414, 0.0
  %3423 = vadd.xlane.f32.xlu0 %v3422
  %v3424 = vpop.xlane.xlu0 %3423
  %v3425 = vsel %vm1453, %v3415, 0.0
  %3426 = vadd.xlane.f32.xlu0 %v3425
  %v3427 = vpop.xlane.xlu0 %3426
  %v3428 = vsel %vm1453, %v3416, 0.0
  %3429 = vadd.xlane.f32.xlu0 %v3428
  %v3430 = vpop.xlane.xlu0 %3429
  %v3431 = vsel %vm1453, %v3417, 0.0
  %3432 = vadd.xlane.f32.xlu0 %v3431
  %v3433 = vpop.xlane.xlu0 %3432
  %v3434 = vsel %vm1453, %v3418, 0.0
  %3435 = vadd.xlane.f32.xlu0 %v3434
  %v3436 = vpop.xlane.xlu0 %3435
  %v3437 = vsel %vm1453, %v3419, 0.0
  %3438 = vadd.xlane.f32.xlu0 %v3437
  %v3439 = vpop.xlane.xlu0 %3438
  %v3440 = vsel %vm1453, %v3420, 0.0
  %3441 = vadd.xlane.f32.xlu0 %v3440
  %v3442 = vpop.xlane.xlu0 %3441
  %v3443 = vsel %vm1453, %v3421, 0.0
  %3444 = vadd.xlane.f32.xlu0 %v3443
  %v3445 = vpop.xlane.xlu0 %3444
  %v3446 = vrot.slane %v3424, 4
  %v3447 = vadd.f32 %v3424, %v3446
  %v3448 = vrot.slane %v3447, 2
  %v3449 = vadd.f32 %v3447, %v3448
  %v3450 = vrot.slane %v3449, 1
  %v3451 = vadd.f32 %v3449, %v3450
  %v3452 = vrot.slane %v3427, 4
  %v3453 = vadd.f32 %v3427, %v3452
  %v3454 = vrot.slane %v3453, 2
  %v3455 = vadd.f32 %v3453, %v3454
  %v3456 = vrot.slane %v3455, 1
  %v3457 = vadd.f32 %v3455, %v3456
  %v3458 = vrot.slane %v3430, 4
  %v3459 = vadd.f32 %v3430, %v3458
  %v3460 = vrot.slane %v3459, 2
  %v3461 = vadd.f32 %v3459, %v3460
  %v3462 = vrot.slane %v3461, 1
  %v3463 = vadd.f32 %v3461, %v3462
  %v3464 = vrot.slane %v3433, 4
  %v3465 = vadd.f32 %v3433, %v3464
  %v3466 = vrot.slane %v3465, 2
  %v3467 = vadd.f32 %v3465, %v3466
  %v3468 = vrot.slane %v3467, 1
  %v3469 = vadd.f32 %v3467, %v3468
  %v3470 = vrot.slane %v3436, 4
  %v3471 = vadd.f32 %v3436, %v3470
  %v3472 = vrot.slane %v3471, 2
  %v3473 = vadd.f32 %v3471, %v3472
  %v3474 = vrot.slane %v3473, 1
  %v3475 = vadd.f32 %v3473, %v3474
  %v3476 = vrot.slane %v3439, 4
  %v3477 = vadd.f32 %v3439, %v3476
  %v3478 = vrot.slane %v3477, 2
  %v3479 = vadd.f32 %v3477, %v3478
  %v3480 = vrot.slane %v3479, 1
  %v3481 = vadd.f32 %v3479, %v3480
  %v3482 = vrot.slane %v3442, 4
  %v3483 = vadd.f32 %v3442, %v3482
  %v3484 = vrot.slane %v3483, 2
  %v3485 = vadd.f32 %v3483, %v3484
  %v3486 = vrot.slane %v3485, 1
  %v3487 = vadd.f32 %v3485, %v3486
  %v3488 = vrot.slane %v3445, 4
  %v3489 = vadd.f32 %v3445, %v3488
  %v3490 = vrot.slane %v3489, 2
  %v3491 = vadd.f32 %v3489, %v3490
  %v3492 = vrot.slane %v3491, 1
  %v3493 = vadd.f32 %v3491, %v3492
  %v3494 = vadd.f32 %v3203, %v3451
  %v3495 = vadd.f32 %v3204, %v3457
  %v3496 = vadd.f32 %v3205, %v3463
  %v3497 = vadd.f32 %v3206, %v3469
  %v3498 = vadd.f32 %v3207, %v3475
  %v3499 = vadd.f32 %v3208, %v3481
  %v3500 = vadd.f32 %v3209, %v3487
  %v3501 = vadd.f32 %v3210, %v3493
  %vm3502 = vcmp.ne.f32.partialorder %v3414, 0.0
  %vm3503 = vcmp.ne.f32.partialorder %v3415, 0.0
  %vm3504 = vcmp.ne.f32.partialorder %v3416, 0.0
  %vm3505 = vcmp.ne.f32.partialorder %v3417, 0.0
  %vm3506 = vcmp.ne.f32.partialorder %v3418, 0.0
  %vm3507 = vcmp.ne.f32.partialorder %v3419, 0.0
  %vm3508 = vcmp.ne.f32.partialorder %v3420, 0.0
  %vm3509 = vcmp.ne.f32.partialorder %v3421, 0.0
  %v3510 = vsel %vm3502, 1, 0
  %v3511 = vsel %vm3503, 1, 0
  %v3512 = vsel %vm3504, 1, 0
  %v3513 = vsel %vm3505, 1, 0
  %v3514 = vsel %vm3506, 1, 0
  %v3515 = vsel %vm3507, 1, 0
  %v3516 = vsel %vm3508, 1, 0
  %v3517 = vsel %vm3509, 1, 0
  %v3518 = vcvt.s32.f32 %v3510
  %v3519 = vcvt.s32.f32 %v3511
  %v3520 = vcvt.s32.f32 %v3512
  %v3521 = vcvt.s32.f32 %v3513
  %v3522 = vcvt.s32.f32 %v3514
  %v3523 = vcvt.s32.f32 %v3515
  %v3524 = vcvt.s32.f32 %v3516
  %v3525 = vcvt.s32.f32 %v3517
  %v3526 = vsel %vm1453, %v3518, 0.0
  %3527 = vadd.xlane.f32.xlu0 %v3526
  %v3528 = vpop.xlane.xlu0 %3527
  %v3529 = vsel %vm1453, %v3519, 0.0
  %3530 = vadd.xlane.f32.xlu0 %v3529
  %v3531 = vpop.xlane.xlu0 %3530
  %v3532 = vsel %vm1453, %v3520, 0.0
  %3533 = vadd.xlane.f32.xlu0 %v3532
  %v3534 = vpop.xlane.xlu0 %3533
  %v3535 = vsel %vm1453, %v3521, 0.0
  %3536 = vadd.xlane.f32.xlu0 %v3535
  %v3537 = vpop.xlane.xlu0 %3536
  %v3538 = vsel %vm1453, %v3522, 0.0
  %3539 = vadd.xlane.f32.xlu0 %v3538
  %v3540 = vpop.xlane.xlu0 %3539
  %v3541 = vsel %vm1453, %v3523, 0.0
  %3542 = vadd.xlane.f32.xlu0 %v3541
  %v3543 = vpop.xlane.xlu0 %3542
  %v3544 = vsel %vm1453, %v3524, 0.0
  %3545 = vadd.xlane.f32.xlu0 %v3544
  %v3546 = vpop.xlane.xlu0 %3545
  %v3547 = vsel %vm1453, %v3525, 0.0
  %3548 = vadd.xlane.f32.xlu0 %v3547
  %v3549 = vpop.xlane.xlu0 %3548
  %v3550 = vrot.slane %v3528, 4
  %v3551 = vadd.f32 %v3528, %v3550
  %v3552 = vrot.slane %v3551, 2
  %v3553 = vadd.f32 %v3551, %v3552
  %v3554 = vrot.slane %v3553, 1
  %v3555 = vadd.f32 %v3553, %v3554
  %v3556 = vrot.slane %v3531, 4
  %v3557 = vadd.f32 %v3531, %v3556
  %v3558 = vrot.slane %v3557, 2
  %v3559 = vadd.f32 %v3557, %v3558
  %v3560 = vrot.slane %v3559, 1
  %v3561 = vadd.f32 %v3559, %v3560
  %v3562 = vrot.slane %v3534, 4
  %v3563 = vadd.f32 %v3534, %v3562
  %v3564 = vrot.slane %v3563, 2
  %v3565 = vadd.f32 %v3563, %v3564
  %v3566 = vrot.slane %v3565, 1
  %v3567 = vadd.f32 %v3565, %v3566
  %v3568 = vrot.slane %v3537, 4
  %v3569 = vadd.f32 %v3537, %v3568
  %v3570 = vrot.slane %v3569, 2
  %v3571 = vadd.f32 %v3569, %v3570
  %v3572 = vrot.slane %v3571, 1
  %v3573 = vadd.f32 %v3571, %v3572
  %v3574 = vrot.slane %v3540, 4
  %v3575 = vadd.f32 %v3540, %v3574
  %v3576 = vrot.slane %v3575, 2
  %v3577 = vadd.f32 %v3575, %v3576
  %v3578 = vrot.slane %v3577, 1
  %v3579 = vadd.f32 %v3577, %v3578
  %v3580 = vrot.slane %v3543, 4
  %v3581 = vadd.f32 %v3543, %v3580
  %v3582 = vrot.slane %v3581, 2
  %v3583 = vadd.f32 %v3581, %v3582
  %v3584 = vrot.slane %v3583, 1
  %v3585 = vadd.f32 %v3583, %v3584
  %v3586 = vrot.slane %v3546, 4
  %v3587 = vadd.f32 %v3546, %v3586
  %v3588 = vrot.slane %v3587, 2
  %v3589 = vadd.f32 %v3587, %v3588
  %v3590 = vrot.slane %v3589, 1
  %v3591 = vadd.f32 %v3589, %v3590
  %v3592 = vrot.slane %v3549, 4
  %v3593 = vadd.f32 %v3549, %v3592
  %v3594 = vrot.slane %v3593, 2
  %v3595 = vadd.f32 %v3593, %v3594
  %v3596 = vrot.slane %v3595, 1
  %v3597 = vadd.f32 %v3595, %v3596
  %v3598 = vadd.f32 %v3307, %v3555
  %v3599 = vadd.f32 %v3308, %v3561
  %v3600 = vadd.f32 %v3309, %v3567
  %v3601 = vadd.f32 %v3310, %v3573
  %v3602 = vadd.f32 %v3311, %v3579
  %v3603 = vadd.f32 %v3312, %v3585
  %v3604 = vadd.f32 %v3313, %v3591
  %v3605 = vadd.f32 %v3314, %v3597
  %vm3606 = vcmp.eq.s32.totalorder %v1568, 7
  %v3607 = vsel %vm3606, 1, 0
  %v3608 = vcvt.s32.f32 %v3607
  %v3609 = vmul.f32 %v1403, %v3608
  %v3610 = vmul.f32 %v1410, %v3608
  %v3611 = vmul.f32 %v1417, %v3608
  %v3612 = vmul.f32 %v1424, %v3608
  %v3613 = vmul.f32 %v1431, %v3608
  %v3614 = vmul.f32 %v1438, %v3608
  %v3615 = vmul.f32 %v1445, %v3608
  %v3616 = vmul.f32 %v1452, %v3608
  %v3617 = vsel %vm1453, %v3609, 0.0
  %3618 = vadd.xlane.f32.xlu0 %v3617
  %v3619 = vpop.xlane.xlu0 %3618
  %v3620 = vsel %vm1453, %v3610, 0.0
  %3621 = vadd.xlane.f32.xlu0 %v3620
  %v3622 = vpop.xlane.xlu0 %3621
  %v3623 = vsel %vm1453, %v3611, 0.0
  %3624 = vadd.xlane.f32.xlu0 %v3623
  %v3625 = vpop.xlane.xlu0 %3624
  %v3626 = vsel %vm1453, %v3612, 0.0
  %3627 = vadd.xlane.f32.xlu0 %v3626
  %v3628 = vpop.xlane.xlu0 %3627
  %v3629 = vsel %vm1453, %v3613, 0.0
  %3630 = vadd.xlane.f32.xlu0 %v3629
  %v3631 = vpop.xlane.xlu0 %3630
  %v3632 = vsel %vm1453, %v3614, 0.0
  %3633 = vadd.xlane.f32.xlu0 %v3632
  %v3634 = vpop.xlane.xlu0 %3633
  %v3635 = vsel %vm1453, %v3615, 0.0
  %3636 = vadd.xlane.f32.xlu0 %v3635
  %v3637 = vpop.xlane.xlu0 %3636
  %v3638 = vsel %vm1453, %v3616, 0.0
  %3639 = vadd.xlane.f32.xlu0 %v3638
  %v3640 = vpop.xlane.xlu0 %3639
  %v3641 = vmul.f32 %v113, %v3608
  %v3642 = vmul.f32 %v114, %v3608
  %v3643 = vmul.f32 %v115, %v3608
  %v3644 = vmul.f32 %v116, %v3608
  %v3645 = vmul.f32 %v117, %v3608
  %v3646 = vmul.f32 %v118, %v3608
  %v3647 = vmul.f32 %v119, %v3608
  %v3648 = vmul.f32 %v120, %v3608
  %v3649 = vsel %vm1453, %v3641, 0.0
  %3650 = vadd.xlane.f32.xlu0 %v3649
  %v3651 = vpop.xlane.xlu0 %3650
  %v3652 = vsel %vm1453, %v3642, 0.0
  %3653 = vadd.xlane.f32.xlu0 %v3652
  %v3654 = vpop.xlane.xlu0 %3653
  %v3655 = vsel %vm1453, %v3643, 0.0
  %3656 = vadd.xlane.f32.xlu0 %v3655
  %v3657 = vpop.xlane.xlu0 %3656
  %v3658 = vsel %vm1453, %v3644, 0.0
  %3659 = vadd.xlane.f32.xlu0 %v3658
  %v3660 = vpop.xlane.xlu0 %3659
  %v3661 = vsel %vm1453, %v3645, 0.0
  %3662 = vadd.xlane.f32.xlu0 %v3661
  %v3663 = vpop.xlane.xlu0 %3662
  %v3664 = vsel %vm1453, %v3646, 0.0
  %3665 = vadd.xlane.f32.xlu0 %v3664
  %v3666 = vpop.xlane.xlu0 %3665
  %v3667 = vsel %vm1453, %v3647, 0.0
  %3668 = vadd.xlane.f32.xlu0 %v3667
  %v3669 = vpop.xlane.xlu0 %3668
  %v3670 = vsel %vm1453, %v3648, 0.0
  %3671 = vadd.xlane.f32.xlu0 %v3670
  %v3672 = vpop.xlane.xlu0 %3671
  %v3673 = vmul.f32 %v3651, %v121
  %v3674 = vmul.f32 %v3654, %v122
  %v3675 = vmul.f32 %v3657, %v123
  %v3676 = vmul.f32 %v3660, %v124
  %v3677 = vmul.f32 %v3663, %v125
  %v3678 = vmul.f32 %v3666, %v126
  %v3679 = vmul.f32 %v3669, %v127
  %v3680 = vmul.f32 %v3672, %v128
  %v3681 = vadd.f32 %v3619, 0.2
  %v3682 = vadd.f32 %v3622, 0.2
  %v3683 = vadd.f32 %v3625, 0.2
  %v3684 = vadd.f32 %v3628, 0.2
  %v3685 = vadd.f32 %v3631, 0.2
  %v3686 = vadd.f32 %v3634, 0.2
  %v3687 = vadd.f32 %v3637, 0.2
  %v3688 = vadd.f32 %v3640, 0.2
  %v3689 = vsub.f32 %v3681, %v1403
  %v3690 = vsub.f32 %v3682, %v1410
  %v3691 = vsub.f32 %v3683, %v1417
  %v3692 = vsub.f32 %v3684, %v1424
  %v3693 = vsub.f32 %v3685, %v1431
  %v3694 = vsub.f32 %v3686, %v1438
  %v3695 = vsub.f32 %v3687, %v1445
  %v3696 = vsub.f32 %v3688, %v1452
  %v3697 = vmax.f32 %v3689, 0.0
  %v3698 = vmax.f32 %v3690, 0.0
  %v3699 = vmax.f32 %v3691, 0.0
  %v3700 = vmax.f32 %v3692, 0.0
  %v3701 = vmax.f32 %v3693, 0.0
  %v3702 = vmax.f32 %v3694, 0.0
  %v3703 = vmax.f32 %v3695, 0.0
  %v3704 = vmax.f32 %v3696, 0.0
  %v3705 = vmul.f32 %v3697, %v3673
  %v3706 = vmul.f32 %v3698, %v3674
  %v3707 = vmul.f32 %v3699, %v3675
  %v3708 = vmul.f32 %v3700, %v3676
  %v3709 = vmul.f32 %v3701, %v3677
  %v3710 = vmul.f32 %v3702, %v3678
  %v3711 = vmul.f32 %v3703, %v3679
  %v3712 = vmul.f32 %v3704, %v3680
  %v3713 = vsel %vm1453, %v3705, 0.0
  %3714 = vadd.xlane.f32.xlu0 %v3713
  %v3715 = vpop.xlane.xlu0 %3714
  %v3716 = vsel %vm1453, %v3706, 0.0
  %3717 = vadd.xlane.f32.xlu0 %v3716
  %v3718 = vpop.xlane.xlu0 %3717
  %v3719 = vsel %vm1453, %v3707, 0.0
  %3720 = vadd.xlane.f32.xlu0 %v3719
  %v3721 = vpop.xlane.xlu0 %3720
  %v3722 = vsel %vm1453, %v3708, 0.0
  %3723 = vadd.xlane.f32.xlu0 %v3722
  %v3724 = vpop.xlane.xlu0 %3723
  %v3725 = vsel %vm1453, %v3709, 0.0
  %3726 = vadd.xlane.f32.xlu0 %v3725
  %v3727 = vpop.xlane.xlu0 %3726
  %v3728 = vsel %vm1453, %v3710, 0.0
  %3729 = vadd.xlane.f32.xlu0 %v3728
  %v3730 = vpop.xlane.xlu0 %3729
  %v3731 = vsel %vm1453, %v3711, 0.0
  %3732 = vadd.xlane.f32.xlu0 %v3731
  %v3733 = vpop.xlane.xlu0 %3732
  %v3734 = vsel %vm1453, %v3712, 0.0
  %3735 = vadd.xlane.f32.xlu0 %v3734
  %v3736 = vpop.xlane.xlu0 %3735
  %v3737 = vrot.slane %v3715, 4
  %v3738 = vadd.f32 %v3715, %v3737
  %v3739 = vrot.slane %v3738, 2
  %v3740 = vadd.f32 %v3738, %v3739
  %v3741 = vrot.slane %v3740, 1
  %v3742 = vadd.f32 %v3740, %v3741
  %v3743 = vrot.slane %v3718, 4
  %v3744 = vadd.f32 %v3718, %v3743
  %v3745 = vrot.slane %v3744, 2
  %v3746 = vadd.f32 %v3744, %v3745
  %v3747 = vrot.slane %v3746, 1
  %v3748 = vadd.f32 %v3746, %v3747
  %v3749 = vrot.slane %v3721, 4
  %v3750 = vadd.f32 %v3721, %v3749
  %v3751 = vrot.slane %v3750, 2
  %v3752 = vadd.f32 %v3750, %v3751
  %v3753 = vrot.slane %v3752, 1
  %v3754 = vadd.f32 %v3752, %v3753
  %v3755 = vrot.slane %v3724, 4
  %v3756 = vadd.f32 %v3724, %v3755
  %v3757 = vrot.slane %v3756, 2
  %v3758 = vadd.f32 %v3756, %v3757
  %v3759 = vrot.slane %v3758, 1
  %v3760 = vadd.f32 %v3758, %v3759
  %v3761 = vrot.slane %v3727, 4
  %v3762 = vadd.f32 %v3727, %v3761
  %v3763 = vrot.slane %v3762, 2
  %v3764 = vadd.f32 %v3762, %v3763
  %v3765 = vrot.slane %v3764, 1
  %v3766 = vadd.f32 %v3764, %v3765
  %v3767 = vrot.slane %v3730, 4
  %v3768 = vadd.f32 %v3730, %v3767
  %v3769 = vrot.slane %v3768, 2
  %v3770 = vadd.f32 %v3768, %v3769
  %v3771 = vrot.slane %v3770, 1
  %v3772 = vadd.f32 %v3770, %v3771
  %v3773 = vrot.slane %v3733, 4
  %v3774 = vadd.f32 %v3733, %v3773
  %v3775 = vrot.slane %v3774, 2
  %v3776 = vadd.f32 %v3774, %v3775
  %v3777 = vrot.slane %v3776, 1
  %v3778 = vadd.f32 %v3776, %v3777
  %v3779 = vrot.slane %v3736, 4
  %v3780 = vadd.f32 %v3736, %v3779
  %v3781 = vrot.slane %v3780, 2
  %v3782 = vadd.f32 %v3780, %v3781
  %v3783 = vrot.slane %v3782, 1
  %v3784 = vadd.f32 %v3782, %v3783
  %v3785 = vadd.f32 %v3494, %v3742
  %v3786 = vadd.f32 %v3495, %v3748
  %v3787 = vadd.f32 %v3496, %v3754
  %v3788 = vadd.f32 %v3497, %v3760
  %v3789 = vadd.f32 %v3498, %v3766
  %v3790 = vadd.f32 %v3499, %v3772
  %v3791 = vadd.f32 %v3500, %v3778
  %v3792 = vadd.f32 %v3501, %v3784
  %vm3793 = vcmp.ne.f32.partialorder %v3705, 0.0
  %vm3794 = vcmp.ne.f32.partialorder %v3706, 0.0
  %vm3795 = vcmp.ne.f32.partialorder %v3707, 0.0
  %vm3796 = vcmp.ne.f32.partialorder %v3708, 0.0
  %vm3797 = vcmp.ne.f32.partialorder %v3709, 0.0
  %vm3798 = vcmp.ne.f32.partialorder %v3710, 0.0
  %vm3799 = vcmp.ne.f32.partialorder %v3711, 0.0
  %vm3800 = vcmp.ne.f32.partialorder %v3712, 0.0
  %v3801 = vsel %vm3793, 1, 0
  %v3802 = vsel %vm3794, 1, 0
  %v3803 = vsel %vm3795, 1, 0
  %v3804 = vsel %vm3796, 1, 0
  %v3805 = vsel %vm3797, 1, 0
  %v3806 = vsel %vm3798, 1, 0
  %v3807 = vsel %vm3799, 1, 0
  %v3808 = vsel %vm3800, 1, 0
  %v3809 = vcvt.s32.f32 %v3801
  %v3810 = vcvt.s32.f32 %v3802
  %v3811 = vcvt.s32.f32 %v3803
  %v3812 = vcvt.s32.f32 %v3804
  %v3813 = vcvt.s32.f32 %v3805
  %v3814 = vcvt.s32.f32 %v3806
  %v3815 = vcvt.s32.f32 %v3807
  %v3816 = vcvt.s32.f32 %v3808
  %v3817 = vsel %vm1453, %v3809, 0.0
  %3818 = vadd.xlane.f32.xlu0 %v3817
  %v3819 = vpop.xlane.xlu0 %3818
  %v3820 = vsel %vm1453, %v3810, 0.0
  %3821 = vadd.xlane.f32.xlu0 %v3820
  %v3822 = vpop.xlane.xlu0 %3821
  %v3823 = vsel %vm1453, %v3811, 0.0
  %3824 = vadd.xlane.f32.xlu0 %v3823
  %v3825 = vpop.xlane.xlu0 %3824
  %v3826 = vsel %vm1453, %v3812, 0.0
  %3827 = vadd.xlane.f32.xlu0 %v3826
  %v3828 = vpop.xlane.xlu0 %3827
  %v3829 = vsel %vm1453, %v3813, 0.0
  %3830 = vadd.xlane.f32.xlu0 %v3829
  %v3831 = vpop.xlane.xlu0 %3830
  %v3832 = vsel %vm1453, %v3814, 0.0
  %3833 = vadd.xlane.f32.xlu0 %v3832
  %v3834 = vpop.xlane.xlu0 %3833
  %v3835 = vsel %vm1453, %v3815, 0.0
  %3836 = vadd.xlane.f32.xlu0 %v3835
  %v3837 = vpop.xlane.xlu0 %3836
  %v3838 = vsel %vm1453, %v3816, 0.0
  %3839 = vadd.xlane.f32.xlu0 %v3838
  %v3840 = vpop.xlane.xlu0 %3839
  %v3841 = vrot.slane %v3819, 4
  %v3842 = vadd.f32 %v3819, %v3841
  %v3843 = vrot.slane %v3842, 2
  %v3844 = vadd.f32 %v3842, %v3843
  %v3845 = vrot.slane %v3844, 1
  %v3846 = vadd.f32 %v3844, %v3845
  %v3847 = vrot.slane %v3822, 4
  %v3848 = vadd.f32 %v3822, %v3847
  %v3849 = vrot.slane %v3848, 2
  %v3850 = vadd.f32 %v3848, %v3849
  %v3851 = vrot.slane %v3850, 1
  %v3852 = vadd.f32 %v3850, %v3851
  %v3853 = vrot.slane %v3825, 4
  %v3854 = vadd.f32 %v3825, %v3853
  %v3855 = vrot.slane %v3854, 2
  %v3856 = vadd.f32 %v3854, %v3855
  %v3857 = vrot.slane %v3856, 1
  %v3858 = vadd.f32 %v3856, %v3857
  %v3859 = vrot.slane %v3828, 4
  %v3860 = vadd.f32 %v3828, %v3859
  %v3861 = vrot.slane %v3860, 2
  %v3862 = vadd.f32 %v3860, %v3861
  %v3863 = vrot.slane %v3862, 1
  %v3864 = vadd.f32 %v3862, %v3863
  %v3865 = vrot.slane %v3831, 4
  %v3866 = vadd.f32 %v3831, %v3865
  %v3867 = vrot.slane %v3866, 2
  %v3868 = vadd.f32 %v3866, %v3867
  %v3869 = vrot.slane %v3868, 1
  %v3870 = vadd.f32 %v3868, %v3869
  %v3871 = vrot.slane %v3834, 4
  %v3872 = vadd.f32 %v3834, %v3871
  %v3873 = vrot.slane %v3872, 2
  %v3874 = vadd.f32 %v3872, %v3873
  %v3875 = vrot.slane %v3874, 1
  %v3876 = vadd.f32 %v3874, %v3875
  %v3877 = vrot.slane %v3837, 4
  %v3878 = vadd.f32 %v3837, %v3877
  %v3879 = vrot.slane %v3878, 2
  %v3880 = vadd.f32 %v3878, %v3879
  %v3881 = vrot.slane %v3880, 1
  %v3882 = vadd.f32 %v3880, %v3881
  %v3883 = vrot.slane %v3840, 4
  %v3884 = vadd.f32 %v3840, %v3883
  %v3885 = vrot.slane %v3884, 2
  %v3886 = vadd.f32 %v3884, %v3885
  %v3887 = vrot.slane %v3886, 1
  %v3888 = vadd.f32 %v3886, %v3887
  %v3889 = vadd.f32 %v3598, %v3846
  %v3890 = vadd.f32 %v3599, %v3852
  %v3891 = vadd.f32 %v3600, %v3858
  %v3892 = vadd.f32 %v3601, %v3864
  %v3893 = vadd.f32 %v3602, %v3870
  %v3894 = vadd.f32 %v3603, %v3876
  %v3895 = vadd.f32 %v3604, %v3882
  %v3896 = vadd.f32 %v3605, %v3888
  %3897 = vst.msk [vmem:[%s3] sm:$0x1] %vm1558, %v3785
  %3898 = vst.msk [vmem:[%s3 + $0x1] sm:$0x1] %vm1558, %v3786
  %3899 = vst.msk [vmem:[%s3 + $0x2] sm:$0x1] %vm1558, %v3787
  %3900 = vst.msk [vmem:[%s3 + $0x3] sm:$0x1] %vm1558, %v3788
  %3901 = vst.msk [vmem:[%s3 + $0x4] sm:$0x1] %vm1558, %v3789
  %3902 = vst.msk [vmem:[%s3 + $0x5] sm:$0x1] %vm1558, %v3790
  %3903 = vst.msk [vmem:[%s3 + $0x6] sm:$0x1] %vm1558, %v3791
  %3904 = vst.msk [vmem:[%s3 + $0x7] sm:$0x1] %vm1558, %v3792
  %3905 = vst.msk [vmem:[%s4] sm:$0x1] %vm1558, %v3889
  %3906 = vst.msk [vmem:[%s4 + $0x1] sm:$0x1] %vm1558, %v3890
  %3907 = vst.msk [vmem:[%s4 + $0x2] sm:$0x1] %vm1558, %v3891
  %3908 = vst.msk [vmem:[%s4 + $0x3] sm:$0x1] %vm1558, %v3892
  %3909 = vst.msk [vmem:[%s4 + $0x4] sm:$0x1] %vm1558, %v3893
  %3910 = vst.msk [vmem:[%s4 + $0x5] sm:$0x1] %vm1558, %v3894
  %3911 = vst.msk [vmem:[%s4 + $0x6] sm:$0x1] %vm1558, %v3895
  %3912 = vst.msk [vmem:[%s4 + $0x7] sm:$0x1] %vm1558, %v3896
  // Predicated region
  $region14: #{tpu_custom_call.1} parent=0 // pred_check
    _
  $region15: #{tpu_custom_call.1} parent=0 // pred_check_branch
    %3914 = sbr.rel (0) target = $region17
  $region16: #{tpu_custom_call.1} parent=0 // pred_region
    _
  $region17: #{tpu_custom_call.1} parent=0 // pred_fallthru
    _
  // Predicated region
  $region18: #{tpu_custom_call.1} parent=0 // pred_check
    _
  $region19: #{tpu_custom_call.1} parent=0 // pred_check_branch
    %3916 = sbr.rel (0) target = $region21
  $region20: #{tpu_custom_call.1} parent=0 // pred_region
    _
  $region21: #{tpu_custom_call.1} parent=0 // pred_fallthru
    _
  // Predicated region
  $region22: #{tpu_custom_call.1} parent=0 // pred_check
    _
  $region23: #{tpu_custom_call.1} parent=0 // pred_check_branch
    %3918 = sbr.rel (0) target = $region25
  $region24: #{tpu_custom_call.1} parent=0 // pred_region
    _
  $region25: #{tpu_custom_call.1} parent=0 // pred_fallthru
    _
  // Predicated region
  $region26: #{tpu_custom_call.1} parent=0 // pred_check
    _
  $region27: #{tpu_custom_call.1} parent=0 // pred_check_branch
    %3920 = sbr.rel (0) target = $region29
  $region28: #{tpu_custom_call.1} parent=0 // pred_region
    _
  $region29: #{tpu_custom_call.1} parent=0 // pred_fallthru
    _
  // Predicated region
  $region30: #{tpu_custom_call.1} parent=0 // pred_check
    _
  $region31: #{tpu_custom_call.1} parent=0 // pred_check_branch
    %3922 = sbr.rel (0) target = $region33
  $region32: #{tpu_custom_call.1} parent=0 // pred_region
    _
  $region33: #{tpu_custom_call.1} parent=0 // pred_fallthru
    _
  // Predicated region
  $region34: #{tpu_custom_call.1} parent=0 // pred_check
    _
  $region35: #{tpu_custom_call.1} parent=0 // pred_check_branch
    %3924 = sbr.rel (0) target = $region37
  $region36: #{tpu_custom_call.1} parent=0 // pred_region
    _
  $region37: #{tpu_custom_call.1} parent=0 // pred_fallthru
    _

</llo_original>
